<compile_context>
chip_gen: v7x
topology: tpu7x:2x2x1
jax: 0.10.0
libtpu: 0.0.40
codegen_flags: <defaults>
</compile_context>

<pallas_src>
import functools

import jax
import jax.numpy as jnp
from jax.experimental import pallas as pl
from jax.experimental.pallas import tpu as pltpu

LN_EPS = 1e-5          # PyTorch nn.LayerNorm default
NEG_INF = -1e30        # large-negative instead of -inf: no NaN if a row is fully masked


def _layer_norm(x, gamma, beta):
    mean = jnp.mean(x, axis=-1, keepdims=True)
    var = jnp.mean(jnp.square(x - mean), axis=-1, keepdims=True)
    return (x - mean) * jax.lax.rsqrt(var + LN_EPS) * gamma + beta


def _rotate_left(x, amount):
    """Circular left-rotation of the last axis by a static amount (lane shifts)."""
    if amount == 0:
        return x
    return jnp.concatenate([x[:, amount:], x[:, :amount]], axis=1)


# ---------------------------------------------------------------------------
# Kernels
# ---------------------------------------------------------------------------
def qkv_kernel(cat_ref, u_ref, g1_ref, b1_ref, wqkv_ref,
               q_ref, k_ref, v_ref, *, n_head, d_head, m_len):
    """LN1 + qkv_net (bf16 MXU, f32 acc) + u injection + head split.

    Outputs q/k/v in bf16, head-contiguous [t, n_head*d_head] layout so no XLA
    transpose / slice passes are needed afterwards.  q keeps only the last
    q_len rows.
    """
    x = cat_ref[0]                                       # (k_len, d_model) f32
    xn = _layer_norm(x, g1_ref[...], b1_ref[...])        # ln1 in f32
    wh = jnp.dot(xn.astype(jnp.bfloat16), wqkv_ref[...],
                 preferred_element_type=jnp.float32)     # (k_len, 3*n*d) f32 acc
    wh = wh + u_ref[0]                                   # w_heads += u (f32)
    for n in range(n_head):                              # static offsets only
        src = 3 * d_head * n
        dst = d_head * n
        q_ref[0, :, dst:dst + d_head] = (
            wh[m_len:, src:src + d_head].astype(jnp.bfloat16))
        k_ref[0, :, dst:dst + d_head] = (
            wh[:, src + d_head:src + 2 * d_head].astype(jnp.bfloat16))
        v_ref[0, :, dst:dst + d_head] = (
            wh[:, src + 2 * d_head:src + 3 * d_head].astype(jnp.bfloat16))


def r_kernel(pos_ref, wr_ref, rk_ref):
    """r_net(pos_emb) -> (k_len, n_head*d_head) bf16 (single small GEMM)."""
    rk_ref[...] = jnp.dot(pos_ref[...].astype(jnp.bfloat16), wr_ref[...],
                          preferred_element_type=jnp.float32).astype(jnp.bfloat16)


def attn_kernel(q_ref, k_ref, v_ref, rk_ref, rwb_ref, rrb_ref, mask_ref, out_ref,
                *, n_head, d_head, q_len, scale):
    """Fused per-(batch, q-tile) attention over ALL heads.

    AC/BD matmuls (bf16, f32 acc) -> in-kernel relative shift -> mask ->
    softmax (f32, approx reciprocal) -> P@V, written straight into a
    lane-dense (tq, n_head*d_head) output block.  Nothing score-sized ever
    leaves VMEM.
    """
    tq = q_ref.shape[1]
    k_len = k_ref.shape[1]
    qt = pl.program_id(1)
    row = qt * tq + jax.lax.broadcasted_iota(jnp.int32, (tq, 1), 0)  # global query idx
    shift = (q_len - 1) - row                    # per-row left-rotation amount
    masked = mask_ref[0, 0] != 0                 # (tq, k_len)
    n_bits = (q_len - 1).bit_length()
    dn = (((1,), (1,)), ((), ()))                # contract d_head (A @ B^T)

    for h in range(n_head):                      # static head offsets (all heads/step)
        c = h * d_head
        q_h = q_ref[0, :, c:c + d_head].astype(jnp.float32)          # (tq, d)
        # fold biases + 1/sqrt(d_head) into the small q operand (O(q*d) work)
        rw_q = ((q_h + rwb_ref[:, c:c + d_head]) * scale).astype(jnp.bfloat16)
        rr_q = ((q_h + rrb_ref[:, c:c + d_head]) * scale).astype(jnp.bfloat16)
        k_h = k_ref[0, :, c:c + d_head]                               # (k_len, d) bf16
        v_h = v_ref[0, :, c:c + d_head]                               # (k_len, d) bf16
        r_h = rk_ref[:, c:c + d_head]                                 # (k_len, d) bf16

        ac = jax.lax.dot_general(rw_q, k_h, dn, preferred_element_type=jnp.float32)
        bd = jax.lax.dot_general(rr_q, r_h, dn, preferred_element_type=jnp.float32)

        # _rel_shift: circular-left-rotate row i by (q_len-1 - i) via binary
        # decomposition (log2(q_len) static rotations + per-row selects).
        # Wrapped columns fall only in j > m_len + i, which the Transformer-XL
        # causal mask always removes.
        for b in range(n_bits):
            step = 1 << b
            rolled = _rotate_left(bd, step)
            bd = jnp.where(((shift >> b) & 1) == 1, rolled, bd)

        s = jnp.where(masked, NEG_INF, ac + bd)           # scale already folded in
        m = jnp.max(s, axis=-1, keepdims=True)
        p = jnp.exp(s - m)
        l = jnp.sum(p, axis=-1, keepdims=True)
        p = p * pl.reciprocal(l, approx=True)             # EUP, not VPU divide
        av = jnp.dot(p.astype(jnp.bfloat16), v_h, preferred_element_type=jnp.float32)
        out_ref[0, :, c:c + d_head] = av                  # fills the lane-dense block


def out_kernel(av_ref, g2_ref, b2_ref, wo_ref, bo_ref, z_ref, o_ref):
    """LN2 + o_net (bf16 MXU, f32 acc, bias) + residual."""
    xn = _layer_norm(av_ref[0], g2_ref[...], b2_ref[...])
    o = jnp.dot(xn.astype(jnp.bfloat16), wo_ref[...],
                preferred_element_type=jnp.float32)
    o_ref[0] = o + bo_ref[...] + z_ref[0]


# ---------------------------------------------------------------------------
# Wrapper
# ---------------------------------------------------------------------------
def attention_forward(params, z, z_hist, pos_emb, u, attn_mask=None, *, q_tile=256):
    bsz, q_len, d_model = z.shape
    n_head, d_head = params["r_w_bias"].shape
    nhd = n_head * d_head
    three_nhd = 3 * nhd
    m_len = z_hist.shape[1]
    k_len = q_len + m_len
    scale = 1.0 / (d_head ** 0.5)

    cat = jnp.concatenate([z_hist, z], axis=1)

    g1 = params["ln1_gamma"].reshape(1, d_model).astype(jnp.float32)
    b1 = params["ln1_beta"].reshape(1, d_model).astype(jnp.float32)
    g2 = params["ln2_gamma"].reshape(1, nhd).astype(jnp.float32)
    b2 = params["ln2_beta"].reshape(1, nhd).astype(jnp.float32)
    bo = params["b_o"].reshape(1, d_model).astype(jnp.float32)
    rwb = params["r_w_bias"].reshape(1, nhd).astype(jnp.float32)
    rrb = params["r_r_bias"].reshape(1, nhd).astype(jnp.float32)
    # bf16 weights (MXU-native, half the HBM/VMEM footprint)
    wqkv = params["W_qkv"].astype(jnp.bfloat16)
    wr = params["W_r"].astype(jnp.bfloat16)
    wo = params["W_o"].astype(jnp.bfloat16)

    # --- 1) LN1 + QKV projection + u injection + head split (bf16 q/k/v) ----
    # TODO(synk): for d_model >= 1024 also tile the 3*nhd output dim of W_qkv.
    q_all, k_all, v_all = pl.pallas_call(
        functools.partial(qkv_kernel, n_head=n_head, d_head=d_head, m_len=m_len),
        out_shape=(jax.ShapeDtypeStruct((bsz, q_len, nhd), jnp.bfloat16),
                   jax.ShapeDtypeStruct((bsz, k_len, nhd), jnp.bfloat16),
                   jax.ShapeDtypeStruct((bsz, k_len, nhd), jnp.bfloat16)),
        grid=(bsz,),
        in_specs=[
            pl.BlockSpec((1, k_len, d_model), lambda b: (b, 0, 0)),
            pl.BlockSpec((1, k_len, three_nhd), lambda b: (b, 0, 0)),
            pl.BlockSpec((1, d_model), lambda b: (0, 0)),
            pl.BlockSpec((1, d_model), lambda b: (0, 0)),
            pl.BlockSpec((d_model, three_nhd), lambda b: (0, 0)),
        ],
        out_specs=(pl.BlockSpec((1, q_len, nhd), lambda b: (b, 0, 0)),
                   pl.BlockSpec((1, k_len, nhd), lambda b: (b, 0, 0)),
                   pl.BlockSpec((1, k_len, nhd), lambda b: (b, 0, 0))),
        compiler_params=pltpu.CompilerParams(dimension_semantics=("parallel",)),
    )(cat, u, g1, b1, wqkv)

    # --- 2) positional projection (single small GEMM) ------------------------
    rk_all = pl.pallas_call(
        r_kernel,
        out_shape=jax.ShapeDtypeStruct((k_len, nhd), jnp.bfloat16),
        grid=(1,),
        in_specs=[pl.BlockSpec((k_len, d_model), lambda i: (0, 0)),
                  pl.BlockSpec((d_model, nhd), lambda i: (0, 0))],
        out_specs=pl.BlockSpec((k_len, nhd), lambda i: (0, 0)),
    )(pos_emb, wr)

    # mask stays (1, 1, q, k) — never broadcast over batch/head in HBM.
    if attn_mask is None:
        mask = jnp.zeros((1, 1, q_len, k_len), jnp.int32)
    else:
        mask = jnp.broadcast_to(attn_mask, (1, 1, q_len, k_len)).astype(jnp.int32)

    tq = q_tile if (q_len % q_tile == 0) else q_len
    n_qt = q_len // tq

    # --- 3) fused attention: AC/BD + rel_shift + mask + softmax + P@V --------
    attn_vec = pl.pallas_call(
        functools.partial(attn_kernel, n_head=n_head, d_head=d_head,
                          q_len=q_len, scale=scale),
        out_shape=jax.ShapeDtypeStruct((bsz, q_len, nhd), jnp.float32),
        grid=(bsz, n_qt),
        in_specs=[
            pl.BlockSpec((1, tq, nhd), lambda b, t: (b, t, 0)),
            pl.BlockSpec((1, k_len, nhd), lambda b, t: (b, 0, 0)),
            pl.BlockSpec((1, k_len, nhd), lambda b, t: (b, 0, 0)),
            pl.BlockSpec((k_len, nhd), lambda b, t: (0, 0)),
            pl.BlockSpec((1, nhd), lambda b, t: (0, 0)),
            pl.BlockSpec((1, nhd), lambda b, t: (0, 0)),
            pl.BlockSpec((1, 1, tq, k_len), lambda b, t: (0, 0, t, 0)),
        ],
        out_specs=pl.BlockSpec((1, tq, nhd), lambda b, t: (b, t, 0)),
        compiler_params=pltpu.CompilerParams(
            dimension_semantics=("parallel", "parallel")),
    )(q_all, k_all, v_all, rk_all, rwb, rrb, mask)

    # --- 4) LN2 + output projection + residual --------------------------------
    out = pl.pallas_call(
        out_kernel,
        out_shape=jax.ShapeDtypeStruct((bsz, q_len, d_model), jnp.float32),
        grid=(bsz,),
        in_specs=[
            pl.BlockSpec((1, q_len, nhd), lambda b: (b, 0, 0)),
            pl.BlockSpec((1, nhd), lambda b: (0, 0)),
            pl.BlockSpec((1, nhd), lambda b: (0, 0)),
            pl.BlockSpec((nhd, d_model), lambda b: (0, 0)),
            pl.BlockSpec((1, d_model), lambda b: (0, 0)),
            pl.BlockSpec((1, q_len, d_model), lambda b: (b, 0, 0)),
        ],
        out_specs=pl.BlockSpec((1, q_len, d_model), lambda b: (b, 0, 0)),
        compiler_params=pltpu.CompilerParams(dimension_semantics=("parallel",)),
    )(attn_vec, g2, b2, wo, bo, z)
    # TODO(synk): VariationalDropout / VariationalDropout1d are identity at inference.
    return out


# ---------------------------------------------------------------------------
# Pure-JAX reference (mirrors the PyTorch forward, bf16 matmul operands to
# match the kernel's numerics) for verification
# ---------------------------------------------------------------------------
def attention_reference(params, z, z_hist, pos_emb, u, attn_mask=None):
    bsz, q_len, d_model = z.shape
    n_head, d_head = params["r_w_bias"].shape
    scale = 1.0 / (d_head ** 0.5)
    bf = jnp.bfloat16
    cat = jnp.concatenate([z_hist, z], axis=1)
    k_len = cat.shape[1]
    cat = _layer_norm(cat, params["ln1_gamma"], params["ln1_beta"])
    w_heads = jnp.dot(cat.astype(bf), params["W_qkv"].astype(bf),
                      preferred_element_type=jnp.float32) + u
    r_head_k = jnp.dot(pos_emb.astype(bf), params["W_r"].astype(bf),
                       preferred_element_type=jnp.float32)
    wh = w_heads.reshape(bsz, k_len, n_head, 3 * d_head)
    w_q = wh[..., :d_head][:, -q_len:].astype(bf).astype(jnp.float32)
    w_k = wh[..., d_head:2 * d_head].astype(bf)
    w_v = wh[..., 2 * d_head:].astype(bf)
    r_k = r_head_k.reshape(k_len, n_head, d_head).astype(bf)
    rw_q = ((w_q + params["r_w_bias"]) * scale).astype(bf)
    rr_q = ((w_q + params["r_r_bias"]) * scale).astype(bf)
    AC = jnp.einsum('bind,bjnd->bnij', rw_q, w_k, preferred_element_type=jnp.float32)
    BD = jnp.einsum('bind,jnd->bnij', rr_q, r_k, preferred_element_type=jnp.float32)
    # exact torch _rel_shift (pad + view + slice + view)
    BDp = jnp.pad(BD, ((0, 0), (0, 0), (0, 0), (1, 0)))
    BDp = BDp.reshape(bsz, n_head, k_len + 1, q_len)
    BD = BDp[:, :, 1:].reshape(bsz, n_head, q_len, k_len)
    score = AC + BD
    if attn_mask is not None:
        score = jnp.where(jnp.broadcast_to(attn_mask, score.shape), -jnp.inf, score)
    prob = jax.nn.softmax(score, axis=-1)
    attn_vec = jnp.einsum('bnij,bjnd->bind', prob.astype(bf), w_v,
                          preferred_element_type=jnp.float32)
    attn_vec = attn_vec.reshape(bsz, q_len, n_head * d_head)
    attn_out = _layer_norm(attn_vec, params["ln2_gamma"], params["ln2_beta"])
    attn_out = jnp.dot(attn_out.astype(bf), params["W_o"].astype(bf),
                       preferred_element_type=jnp.float32) + params["b_o"]
    return attn_out + z


# ---------------------------------------------------------------------------
if __name__ == "__main__":
    bsz, q_len, m_len = 2, 128, 128
    n_head, d_head = 4, 32
    d_model = n_head * d_head          # module requires n_head*d_head == d_model
    k_len = q_len + m_len
    nhd = n_head * d_head

    key = jax.random.PRNGKey(0)
    ks = jax.random.split(key, 12)
    params = {
        "W_qkv": jax.random.uniform(ks[0], (d_model, 3 * nhd), jnp.float32, -0.1, 0.1),
        "W_r": jax.random.uniform(ks[1], (d_model, nhd), jnp.float32, -0.1, 0.1),
        "r_w_bias": jax.random.uniform(ks[2], (n_head, d_head), jnp.float32, -0.05, 0.05),
        "r_r_bias": jax.random.uniform(ks[3], (n_head, d_head), jnp.float32, -0.05, 0.05),
        "W_o": jax.random.uniform(ks[4], (nhd, d_model), jnp.float32, -0.1, 0.1),
        "b_o": jax.random.uniform(ks[5], (d_model,), jnp.float32, -0.1, 0.1),
        "ln1_gamma": jnp.ones((d_model,), jnp.float32),
        "ln1_beta": jnp.zeros((d_model,), jnp.float32),
        "ln2_gamma": jnp.ones((nhd,), jnp.float32),
        "ln2_beta": jnp.zeros((nhd,), jnp.float32),
    }

    z = jax.random.normal(ks[6], (bsz, q_len, d_model), jnp.float32)
    z_hist = jax.random.normal(ks[7], (bsz, m_len, d_model), jnp.float32)
    pos_emb = jax.random.normal(ks[8], (k_len, d_model), jnp.float32)
    u = 0.1 * jax.random.normal(ks[9], (bsz, k_len, 3 * nhd), jnp.float32)

    # Transformer-XL causal mask: query i may attend to keys j <= m_len + i
    qi = jnp.arange(q_len)[:, None]
    kj = jnp.arange(k_len)[None, :]
    attn_mask = (kj > (qi + m_len)).reshape(1, 1, q_len, k_len)

    out = attention_forward(params, z, z_hist, pos_emb, u, attn_mask, q_tile=64)
    out = jax.block_until_ready(out)

    ref = attention_reference(params, z, z_hist, pos_emb, u, attn_mask)
    assert out.shape == (bsz, q_len, d_model)
    assert bool(jnp.all(jnp.isfinite(out)))
    max_err = float(jnp.max(jnp.abs(out - ref)))
    assert jnp.allclose(out, ref, rtol=1e-2, atol=1e-2), f"max abs err {max_err}"
    print("KERNEL_OK")
</pallas_src>

<mosaic_0001>
module attributes {stable_mosaic.version = 11 : i64} {
  func.func @qkv_kernel(%arg0: i32, %arg1: memref<1x256x128xf32, #tpu.memory_space<vmem>>, %arg2: memref<1x256x384xf32, #tpu.memory_space<vmem>>, %arg3: memref<1x128xf32, #tpu.memory_space<vmem>>, %arg4: memref<1x128xf32, #tpu.memory_space<vmem>>, %arg5: memref<128x384xbf16, #tpu.memory_space<vmem>>, %arg6: memref<1x128x128xbf16, #tpu.memory_space<vmem>>, %arg7: memref<1x256x128xbf16, #tpu.memory_space<vmem>>, %arg8: memref<1x256x128xbf16, #tpu.memory_space<vmem>>) attributes {dimension_semantics = [#tpu.dimension_semantics<parallel>], iteration_bounds = array<i64: 2>, scalar_prefetch = 0 : i64, scratch_operands = 0 : i64, tpu.core_type = #tpu.core_type<tc>, window_params = [{transform_indices = @transform_0, window_bounds = array<i64: 1, 256, 128>}, {transform_indices = @transform_1, window_bounds = array<i64: 1, 256, 384>}, {pipeline_mode = #tpu.pipeline_mode<synchronous>, transform_indices = @transform_2, window_bounds = array<i64: 1, 128>}, {pipeline_mode = #tpu.pipeline_mode<synchronous>, transform_indices = @transform_3, window_bounds = array<i64: 1, 128>}, {pipeline_mode = #tpu.pipeline_mode<synchronous>, transform_indices = @transform_4, window_bounds = array<i64: 128, 384>}, {transform_indices = @transform_5, window_bounds = array<i64: 1, 128, 128>}, {transform_indices = @transform_6, window_bounds = array<i64: 1, 256, 128>}, {transform_indices = @transform_7, window_bounds = array<i64: 1, 256, 128>}]} {
    %c0 = arith.constant 0 : index
    %c0_0 = arith.constant 0 : index
    %c0_1 = arith.constant 0 : index
    %0 = vector.load %arg1[%c0, %c0_0, %c0_1] : memref<1x256x128xf32, #tpu.memory_space<vmem>>, vector<1x256x128xf32>
    %1 = vector.shape_cast %0 : vector<1x256x128xf32> to vector<256x128xf32>
    %c0_2 = arith.constant 0 : index
    %c0_3 = arith.constant 0 : index
    %2 = vector.load %arg3[%c0_2, %c0_3] : memref<1x128xf32, #tpu.memory_space<vmem>>, vector<1x128xf32>
    %c0_4 = arith.constant 0 : index
    %c0_5 = arith.constant 0 : index
    %3 = vector.load %arg4[%c0_4, %c0_5] : memref<1x128xf32, #tpu.memory_space<vmem>>, vector<1x128xf32>
    %cst = arith.constant dense<0.000000e+00> : vector<256xf32>
    %4 = vector.multi_reduction <add>, %1, %cst [1] : vector<256x128xf32> to vector<256xf32>
    %5 = vector.shape_cast %4 : vector<256xf32> to vector<256x1xf32>
    %cst_6 = arith.constant 1.280000e+02 : f32
    %6 = vector.broadcast %cst_6 : f32 to vector<256x1xf32>
    %7 = arith.divf %5, %6 : vector<256x1xf32>
    %8 = vector.broadcast %7 : vector<256x1xf32> to vector<256x128xf32>
    %9 = arith.subf %1, %8 : vector<256x128xf32>
    %10 = arith.mulf %9, %9 : vector<256x128xf32>
    %cst_7 = arith.constant dense<0.000000e+00> : vector<256xf32>
    %11 = vector.multi_reduction <add>, %10, %cst_7 [1] : vector<256x128xf32> to vector<256xf32>
    %12 = vector.shape_cast %11 : vector<256xf32> to vector<256x1xf32>
    %cst_8 = arith.constant 1.280000e+02 : f32
    %13 = vector.broadcast %cst_8 : f32 to vector<256x1xf32>
    %14 = arith.divf %12, %13 : vector<256x1xf32>
    %15 = vector.broadcast %7 : vector<256x1xf32> to vector<256x128xf32>
    %16 = arith.subf %1, %15 : vector<256x128xf32>
    %cst_9 = arith.constant 9.99999974E-6 : f32
    %17 = vector.broadcast %cst_9 : f32 to vector<256x1xf32>
    %18 = arith.addf %14, %17 : vector<256x1xf32>
    %19 = math.rsqrt %18 : vector<256x1xf32>
    %20 = vector.broadcast %19 : vector<256x1xf32> to vector<256x128xf32>
    %21 = arith.mulf %16, %20 : vector<256x128xf32>
    %22 = vector.broadcast %2 : vector<1x128xf32> to vector<256x128xf32>
    %23 = arith.mulf %21, %22 : vector<256x128xf32>
    %24 = vector.broadcast %3 : vector<1x128xf32> to vector<256x128xf32>
    %25 = arith.addf %23, %24 : vector<256x128xf32>
    %26 = arith.truncf %25 : vector<256x128xf32> to vector<256x128xbf16>
    %c0_10 = arith.constant 0 : index
    %c0_11 = arith.constant 0 : index
    %27 = vector.load %arg5[%c0_10, %c0_11] : memref<128x384xbf16, #tpu.memory_space<vmem>>, vector<128x384xbf16>
    %cst_12 = arith.constant dense<0.000000e+00> : vector<256x384xf32>
    %28 = tpu.matmul %26, %27, %cst_12 {dimension_numbers = #tpu.dot_dimension_numbers<[1], [0], [0], [1], [0, 0, 1, 1], [], []>} : vector<256x128xbf16>, vector<128x384xbf16>, vector<256x384xf32> -> vector<256x384xf32>
    %c0_13 = arith.constant 0 : index
    %c0_14 = arith.constant 0 : index
    %c0_15 = arith.constant 0 : index
    %29 = vector.load %arg2[%c0_13, %c0_14, %c0_15] : memref<1x256x384xf32, #tpu.memory_space<vmem>>, vector<1x256x384xf32>
    %30 = vector.shape_cast %29 : vector<1x256x384xf32> to vector<256x384xf32>
    %31 = arith.addf %28, %30 : vector<256x384xf32>
    %32 = vector.extract_strided_slice %31 {offsets = [128, 0], sizes = [128, 32], strides = [1, 1]} : vector<256x384xf32> to vector<128x32xf32>
    %33 = arith.truncf %32 : vector<128x32xf32> to vector<128x32xbf16>
    %c0_16 = arith.constant 0 : index
    %c0_17 = arith.constant 0 : index
    %c0_18 = arith.constant 0 : index
    %34 = vector.load %arg6[%c0_16, %c0_17, %c0_18] : memref<1x128x128xbf16, #tpu.memory_space<vmem>>, vector<1x128x32xbf16>
    %35 = vector.shape_cast %34 : vector<1x128x32xbf16> to vector<128x32xbf16>
    %36 = vector.shape_cast %33 : vector<128x32xbf16> to vector<1x128x32xbf16>
    tpu.vector_store %arg6[%c0_16, %c0_17, %c0_18], %36 {strides = array<i32>} : memref<1x128x128xbf16, #tpu.memory_space<vmem>>, vector<1x128x32xbf16>,
    %37 = vector.extract_strided_slice %31 {offsets = [0, 32], sizes = [256, 32], strides = [1, 1]} : vector<256x384xf32> to vector<256x32xf32>
    %38 = arith.truncf %37 : vector<256x32xf32> to vector<256x32xbf16>
    %c0_19 = arith.constant 0 : index
    %c0_20 = arith.constant 0 : index
    %c0_21 = arith.constant 0 : index
    %39 = vector.load %arg7[%c0_19, %c0_20, %c0_21] : memref<1x256x128xbf16, #tpu.memory_space<vmem>>, vector<1x256x32xbf16>
    %40 = vector.shape_cast %39 : vector<1x256x32xbf16> to vector<256x32xbf16>
    %41 = vector.shape_cast %38 : vector<256x32xbf16> to vector<1x256x32xbf16>
    tpu.vector_store %arg7[%c0_19, %c0_20, %c0_21], %41 {strides = array<i32>} : memref<1x256x128xbf16, #tpu.memory_space<vmem>>, vector<1x256x32xbf16>,
    %42 = vector.extract_strided_slice %31 {offsets = [0, 64], sizes = [256, 32], strides = [1, 1]} : vector<256x384xf32> to vector<256x32xf32>
    %43 = arith.truncf %42 : vector<256x32xf32> to vector<256x32xbf16>
    %c0_22 = arith.constant 0 : index
    %c0_23 = arith.constant 0 : index
    %c0_24 = arith.constant 0 : index
    %44 = vector.load %arg8[%c0_22, %c0_23, %c0_24] : memref<1x256x128xbf16, #tpu.memory_space<vmem>>, vector<1x256x32xbf16>
    %45 = vector.shape_cast %44 : vector<1x256x32xbf16> to vector<256x32xbf16>
    %46 = vector.shape_cast %43 : vector<256x32xbf16> to vector<1x256x32xbf16>
    tpu.vector_store %arg8[%c0_22, %c0_23, %c0_24], %46 {strides = array<i32>} : memref<1x256x128xbf16, #tpu.memory_space<vmem>>, vector<1x256x32xbf16>,
    %47 = vector.extract_strided_slice %31 {offsets = [128, 96], sizes = [128, 32], strides = [1, 1]} : vector<256x384xf32> to vector<128x32xf32>
    %48 = arith.truncf %47 : vector<128x32xf32> to vector<128x32xbf16>
    %c0_25 = arith.constant 0 : index
    %c0_26 = arith.constant 0 : index
    %c32 = arith.constant 32 : index
    %49 = vector.load %arg6[%c0_25, %c0_26, %c32] : memref<1x128x128xbf16, #tpu.memory_space<vmem>>, vector<1x128x32xbf16>
    %50 = vector.shape_cast %49 : vector<1x128x32xbf16> to vector<128x32xbf16>
    %51 = vector.shape_cast %48 : vector<128x32xbf16> to vector<1x128x32xbf16>
    tpu.vector_store %arg6[%c0_25, %c0_26, %c32], %51 {strides = array<i32>} : memref<1x128x128xbf16, #tpu.memory_space<vmem>>, vector<1x128x32xbf16>,
    %52 = vector.extract_strided_slice %31 {offsets = [0, 128], sizes = [256, 32], strides = [1, 1]} : vector<256x384xf32> to vector<256x32xf32>
    %53 = arith.truncf %52 : vector<256x32xf32> to vector<256x32xbf16>
    %c0_27 = arith.constant 0 : index
    %c0_28 = arith.constant 0 : index
    %c32_29 = arith.constant 32 : index
    %54 = vector.load %arg7[%c0_27, %c0_28, %c32_29] : memref<1x256x128xbf16, #tpu.memory_space<vmem>>, vector<1x256x32xbf16>
    %55 = vector.shape_cast %54 : vector<1x256x32xbf16> to vector<256x32xbf16>
    %56 = vector.shape_cast %53 : vector<256x32xbf16> to vector<1x256x32xbf16>
    tpu.vector_store %arg7[%c0_27, %c0_28, %c32_29], %56 {strides = array<i32>} : memref<1x256x128xbf16, #tpu.memory_space<vmem>>, vector<1x256x32xbf16>,
    %57 = vector.extract_strided_slice %31 {offsets = [0, 160], sizes = [256, 32], strides = [1, 1]} : vector<256x384xf32> to vector<256x32xf32>
    %58 = arith.truncf %57 : vector<256x32xf32> to vector<256x32xbf16>
    %c0_30 = arith.constant 0 : index
    %c0_31 = arith.constant 0 : index
    %c32_32 = arith.constant 32 : index
    %59 = vector.load %arg8[%c0_30, %c0_31, %c32_32] : memref<1x256x128xbf16, #tpu.memory_space<vmem>>, vector<1x256x32xbf16>
    %60 = vector.shape_cast %59 : vector<1x256x32xbf16> to vector<256x32xbf16>
    %61 = vector.shape_cast %58 : vector<256x32xbf16> to vector<1x256x32xbf16>
    tpu.vector_store %arg8[%c0_30, %c0_31, %c32_32], %61 {strides = array<i32>} : memref<1x256x128xbf16, #tpu.memory_space<vmem>>, vector<1x256x32xbf16>,
    %62 = vector.extract_strided_slice %31 {offsets = [128, 192], sizes = [128, 32], strides = [1, 1]} : vector<256x384xf32> to vector<128x32xf32>
    %63 = arith.truncf %62 : vector<128x32xf32> to vector<128x32xbf16>
    %c0_33 = arith.constant 0 : index
    %c0_34 = arith.constant 0 : index
    %c64 = arith.constant 64 : index
    %64 = vector.load %arg6[%c0_33, %c0_34, %c64] : memref<1x128x128xbf16, #tpu.memory_space<vmem>>, vector<1x128x32xbf16>
    %65 = vector.shape_cast %64 : vector<1x128x32xbf16> to vector<128x32xbf16>
    %66 = vector.shape_cast %63 : vector<128x32xbf16> to vector<1x128x32xbf16>
    tpu.vector_store %arg6[%c0_33, %c0_34, %c64], %66 {strides = array<i32>} : memref<1x128x128xbf16, #tpu.memory_space<vmem>>, vector<1x128x32xbf16>,
    %67 = vector.extract_strided_slice %31 {offsets = [0, 224], sizes = [256, 32], strides = [1, 1]} : vector<256x384xf32> to vector<256x32xf32>
    %68 = arith.truncf %67 : vector<256x32xf32> to vector<256x32xbf16>
    %c0_35 = arith.constant 0 : index
    %c0_36 = arith.constant 0 : index
    %c64_37 = arith.constant 64 : index
    %69 = vector.load %arg7[%c0_35, %c0_36, %c64_37] : memref<1x256x128xbf16, #tpu.memory_space<vmem>>, vector<1x256x32xbf16>
    %70 = vector.shape_cast %69 : vector<1x256x32xbf16> to vector<256x32xbf16>
    %71 = vector.shape_cast %68 : vector<256x32xbf16> to vector<1x256x32xbf16>
    tpu.vector_store %arg7[%c0_35, %c0_36, %c64_37], %71 {strides = array<i32>} : memref<1x256x128xbf16, #tpu.memory_space<vmem>>, vector<1x256x32xbf16>,
    %72 = vector.extract_strided_slice %31 {offsets = [0, 256], sizes = [256, 32], strides = [1, 1]} : vector<256x384xf32> to vector<256x32xf32>
    %73 = arith.truncf %72 : vector<256x32xf32> to vector<256x32xbf16>
    %c0_38 = arith.constant 0 : index
    %c0_39 = arith.constant 0 : index
    %c64_40 = arith.constant 64 : index
    %74 = vector.load %arg8[%c0_38, %c0_39, %c64_40] : memref<1x256x128xbf16, #tpu.memory_space<vmem>>, vector<1x256x32xbf16>
    %75 = vector.shape_cast %74 : vector<1x256x32xbf16> to vector<256x32xbf16>
    %76 = vector.shape_cast %73 : vector<256x32xbf16> to vector<1x256x32xbf16>
    tpu.vector_store %arg8[%c0_38, %c0_39, %c64_40], %76 {strides = array<i32>} : memref<1x256x128xbf16, #tpu.memory_space<vmem>>, vector<1x256x32xbf16>,
    %77 = vector.extract_strided_slice %31 {offsets = [128, 288], sizes = [128, 32], strides = [1, 1]} : vector<256x384xf32> to vector<128x32xf32>
    %78 = arith.truncf %77 : vector<128x32xf32> to vector<128x32xbf16>
    %c0_41 = arith.constant 0 : index
    %c0_42 = arith.constant 0 : index
    %c96 = arith.constant 96 : index
    %79 = vector.load %arg6[%c0_41, %c0_42, %c96] : memref<1x128x128xbf16, #tpu.memory_space<vmem>>, vector<1x128x32xbf16>
    %80 = vector.shape_cast %79 : vector<1x128x32xbf16> to vector<128x32xbf16>
    %81 = vector.shape_cast %78 : vector<128x32xbf16> to vector<1x128x32xbf16>
    tpu.vector_store %arg6[%c0_41, %c0_42, %c96], %81 {strides = array<i32>} : memref<1x128x128xbf16, #tpu.memory_space<vmem>>, vector<1x128x32xbf16>,
    %82 = vector.extract_strided_slice %31 {offsets = [0, 320], sizes = [256, 32], strides = [1, 1]} : vector<256x384xf32> to vector<256x32xf32>
    %83 = arith.truncf %82 : vector<256x32xf32> to vector<256x32xbf16>
    %c0_43 = arith.constant 0 : index
    %c0_44 = arith.constant 0 : index
    %c96_45 = arith.constant 96 : index
    %84 = vector.load %arg7[%c0_43, %c0_44, %c96_45] : memref<1x256x128xbf16, #tpu.memory_space<vmem>>, vector<1x256x32xbf16>
    %85 = vector.shape_cast %84 : vector<1x256x32xbf16> to vector<256x32xbf16>
    %86 = vector.shape_cast %83 : vector<256x32xbf16> to vector<1x256x32xbf16>
    tpu.vector_store %arg7[%c0_43, %c0_44, %c96_45], %86 {strides = array<i32>} : memref<1x256x128xbf16, #tpu.memory_space<vmem>>, vector<1x256x32xbf16>,
    %87 = vector.extract_strided_slice %31 {offsets = [0, 352], sizes = [256, 32], strides = [1, 1]} : vector<256x384xf32> to vector<256x32xf32>
    %88 = arith.truncf %87 : vector<256x32xf32> to vector<256x32xbf16>
    %c0_46 = arith.constant 0 : index
    %c0_47 = arith.constant 0 : index
    %c96_48 = arith.constant 96 : index
    %89 = vector.load %arg8[%c0_46, %c0_47, %c96_48] : memref<1x256x128xbf16, #tpu.memory_space<vmem>>, vector<1x256x32xbf16>
    %90 = vector.shape_cast %89 : vector<1x256x32xbf16> to vector<256x32xbf16>
    %91 = vector.shape_cast %88 : vector<256x32xbf16> to vector<1x256x32xbf16>
    tpu.vector_store %arg8[%c0_46, %c0_47, %c96_48], %91 {strides = array<i32>} : memref<1x256x128xbf16, #tpu.memory_space<vmem>>, vector<1x256x32xbf16>,
    return
  }
  func.func @transform_0(%arg0: i32) -> (i32, i32, i32) {
    %c0_i32 = arith.constant 0 : i32
    %c0_i32_0 = arith.constant 0 : i32
    %c0_i32_1 = arith.constant 0 : i32
    return %arg0, %c0_i32, %c0_i32_0 : i32, i32, i32
  }
  func.func @transform_1(%arg0: i32) -> (i32, i32, i32) {
    %c0_i32 = arith.constant 0 : i32
    %c0_i32_0 = arith.constant 0 : i32
    %c0_i32_1 = arith.constant 0 : i32
    return %arg0, %c0_i32, %c0_i32_0 : i32, i32, i32
  }
  func.func @transform_2(%arg0: i32) -> (i32, i32) {
    %c0_i32 = arith.constant 0 : i32
    %c0_i32_0 = arith.constant 0 : i32
    %c0_i32_1 = arith.constant 0 : i32
    return %c0_i32, %c0_i32_0 : i32, i32
  }
  func.func @transform_3(%arg0: i32) -> (i32, i32) {
    %c0_i32 = arith.constant 0 : i32
    %c0_i32_0 = arith.constant 0 : i32
    %c0_i32_1 = arith.constant 0 : i32
    return %c0_i32, %c0_i32_0 : i32, i32
  }
  func.func @transform_4(%arg0: i32) -> (i32, i32) {
    %c0_i32 = arith.constant 0 : i32
    %c0_i32_0 = arith.constant 0 : i32
    %c0_i32_1 = arith.constant 0 : i32
    return %c0_i32, %c0_i32_0 : i32, i32
  }
  func.func @transform_5(%arg0: i32) -> (i32, i32, i32) {
    %c0_i32 = arith.constant 0 : i32
    %c0_i32_0 = arith.constant 0 : i32
    %c0_i32_1 = arith.constant 0 : i32
    return %arg0, %c0_i32, %c0_i32_0 : i32, i32, i32
  }
  func.func @transform_6(%arg0: i32) -> (i32, i32, i32) {
    %c0_i32 = arith.constant 0 : i32
    %c0_i32_0 = arith.constant 0 : i32
    %c0_i32_1 = arith.constant 0 : i32
    return %arg0, %c0_i32, %c0_i32_0 : i32, i32, i32
  }
  func.func @transform_7(%arg0: i32) -> (i32, i32, i32) {
    %c0_i32 = arith.constant 0 : i32
    %c0_i32_0 = arith.constant 0 : i32
    %c0_i32_1 = arith.constant 0 : i32
    return %arg0, %c0_i32, %c0_i32_0 : i32, i32, i32
  }
}

</mosaic_0001>

<llo_original>
// kernel: tpu_custom_call.1
$region0: #{tpu_custom_call.1}
  #allocation0 [shape = 'u32[]', space=smem, size = 0x4, offset = 0x4, fixed_abs, tag = 'smem constant byte address 0x4 - core index']
  #allocation1 [shape = 'u32[144,128]{1,0:T(1,128)}', space=vmem, size = 0x12000, scoped, tag = 'internal scratch']
  %s0 = inlined_call_operand.hbm [shape: f32[2,256,128], index: 0, kind: input, shape index: {}]
  %s1 = inlined_call_operand.hbm [shape: f32[2,256,384], index: 1, kind: input, shape index: {}]
  %s2 = inlined_call_operand.vmem [shape: f32[1,128], index: 2, kind: input, shape index: {}]
  %s3 = inlined_call_operand.vmem [shape: f32[1,128], index: 3, kind: input, shape index: {}]
  %s4 = inlined_call_operand.hbm [shape: bf16[128,384], index: 4, kind: input, shape index: {}]
  %s5 = inlined_call_operand.hbm [shape: bf16[2,128,128], index: 5, kind: output, shape index: {0}]
  %s6 = inlined_call_operand.hbm [shape: bf16[2,256,128], index: 6, kind: output, shape index: {1}]
  %s7 = inlined_call_operand.hbm [shape: bf16[2,256,128], index: 7, kind: output, shape index: {2}]
  %8 = xla_tuple %s5, %s6, %s7
  %s9 = sld [smem:[#allocation0]]
  $region81: #{tpu_custom_call.1} parent=0
    _
  %s11 = ssub.s32 1, %s9
  %s12 = scalar_select 0, %s11, %s9
  $region1: #{tpu_custom_call.1} parent=0
    #allocation2 [shape = 'u8[262144]{0}', space=vmem, size = 0x40000, scoped, tag = 'input window, operand 0']
    #allocation3 [shape = 's32[2]{0}', space=sflag, size = 0x8, scoped, tag = 'scoped memory for tpu_custom_call.1']
    #allocation4 [shape = 's32[2]{0}', space=sflag, size = 0x8, scoped, tag = 'scoped memory for tpu_custom_call.1']
    #allocation5 [shape = 'u8[786432]{0}', space=vmem, size = 0xc0000, scoped, tag = 'input window, operand 1']
    #allocation6 [shape = 's32[2]{0}', space=sflag, size = 0x8, scoped, tag = 'scoped memory for tpu_custom_call.1']
    #allocation7 [shape = 'u8[98304]{0}', space=vmem, size = 0x18000, scoped, tag = 'input window, operand 4, single buffered']
    #allocation8 [shape = 'u8[65536]{0}', space=vmem, size = 0x10000, scoped, tag = 'output window, operand 0']
    #allocation9 [shape = 'u8[131072]{0}', space=vmem, size = 0x20000, scoped, tag = 'output window, operand 1']
    #allocation10 [shape = 's32[2]{0}', space=sflag, size = 0x8, scoped, tag = 'scoped memory for tpu_custom_call.1']
    #allocation11 [shape = 'u8[131072]{0}', space=vmem, size = 0x20000, scoped, tag = 'output window, operand 2']
    %13 = vsyncpa [#allocation3], 0
    %s14 = scalar_lea.sflag [#allocation3], 1
    %15 = vsyncpa %s14, 0
    %16 = vsyncpa [#allocation6], 0
    %s17 = scalar_lea.sflag [#allocation6], 1
    %18 = vsyncpa %s17, 0
    %19 = vsyncpa [#allocation4], 0
    %s20 = scalar_lea.sflag [#allocation4], 1
    %21 = vsyncpa %s20, 0
    %22 = vsyncpa [#allocation10], 0
    %s23 = scalar_lea.sflag [#allocation10], 1
    %24 = vsyncpa %s23, 0
    loop: start=0, step=1, limit=4
    $region2: #{tpu_custom_call.1} parent=1 // loop_pre_header
      _
    $region3: #{tpu_custom_call.1} parent=1 // loop_header
      %s26 = sphi 0, %s30
      %p27 = scmp.ge.s32.totalorder %s26, 4
      %s36 = sphi 0, %s38
      %s39 = sphi 0, %s36
      %s40 = sphi 0, %s39
      %s56 = sphi 0, %s40
      %s62 = sphi 0, %s64
      %s65 = sphi 0, %s62
      %s66 = sphi 0, %s65
      %s82 = sphi 0, %s66
      %s86 = sphi 0, %s86
      %s88 = sphi 0, %s86
      %s89 = sphi 0, %s88
      %s103 = sphi 0, %s89
      %s107 = sphi 0, %s107
      %s109 = sphi 0, %s107
      %s110 = sphi 0, %s109
      %s124 = sphi 0, %s110
      %s128 = sphi 0, %s128
      %s130 = sphi 0, %s128
      %s131 = sphi 0, %s130
      %s145 = sphi 0, %s131
      %s151 = sphi 0, %s153
      %s154 = sphi 0, %s151
      %s155 = sphi 0, %s154
      %s171 = sphi 0, %s155
      %s177 = sphi 0, %s179
      %s180 = sphi 0, %s177
      %s181 = sphi 0, %s180
      %s197 = sphi 0, %s181
      %s203 = sphi 0, %s205
      %s206 = sphi 0, %s203
      %s207 = sphi 0, %s206
      %s223 = sphi 0, %s207
    $region4: #{tpu_custom_call.1} parent=1 // loop_header_branch
      %29 = sbr.rel (%p27) target = $region8
    $region5: #{tpu_custom_call.1} parent=1 // loop_body
      %s31 = ssub.s32 %s26, 1
      %s32 = ssub.s32 %s26, 2
      %s33 = sadd.s32 %s26, 1
      %s34 = ssub.s32 %s26, %s33
      %p35 = scmp.eq.s32.totalorder %s34, 0
      %s37 = sadd.s32 %s36, 1
      %s38 = scalar_select %p35, %s36, %s37
      %p41 = pneg %p35
      %p42 = scmp.eq.s32.totalorder %s26, 1
      %p43 = por %p41, %p42
      %p44 = scmp.ne.s32.totalorder %s36, %s39
      %p45 = scmp.eq.s32.totalorder %s26, 0
      %p46 = por %p44, %p45
      %p47 = scmp.ne.s32.totalorder %s36, %s39
      %p48 = scmp.eq.s32.totalorder %s31, 1
      %p49 = por %p47, %p48
      %p50 = scmp.ne.s32.totalorder %s39, %s40
      %p51 = scmp.eq.s32.totalorder %s31, 0
      %p52 = por %p50, %p51
      %p53 = scmp.ne.s32.totalorder %s39, %s40
      %p54 = scmp.eq.s32.totalorder %s32, 1
      %p55 = por %p53, %p54
      %p57 = scmp.ne.s32.totalorder %s40, %s56
      %p58 = scmp.eq.s32.totalorder %s32, 0
      %p59 = por %p57, %p58
      %s60 = ssub.s32 %s26, %s33
      %p61 = scmp.eq.s32.totalorder %s60, 0
      %s63 = sadd.s32 %s62, 1
      %s64 = scalar_select %p61, %s62, %s63
      %p67 = pneg %p61
      %p68 = scmp.eq.s32.totalorder %s26, 1
      %p69 = por %p67, %p68
      %p70 = scmp.ne.s32.totalorder %s62, %s65
      %p71 = scmp.eq.s32.totalorder %s26, 0
      %p72 = por %p70, %p71
      %p73 = scmp.ne.s32.totalorder %s62, %s65
      %p74 = scmp.eq.s32.totalorder %s31, 1
      %p75 = por %p73, %p74
      %p76 = scmp.ne.s32.totalorder %s65, %s66
      %p77 = scmp.eq.s32.totalorder %s31, 0
      %p78 = por %p76, %p77
      %p79 = scmp.ne.s32.totalorder %s65, %s66
      %p80 = scmp.eq.s32.totalorder %s32, 1
      %p81 = por %p79, %p80
      %p83 = scmp.ne.s32.totalorder %s66, %s82
      %p84 = scmp.eq.s32.totalorder %s32, 0
      %p85 = por %p83, %p84
      %s87 = sadd.s32 %s86, 1
      %p90 = scmp.eq.s32.totalorder %s26, 1
      %p91 = scmp.ne.s32.totalorder %s86, %s88
      %p92 = scmp.eq.s32.totalorder %s26, 0
      %p93 = por %p91, %p92
      %p94 = scmp.ne.s32.totalorder %s86, %s88
      %p95 = scmp.eq.s32.totalorder %s31, 1
      %p96 = por %p94, %p95
      %p97 = scmp.ne.s32.totalorder %s88, %s89
      %p98 = scmp.eq.s32.totalorder %s31, 0
      %p99 = por %p97, %p98
      %p100 = scmp.ne.s32.totalorder %s88, %s89
      %p101 = scmp.eq.s32.totalorder %s32, 1
      %p102 = por %p100, %p101
      %p104 = scmp.ne.s32.totalorder %s89, %s103
      %p105 = scmp.eq.s32.totalorder %s32, 0
      %p106 = por %p104, %p105
      %s108 = sadd.s32 %s107, 1
      %p111 = scmp.eq.s32.totalorder %s26, 1
      %p112 = scmp.ne.s32.totalorder %s107, %s109
      %p113 = scmp.eq.s32.totalorder %s26, 0
      %p114 = por %p112, %p113
      %p115 = scmp.ne.s32.totalorder %s107, %s109
      %p116 = scmp.eq.s32.totalorder %s31, 1
      %p117 = por %p115, %p116
      %p118 = scmp.ne.s32.totalorder %s109, %s110
      %p119 = scmp.eq.s32.totalorder %s31, 0
      %p120 = por %p118, %p119
      %p121 = scmp.ne.s32.totalorder %s109, %s110
      %p122 = scmp.eq.s32.totalorder %s32, 1
      %p123 = por %p121, %p122
      %p125 = scmp.ne.s32.totalorder %s110, %s124
      %p126 = scmp.eq.s32.totalorder %s32, 0
      %p127 = por %p125, %p126
      %s129 = sadd.s32 %s128, 1
      %p132 = scmp.eq.s32.totalorder %s26, 1
      %p133 = scmp.ne.s32.totalorder %s128, %s130
      %p134 = scmp.eq.s32.totalorder %s26, 0
      %p135 = por %p133, %p134
      %p136 = scmp.ne.s32.totalorder %s128, %s130
      %p137 = scmp.eq.s32.totalorder %s31, 1
      %p138 = por %p136, %p137
      %p139 = scmp.ne.s32.totalorder %s130, %s131
      %p140 = scmp.eq.s32.totalorder %s31, 0
      %p141 = por %p139, %p140
      %p142 = scmp.ne.s32.totalorder %s130, %s131
      %p143 = scmp.eq.s32.totalorder %s32, 1
      %p144 = por %p142, %p143
      %p146 = scmp.ne.s32.totalorder %s131, %s145
      %p147 = scmp.eq.s32.totalorder %s32, 0
      %p148 = por %p146, %p147
      %s149 = ssub.s32 %s26, %s33
      %p150 = scmp.eq.s32.totalorder %s149, 0
      %s152 = sadd.s32 %s151, 1
      %s153 = scalar_select %p150, %s151, %s152
      %p156 = pneg %p150
      %p157 = scmp.eq.s32.totalorder %s26, 1
      %p158 = por %p156, %p157
      %p159 = scmp.ne.s32.totalorder %s151, %s154
      %p160 = scmp.eq.s32.totalorder %s26, 0
      %p161 = por %p159, %p160
      %p162 = scmp.ne.s32.totalorder %s151, %s154
      %p163 = scmp.eq.s32.totalorder %s31, 1
      %p164 = por %p162, %p163
      %p165 = scmp.ne.s32.totalorder %s154, %s155
      %p166 = scmp.eq.s32.totalorder %s31, 0
      %p167 = por %p165, %p166
      %p168 = scmp.ne.s32.totalorder %s154, %s155
      %p169 = scmp.eq.s32.totalorder %s32, 1
      %p170 = por %p168, %p169
      %p172 = scmp.ne.s32.totalorder %s155, %s171
      %p173 = scmp.eq.s32.totalorder %s32, 0
      %p174 = por %p172, %p173
      %s175 = ssub.s32 %s26, %s33
      %p176 = scmp.eq.s32.totalorder %s175, 0
      %s178 = sadd.s32 %s177, 1
      %s179 = scalar_select %p176, %s177, %s178
      %p182 = pneg %p176
      %p183 = scmp.eq.s32.totalorder %s26, 1
      %p184 = por %p182, %p183
      %p185 = scmp.ne.s32.totalorder %s177, %s180
      %p186 = scmp.eq.s32.totalorder %s26, 0
      %p187 = por %p185, %p186
      %p188 = scmp.ne.s32.totalorder %s177, %s180
      %p189 = scmp.eq.s32.totalorder %s31, 1
      %p190 = por %p188, %p189
      %p191 = scmp.ne.s32.totalorder %s180, %s181
      %p192 = scmp.eq.s32.totalorder %s31, 0
      %p193 = por %p191, %p192
      %p194 = scmp.ne.s32.totalorder %s180, %s181
      %p195 = scmp.eq.s32.totalorder %s32, 1
      %p196 = por %p194, %p195
      %p198 = scmp.ne.s32.totalorder %s181, %s197
      %p199 = scmp.eq.s32.totalorder %s32, 0
      %p200 = por %p198, %p199
      %s201 = ssub.s32 %s26, %s33
      %p202 = scmp.eq.s32.totalorder %s201, 0
      %s204 = sadd.s32 %s203, 1
      %s205 = scalar_select %p202, %s203, %s204
      %p208 = pneg %p202
      %p209 = scmp.eq.s32.totalorder %s26, 1
      %p210 = por %p208, %p209
      %p211 = scmp.ne.s32.totalorder %s203, %s206
      %p212 = scmp.eq.s32.totalorder %s26, 0
      %p213 = por %p211, %p212
      %p214 = scmp.ne.s32.totalorder %s203, %s206
      %p215 = scmp.eq.s32.totalorder %s31, 1
      %p216 = por %p214, %p215
      %p217 = scmp.ne.s32.totalorder %s206, %s207
      %p218 = scmp.eq.s32.totalorder %s31, 0
      %p219 = por %p217, %p218
      %p220 = scmp.ne.s32.totalorder %s206, %s207
      %p221 = scmp.eq.s32.totalorder %s32, 1
      %p222 = por %p220, %p221
      %p224 = scmp.ne.s32.totalorder %s207, %s223
      %p225 = scmp.eq.s32.totalorder %s32, 0
      %p226 = por %p224, %p225
      %p227 = scmp.le.s32.totalorder 1, %s26
      %p228 = scmp.lt.s32.totalorder %s26, 3
      %p229 = pnand %p227, %p228
      %p230 = pneg %p229
      // Predicated region
      $region9: #{tpu_custom_call.1} parent=5 // pred_check
        _
      $region10: #{tpu_custom_call.1} parent=5 // pred_check_branch
        %232 = sbr.rel (%p229) target = $region12
      $region11: #{tpu_custom_call.1} parent=5 // pred_region
        %s233 = ssub.s32 %s26, 1
        // Predicated region
        $region13: #{tpu_custom_call.1} parent=11 // pred_check
          %p234 = pneg %p99
        $region14: #{tpu_custom_call.1} parent=11 // pred_check_branch
          %236 = sbr.rel (%p234) target = $region16
        $region15: #{tpu_custom_call.1} parent=11 // pred_region
          _
        $region16: #{tpu_custom_call.1} parent=11 // pred_fallthru
          _
        // Predicated region
        $region17: #{tpu_custom_call.1} parent=11 // pred_check
          %p237 = pneg %p120
        $region18: #{tpu_custom_call.1} parent=11 // pred_check_branch
          %239 = sbr.rel (%p237) target = $region20
        $region19: #{tpu_custom_call.1} parent=11 // pred_region
          _
        $region20: #{tpu_custom_call.1} parent=11 // pred_fallthru
          _
        // Predicated region
        $region21: #{tpu_custom_call.1} parent=11 // pred_check
          %p240 = pneg %p141
        $region22: #{tpu_custom_call.1} parent=11 // pred_check_branch
          %242 = sbr.rel (%p240) target = $region24
        $region23: #{tpu_custom_call.1} parent=11 // pred_region
          %s244 = ssub.s32 3072, 3072
          %245 = vsyncadd [#allocation6], %s244
          %s246 = sshll.u32 [#allocation7], 4
          %s247 = int_to_ptr.vmem [resolvable:$true] %s246
          %252 = dma.hbm_to_vmem [thread:$0]  %s4, 3072, %s247, [#allocation6], 192, 192, 12
        $region24: #{tpu_custom_call.1} parent=11 // pred_fallthru
          _
      $region12: #{tpu_custom_call.1} parent=5 // pred_fallthru
        _
      %p253 = scmp.lt.s32.totalorder %s26, 2
      // Predicated region
      $region25: #{tpu_custom_call.1} parent=5 // pred_check
        %p254 = pneg %p253
      $region26: #{tpu_custom_call.1} parent=5 // pred_check_branch
        %256 = sbr.rel (%p254) target = $region28
      $region27: #{tpu_custom_call.1} parent=5 // pred_region
        // Predicated region
        $region29: #{tpu_custom_call.1} parent=27 // pred_check
          %p257 = pneg %p46
        $region30: #{tpu_custom_call.1} parent=27 // pred_check_branch
          %259 = sbr.rel (%p257) target = $region32
        $region31: #{tpu_custom_call.1} parent=27 // pred_region
          %s260 = sand.u32 %s36, 1
          %s261 = scalar_lea.sflag [#allocation3], %s260
          %s262 = sand.u32 %s36, 1
          %s263 = smul.addr %s262, 256
          %s264 = scalar_lea.vmem [#allocation2], %s263
          %s266 = ssub.s32 4096, 4096
          %267 = vsyncadd %s261, %s266
          %s268 = smul.addr %s26, 32
          %s269 = smul.addr %s268, 128
          %s270 = scalar_lea.hbm %s0, %s269
          %s271 = sshll.u32 %s264, 4
          %s272 = int_to_ptr.vmem [resolvable:$true] %s271
          %277 = dma.hbm_to_vmem [thread:$0]  %s270, 4096, %s272, %s261, 128, 128, 8
        $region32: #{tpu_custom_call.1} parent=27 // pred_fallthru
          _
        // Predicated region
        $region33: #{tpu_custom_call.1} parent=27 // pred_check
          %p278 = pneg %p72
        $region34: #{tpu_custom_call.1} parent=27 // pred_check_branch
          %280 = sbr.rel (%p278) target = $region36
        $region35: #{tpu_custom_call.1} parent=27 // pred_region
          %s281 = sand.u32 %s26, 1
          %s282 = scalar_lea.sflag [#allocation6], %s281
          %s283 = sand.u32 %s62, 1
          %s284 = smul.addr %s283, 768
          %s285 = scalar_lea.vmem [#allocation5], %s284
          %s287 = ssub.s32 12288, 12288
          %288 = vsyncadd %s282, %s287
          %s289 = smul.addr %s26, 96
          %s290 = smul.addr %s289, 128
          %s291 = scalar_lea.hbm %s1, %s290
          %s292 = sshll.u32 %s285, 4
          %s293 = int_to_ptr.vmem [resolvable:$true] %s292
          %298 = dma.hbm_to_vmem [thread:$0]  %s291, 12288, %s293, %s282, 384, 384, 24
        $region36: #{tpu_custom_call.1} parent=27 // pred_fallthru
          _
      $region28: #{tpu_custom_call.1} parent=5 // pred_fallthru
        _
      %p299 = scmp.le.s32.totalorder 1, %s26
      %p300 = scmp.lt.s32.totalorder %s26, 3
      %p301 = pnand %p299, %p300
      %p302 = pneg %p301
      // Predicated region
      $region37: #{tpu_custom_call.1} parent=5 // pred_check
        _
      $region38: #{tpu_custom_call.1} parent=5 // pred_check_branch
        %304 = sbr.rel (%p301) target = $region40
      $region39: #{tpu_custom_call.1} parent=5 // pred_region
        %s305 = ssub.s32 %s26, 1
        %s306 = sand.u32 %s39, 1
        %s307 = scalar_lea.sflag [#allocation3], %s306
        %s308 = sand.u32 %s39, 1
        %s309 = smul.addr %s308, 256
        %s310 = scalar_lea.vmem [#allocation2], %s309
        // Predicated region
        $region41: #{tpu_custom_call.1} parent=39 // pred_check
          %p311 = pneg %p52
        $region42: #{tpu_custom_call.1} parent=39 // pred_check_branch
          %313 = sbr.rel (%p311) target = $region44
        $region43: #{tpu_custom_call.1} parent=39 // pred_region
          %314 = dma.done %s307, 4096
        $region44: #{tpu_custom_call.1} parent=39 // pred_fallthru
          _
        %s315 = sand.u32 %s31, 1
        %s316 = scalar_lea.sflag [#allocation6], %s315
        %s317 = sand.u32 %s65, 1
        %s318 = smul.addr %s317, 768
        %s319 = scalar_lea.vmem [#allocation5], %s318
        // Predicated region
        $region45: #{tpu_custom_call.1} parent=39 // pred_check
          %p320 = pneg %p78
        $region46: #{tpu_custom_call.1} parent=39 // pred_check_branch
          %322 = sbr.rel (%p320) target = $region48
        $region47: #{tpu_custom_call.1} parent=39 // pred_region
          %323 = dma.done %s316, 12288
        $region48: #{tpu_custom_call.1} parent=39 // pred_fallthru
          _
        // Predicated region
        $region49: #{tpu_custom_call.1} parent=39 // pred_check
          %p324 = pneg %p141
        $region50: #{tpu_custom_call.1} parent=39 // pred_check_branch
          %326 = sbr.rel (%p324) target = $region52
        $region51: #{tpu_custom_call.1} parent=39 // pred_region
          %327 = dma.done [#allocation6], 3072
        $region52: #{tpu_custom_call.1} parent=39 // pred_fallthru
          _
        %s328 = sand.u32 %s39, 1
        %s329 = scalar_lea.sflag [#allocation3], %s328
        %s330 = sand.u32 %s39, 1
        %s331 = smul.addr %s330, 256
        %s332 = scalar_lea.vmem [#allocation2], %s331
        %p333 = pneg %p52
        %p334 = pneg %p49
        %s335 = sand.u32 %s31, 1
        %s336 = scalar_lea.sflag [#allocation6], %s335
        %s337 = sand.u32 %s65, 1
        %s338 = smul.addr %s337, 768
        %s339 = scalar_lea.vmem [#allocation5], %s338
        %p340 = pneg %p78
        %p341 = pneg %p75
        %p342 = pneg %p99
        %p343 = pneg %p96
        %p344 = pneg %p120
        %p345 = pneg %p117
        %p346 = pneg %p141
        %p347 = pneg %p138
        %p348 = pneg %p167
        %p349 = pneg %p164
        %s350 = sand.u32 %s154, 1
        %s351 = scalar_lea.sflag [#allocation4], %s350
        %s352 = sand.u32 %s154, 1
        %s353 = smul.addr %s352, 64
        %s354 = scalar_lea.vmem [#allocation8], %s353
        %p355 = pneg %p193
        %p356 = pneg %p190
        %s357 = sand.u32 %s31, 1
        %s358 = scalar_lea.sflag [#allocation10], %s357
        %s359 = sand.u32 %s180, 1
        %s360 = smul.addr %s359, 128
        %s361 = scalar_lea.vmem [#allocation9], %s360
        %p362 = pneg %p219
        %p363 = pneg %p216
        %s364 = sand.u32 %s31, 1
        %s365 = scalar_lea.sflag [#allocation10], %s364
        %s366 = sand.u32 %s206, 1
        %s367 = smul.addr %s366, 128
        %s368 = scalar_lea.vmem [#allocation11], %s367
        %v370 = vld [vmem:[%s310] sm:$0xff]
        %v371 = vld [vmem:[%s310 + $0x8] sm:$0xff]
        %v372 = vld [vmem:[%s310 + $0x10] sm:$0xff]
        %v373 = vld [vmem:[%s310 + $0x18] sm:$0xff]
        %v374 = vld [vmem:[%s310 + $0x20] sm:$0xff]
        %v375 = vld [vmem:[%s310 + $0x28] sm:$0xff]
        %v376 = vld [vmem:[%s310 + $0x30] sm:$0xff]
        %v377 = vld [vmem:[%s310 + $0x38] sm:$0xff]
        %v378 = vld [vmem:[%s310 + $0x40] sm:$0xff]
        %v379 = vld [vmem:[%s310 + $0x48] sm:$0xff]
        %v380 = vld [vmem:[%s310 + $0x50] sm:$0xff]
        %v381 = vld [vmem:[%s310 + $0x58] sm:$0xff]
        %v382 = vld [vmem:[%s310 + $0x60] sm:$0xff]
        %v383 = vld [vmem:[%s310 + $0x68] sm:$0xff]
        %v384 = vld [vmem:[%s310 + $0x70] sm:$0xff]
        %v385 = vld [vmem:[%s310 + $0x78] sm:$0xff]
        %v386 = vld [vmem:[%s310 + $0x80] sm:$0xff]
        %v387 = vld [vmem:[%s310 + $0x88] sm:$0xff]
        %v388 = vld [vmem:[%s310 + $0x90] sm:$0xff]
        %v389 = vld [vmem:[%s310 + $0x98] sm:$0xff]
        %v390 = vld [vmem:[%s310 + $0xa0] sm:$0xff]
        %v391 = vld [vmem:[%s310 + $0xa8] sm:$0xff]
        %v392 = vld [vmem:[%s310 + $0xb0] sm:$0xff]
        %v393 = vld [vmem:[%s310 + $0xb8] sm:$0xff]
        %v394 = vld [vmem:[%s310 + $0xc0] sm:$0xff]
        %v395 = vld [vmem:[%s310 + $0xc8] sm:$0xff]
        %v396 = vld [vmem:[%s310 + $0xd0] sm:$0xff]
        %v397 = vld [vmem:[%s310 + $0xd8] sm:$0xff]
        %v398 = vld [vmem:[%s310 + $0xe0] sm:$0xff]
        %v399 = vld [vmem:[%s310 + $0xe8] sm:$0xff]
        %v400 = vld [vmem:[%s310 + $0xf0] sm:$0xff]
        %v401 = vld [vmem:[%s310 + $0xf8] sm:$0xff]
        %v402 = vld [vmem:[%s2] sm:$0x1]
        %v403 = vld [vmem:[%s3] sm:$0x1]
        %404 = vadd.xlane.f32.xlu0 %v370
        %v405 = vpop.xlane.xlu0 %404
        %406 = vadd.xlane.f32.xlu0 %v371
        %v407 = vpop.xlane.xlu0 %406
        %408 = vadd.xlane.f32.xlu0 %v372
        %v409 = vpop.xlane.xlu0 %408
        %410 = vadd.xlane.f32.xlu0 %v373
        %v411 = vpop.xlane.xlu0 %410
        %412 = vadd.xlane.f32.xlu0 %v374
        %v413 = vpop.xlane.xlu0 %412
        %414 = vadd.xlane.f32.xlu0 %v375
        %v415 = vpop.xlane.xlu0 %414
        %416 = vadd.xlane.f32.xlu0 %v376
        %v417 = vpop.xlane.xlu0 %416
        %418 = vadd.xlane.f32.xlu0 %v377
        %v419 = vpop.xlane.xlu0 %418
        %420 = vadd.xlane.f32.xlu0 %v378
        %v421 = vpop.xlane.xlu0 %420
        %422 = vadd.xlane.f32.xlu0 %v379
        %v423 = vpop.xlane.xlu0 %422
        %424 = vadd.xlane.f32.xlu0 %v380
        %v425 = vpop.xlane.xlu0 %424
        %426 = vadd.xlane.f32.xlu0 %v381
        %v427 = vpop.xlane.xlu0 %426
        %428 = vadd.xlane.f32.xlu0 %v382
        %v429 = vpop.xlane.xlu0 %428
        %430 = vadd.xlane.f32.xlu0 %v383
        %v431 = vpop.xlane.xlu0 %430
        %432 = vadd.xlane.f32.xlu0 %v384
        %v433 = vpop.xlane.xlu0 %432
        %434 = vadd.xlane.f32.xlu0 %v385
        %v435 = vpop.xlane.xlu0 %434
        %436 = vadd.xlane.f32.xlu0 %v386
        %v437 = vpop.xlane.xlu0 %436
        %438 = vadd.xlane.f32.xlu0 %v387
        %v439 = vpop.xlane.xlu0 %438
        %440 = vadd.xlane.f32.xlu0 %v388
        %v441 = vpop.xlane.xlu0 %440
        %442 = vadd.xlane.f32.xlu0 %v389
        %v443 = vpop.xlane.xlu0 %442
        %444 = vadd.xlane.f32.xlu0 %v390
        %v445 = vpop.xlane.xlu0 %444
        %446 = vadd.xlane.f32.xlu0 %v391
        %v447 = vpop.xlane.xlu0 %446
        %448 = vadd.xlane.f32.xlu0 %v392
        %v449 = vpop.xlane.xlu0 %448
        %450 = vadd.xlane.f32.xlu0 %v393
        %v451 = vpop.xlane.xlu0 %450
        %452 = vadd.xlane.f32.xlu0 %v394
        %v453 = vpop.xlane.xlu0 %452
        %454 = vadd.xlane.f32.xlu0 %v395
        %v455 = vpop.xlane.xlu0 %454
        %456 = vadd.xlane.f32.xlu0 %v396
        %v457 = vpop.xlane.xlu0 %456
        %458 = vadd.xlane.f32.xlu0 %v397
        %v459 = vpop.xlane.xlu0 %458
        %460 = vadd.xlane.f32.xlu0 %v398
        %v461 = vpop.xlane.xlu0 %460
        %462 = vadd.xlane.f32.xlu0 %v399
        %v463 = vpop.xlane.xlu0 %462
        %464 = vadd.xlane.f32.xlu0 %v400
        %v465 = vpop.xlane.xlu0 %464
        %466 = vadd.xlane.f32.xlu0 %v401
        %v467 = vpop.xlane.xlu0 %466
        %v468 = vrcp.pop 128.0
        %v469 = vmul.f32 %v405, %v468
        %v470 = vmul.f32 %v407, %v468
        %v471 = vmul.f32 %v409, %v468
        %v472 = vmul.f32 %v411, %v468
        %v473 = vmul.f32 %v413, %v468
        %v474 = vmul.f32 %v415, %v468
        %v475 = vmul.f32 %v417, %v468
        %v476 = vmul.f32 %v419, %v468
        %v477 = vmul.f32 %v421, %v468
        %v478 = vmul.f32 %v423, %v468
        %v479 = vmul.f32 %v425, %v468
        %v480 = vmul.f32 %v427, %v468
        %v481 = vmul.f32 %v429, %v468
        %v482 = vmul.f32 %v431, %v468
        %v483 = vmul.f32 %v433, %v468
        %v484 = vmul.f32 %v435, %v468
        %v485 = vmul.f32 %v437, %v468
        %v486 = vmul.f32 %v439, %v468
        %v487 = vmul.f32 %v441, %v468
        %v488 = vmul.f32 %v443, %v468
        %v489 = vmul.f32 %v445, %v468
        %v490 = vmul.f32 %v447, %v468
        %v491 = vmul.f32 %v449, %v468
        %v492 = vmul.f32 %v451, %v468
        %v493 = vmul.f32 %v453, %v468
        %v494 = vmul.f32 %v455, %v468
        %v495 = vmul.f32 %v457, %v468
        %v496 = vmul.f32 %v459, %v468
        %v497 = vmul.f32 %v461, %v468
        %v498 = vmul.f32 %v463, %v468
        %v499 = vmul.f32 %v465, %v468
        %v500 = vmul.f32 %v467, %v468
        %v501 = vsub.f32 %v370, %v469
        %v502 = vsub.f32 %v371, %v470
        %v503 = vsub.f32 %v372, %v471
        %v504 = vsub.f32 %v373, %v472
        %v505 = vsub.f32 %v374, %v473
        %v506 = vsub.f32 %v375, %v474
        %v507 = vsub.f32 %v376, %v475
        %v508 = vsub.f32 %v377, %v476
        %v509 = vsub.f32 %v378, %v477
        %v510 = vsub.f32 %v379, %v478
        %v511 = vsub.f32 %v380, %v479
        %v512 = vsub.f32 %v381, %v480
        %v513 = vsub.f32 %v382, %v481
        %v514 = vsub.f32 %v383, %v482
        %v515 = vsub.f32 %v384, %v483
        %v516 = vsub.f32 %v385, %v484
        %v517 = vsub.f32 %v386, %v485
        %v518 = vsub.f32 %v387, %v486
        %v519 = vsub.f32 %v388, %v487
        %v520 = vsub.f32 %v389, %v488
        %v521 = vsub.f32 %v390, %v489
        %v522 = vsub.f32 %v391, %v490
        %v523 = vsub.f32 %v392, %v491
        %v524 = vsub.f32 %v393, %v492
        %v525 = vsub.f32 %v394, %v493
        %v526 = vsub.f32 %v395, %v494
        %v527 = vsub.f32 %v396, %v495
        %v528 = vsub.f32 %v397, %v496
        %v529 = vsub.f32 %v398, %v497
        %v530 = vsub.f32 %v399, %v498
        %v531 = vsub.f32 %v400, %v499
        %v532 = vsub.f32 %v401, %v500
        %v533 = vmul.f32 %v501, %v501
        %v534 = vmul.f32 %v502, %v502
        %v535 = vmul.f32 %v503, %v503
        %v536 = vmul.f32 %v504, %v504
        %v537 = vmul.f32 %v505, %v505
        %v538 = vmul.f32 %v506, %v506
        %v539 = vmul.f32 %v507, %v507
        %v540 = vmul.f32 %v508, %v508
        %v541 = vmul.f32 %v509, %v509
        %v542 = vmul.f32 %v510, %v510
        %v543 = vmul.f32 %v511, %v511
        %v544 = vmul.f32 %v512, %v512
        %v545 = vmul.f32 %v513, %v513
        %v546 = vmul.f32 %v514, %v514
        %v547 = vmul.f32 %v515, %v515
        %v548 = vmul.f32 %v516, %v516
        %v549 = vmul.f32 %v517, %v517
        %v550 = vmul.f32 %v518, %v518
        %v551 = vmul.f32 %v519, %v519
        %v552 = vmul.f32 %v520, %v520
        %v553 = vmul.f32 %v521, %v521
        %v554 = vmul.f32 %v522, %v522
        %v555 = vmul.f32 %v523, %v523
        %v556 = vmul.f32 %v524, %v524
        %v557 = vmul.f32 %v525, %v525
        %v558 = vmul.f32 %v526, %v526
        %v559 = vmul.f32 %v527, %v527
        %v560 = vmul.f32 %v528, %v528
        %v561 = vmul.f32 %v529, %v529
        %v562 = vmul.f32 %v530, %v530
        %v563 = vmul.f32 %v531, %v531
        %v564 = vmul.f32 %v532, %v532
        %565 = vadd.xlane.f32.xlu0 %v533
        %v566 = vpop.xlane.xlu0 %565
        %567 = vadd.xlane.f32.xlu0 %v534
        %v568 = vpop.xlane.xlu0 %567
        %569 = vadd.xlane.f32.xlu0 %v535
        %v570 = vpop.xlane.xlu0 %569
        %571 = vadd.xlane.f32.xlu0 %v536
        %v572 = vpop.xlane.xlu0 %571
        %573 = vadd.xlane.f32.xlu0 %v537
        %v574 = vpop.xlane.xlu0 %573
        %575 = vadd.xlane.f32.xlu0 %v538
        %v576 = vpop.xlane.xlu0 %575
        %577 = vadd.xlane.f32.xlu0 %v539
        %v578 = vpop.xlane.xlu0 %577
        %579 = vadd.xlane.f32.xlu0 %v540
        %v580 = vpop.xlane.xlu0 %579
        %581 = vadd.xlane.f32.xlu0 %v541
        %v582 = vpop.xlane.xlu0 %581
        %583 = vadd.xlane.f32.xlu0 %v542
        %v584 = vpop.xlane.xlu0 %583
        %585 = vadd.xlane.f32.xlu0 %v543
        %v586 = vpop.xlane.xlu0 %585
        %587 = vadd.xlane.f32.xlu0 %v544
        %v588 = vpop.xlane.xlu0 %587
        %589 = vadd.xlane.f32.xlu0 %v545
        %v590 = vpop.xlane.xlu0 %589
        %591 = vadd.xlane.f32.xlu0 %v546
        %v592 = vpop.xlane.xlu0 %591
        %593 = vadd.xlane.f32.xlu0 %v547
        %v594 = vpop.xlane.xlu0 %593
        %595 = vadd.xlane.f32.xlu0 %v548
        %v596 = vpop.xlane.xlu0 %595
        %597 = vadd.xlane.f32.xlu0 %v549
        %v598 = vpop.xlane.xlu0 %597
        %599 = vadd.xlane.f32.xlu0 %v550
        %v600 = vpop.xlane.xlu0 %599
        %601 = vadd.xlane.f32.xlu0 %v551
        %v602 = vpop.xlane.xlu0 %601
        %603 = vadd.xlane.f32.xlu0 %v552
        %v604 = vpop.xlane.xlu0 %603
        %605 = vadd.xlane.f32.xlu0 %v553
        %v606 = vpop.xlane.xlu0 %605
        %607 = vadd.xlane.f32.xlu0 %v554
        %v608 = vpop.xlane.xlu0 %607
        %609 = vadd.xlane.f32.xlu0 %v555
        %v610 = vpop.xlane.xlu0 %609
        %611 = vadd.xlane.f32.xlu0 %v556
        %v612 = vpop.xlane.xlu0 %611
        %613 = vadd.xlane.f32.xlu0 %v557
        %v614 = vpop.xlane.xlu0 %613
        %615 = vadd.xlane.f32.xlu0 %v558
        %v616 = vpop.xlane.xlu0 %615
        %617 = vadd.xlane.f32.xlu0 %v559
        %v618 = vpop.xlane.xlu0 %617
        %619 = vadd.xlane.f32.xlu0 %v560
        %v620 = vpop.xlane.xlu0 %619
        %621 = vadd.xlane.f32.xlu0 %v561
        %v622 = vpop.xlane.xlu0 %621
        %623 = vadd.xlane.f32.xlu0 %v562
        %v624 = vpop.xlane.xlu0 %623
        %625 = vadd.xlane.f32.xlu0 %v563
        %v626 = vpop.xlane.xlu0 %625
        %627 = vadd.xlane.f32.xlu0 %v564
        %v628 = vpop.xlane.xlu0 %627
        %v629 = vmul.f32 %v566, %v468
        %v630 = vmul.f32 %v568, %v468
        %v631 = vmul.f32 %v570, %v468
        %v632 = vmul.f32 %v572, %v468
        %v633 = vmul.f32 %v574, %v468
        %v634 = vmul.f32 %v576, %v468
        %v635 = vmul.f32 %v578, %v468
        %v636 = vmul.f32 %v580, %v468
        %v637 = vmul.f32 %v582, %v468
        %v638 = vmul.f32 %v584, %v468
        %v639 = vmul.f32 %v586, %v468
        %v640 = vmul.f32 %v588, %v468
        %v641 = vmul.f32 %v590, %v468
        %v642 = vmul.f32 %v592, %v468
        %v643 = vmul.f32 %v594, %v468
        %v644 = vmul.f32 %v596, %v468
        %v645 = vmul.f32 %v598, %v468
        %v646 = vmul.f32 %v600, %v468
        %v647 = vmul.f32 %v602, %v468
        %v648 = vmul.f32 %v604, %v468
        %v649 = vmul.f32 %v606, %v468
        %v650 = vmul.f32 %v608, %v468
        %v651 = vmul.f32 %v610, %v468
        %v652 = vmul.f32 %v612, %v468
        %v653 = vmul.f32 %v614, %v468
        %v654 = vmul.f32 %v616, %v468
        %v655 = vmul.f32 %v618, %v468
        %v656 = vmul.f32 %v620, %v468
        %v657 = vmul.f32 %v622, %v468
        %v658 = vmul.f32 %v624, %v468
        %v659 = vmul.f32 %v626, %v468
        %v660 = vmul.f32 %v628, %v468
        %v661 = vadd.f32 %v629, 1e-05
        %v662 = vadd.f32 %v630, 1e-05
        %v663 = vadd.f32 %v631, 1e-05
        %v664 = vadd.f32 %v632, 1e-05
        %v665 = vadd.f32 %v633, 1e-05
        %v666 = vadd.f32 %v634, 1e-05
        %v667 = vadd.f32 %v635, 1e-05
        %v668 = vadd.f32 %v636, 1e-05
        %v669 = vadd.f32 %v637, 1e-05
        %v670 = vadd.f32 %v638, 1e-05
        %v671 = vadd.f32 %v639, 1e-05
        %v672 = vadd.f32 %v640, 1e-05
        %v673 = vadd.f32 %v641, 1e-05
        %v674 = vadd.f32 %v642, 1e-05
        %v675 = vadd.f32 %v643, 1e-05
        %v676 = vadd.f32 %v644, 1e-05
        %v677 = vadd.f32 %v645, 1e-05
        %v678 = vadd.f32 %v646, 1e-05
        %v679 = vadd.f32 %v647, 1e-05
        %v680 = vadd.f32 %v648, 1e-05
        %v681 = vadd.f32 %v649, 1e-05
        %v682 = vadd.f32 %v650, 1e-05
        %v683 = vadd.f32 %v651, 1e-05
        %v684 = vadd.f32 %v652, 1e-05
        %v685 = vadd.f32 %v653, 1e-05
        %v686 = vadd.f32 %v654, 1e-05
        %v687 = vadd.f32 %v655, 1e-05
        %v688 = vadd.f32 %v656, 1e-05
        %v689 = vadd.f32 %v657, 1e-05
        %v690 = vadd.f32 %v658, 1e-05
        %v691 = vadd.f32 %v659, 1e-05
        %v692 = vadd.f32 %v660, 1e-05
        %v693 = vrsqrt.pop %v661
        %v694 = vrsqrt.pop %v662
        %v695 = vrsqrt.pop %v663
        %v696 = vrsqrt.pop %v664
        %v697 = vrsqrt.pop %v665
        %v698 = vrsqrt.pop %v666
        %v699 = vrsqrt.pop %v667
        %v700 = vrsqrt.pop %v668
        %v701 = vrsqrt.pop %v669
        %v702 = vrsqrt.pop %v670
        %v703 = vrsqrt.pop %v671
        %v704 = vrsqrt.pop %v672
        %v705 = vrsqrt.pop %v673
        %v706 = vrsqrt.pop %v674
        %v707 = vrsqrt.pop %v675
        %v708 = vrsqrt.pop %v676
        %v709 = vrsqrt.pop %v677
        %v710 = vrsqrt.pop %v678
        %v711 = vrsqrt.pop %v679
        %v712 = vrsqrt.pop %v680
        %v713 = vrsqrt.pop %v681
        %v714 = vrsqrt.pop %v682
        %v715 = vrsqrt.pop %v683
        %v716 = vrsqrt.pop %v684
        %v717 = vrsqrt.pop %v685
        %v718 = vrsqrt.pop %v686
        %v719 = vrsqrt.pop %v687
        %v720 = vrsqrt.pop %v688
        %v721 = vrsqrt.pop %v689
        %v722 = vrsqrt.pop %v690
        %v723 = vrsqrt.pop %v691
        %v724 = vrsqrt.pop %v692
        %v725 = vmul.f32 %v501, %v693
        %v726 = vmul.f32 %v502, %v694
        %v727 = vmul.f32 %v503, %v695
        %v728 = vmul.f32 %v504, %v696
        %v729 = vmul.f32 %v505, %v697
        %v730 = vmul.f32 %v506, %v698
        %v731 = vmul.f32 %v507, %v699
        %v732 = vmul.f32 %v508, %v700
        %v733 = vmul.f32 %v509, %v701
        %v734 = vmul.f32 %v510, %v702
        %v735 = vmul.f32 %v511, %v703
        %v736 = vmul.f32 %v512, %v704
        %v737 = vmul.f32 %v513, %v705
        %v738 = vmul.f32 %v514, %v706
        %v739 = vmul.f32 %v515, %v707
        %v740 = vmul.f32 %v516, %v708
        %v741 = vmul.f32 %v517, %v709
        %v742 = vmul.f32 %v518, %v710
        %v743 = vmul.f32 %v519, %v711
        %v744 = vmul.f32 %v520, %v712
        %v745 = vmul.f32 %v521, %v713
        %v746 = vmul.f32 %v522, %v714
        %v747 = vmul.f32 %v523, %v715
        %v748 = vmul.f32 %v524, %v716
        %v749 = vmul.f32 %v525, %v717
        %v750 = vmul.f32 %v526, %v718
        %v751 = vmul.f32 %v527, %v719
        %v752 = vmul.f32 %v528, %v720
        %v753 = vmul.f32 %v529, %v721
        %v754 = vmul.f32 %v530, %v722
        %v755 = vmul.f32 %v531, %v723
        %v756 = vmul.f32 %v532, %v724
        %v758 = vlaneseq
        %v759 = vshrl.u32 %v758, 7
        %v760 = vsub.s32 0, %v759
        %v761 = vrot.slane %v402, %v760
        %v763 = vmul.f32 %v725, %v761
        %v764 = vmul.f32 %v726, %v761
        %v765 = vmul.f32 %v727, %v761
        %v766 = vmul.f32 %v728, %v761
        %v767 = vmul.f32 %v729, %v761
        %v768 = vmul.f32 %v730, %v761
        %v769 = vmul.f32 %v731, %v761
        %v770 = vmul.f32 %v732, %v761
        %v771 = vmul.f32 %v733, %v761
        %v772 = vmul.f32 %v734, %v761
        %v773 = vmul.f32 %v735, %v761
        %v774 = vmul.f32 %v736, %v761
        %v775 = vmul.f32 %v737, %v761
        %v776 = vmul.f32 %v738, %v761
        %v777 = vmul.f32 %v739, %v761
        %v778 = vmul.f32 %v740, %v761
        %v779 = vmul.f32 %v741, %v761
        %v780 = vmul.f32 %v742, %v761
        %v781 = vmul.f32 %v743, %v761
        %v782 = vmul.f32 %v744, %v761
        %v783 = vmul.f32 %v745, %v761
        %v784 = vmul.f32 %v746, %v761
        %v785 = vmul.f32 %v747, %v761
        %v786 = vmul.f32 %v748, %v761
        %v787 = vmul.f32 %v749, %v761
        %v788 = vmul.f32 %v750, %v761
        %v789 = vmul.f32 %v751, %v761
        %v790 = vmul.f32 %v752, %v761
        %v791 = vmul.f32 %v753, %v761
        %v792 = vmul.f32 %v754, %v761
        %v793 = vmul.f32 %v755, %v761
        %v794 = vmul.f32 %v756, %v761
        %v796 = vlaneseq
        %v797 = vshrl.u32 %v796, 7
        %v798 = vsub.s32 0, %v797
        %v799 = vrot.slane %v403, %v798
        %v801 = vadd.f32 %v763, %v799
        %v802 = vadd.f32 %v764, %v799
        %v803 = vadd.f32 %v765, %v799
        %v804 = vadd.f32 %v766, %v799
        %v805 = vadd.f32 %v767, %v799
        %v806 = vadd.f32 %v768, %v799
        %v807 = vadd.f32 %v769, %v799
        %v808 = vadd.f32 %v770, %v799
        %v809 = vadd.f32 %v771, %v799
        %v810 = vadd.f32 %v772, %v799
        %v811 = vadd.f32 %v773, %v799
        %v812 = vadd.f32 %v774, %v799
        %v813 = vadd.f32 %v775, %v799
        %v814 = vadd.f32 %v776, %v799
        %v815 = vadd.f32 %v777, %v799
        %v816 = vadd.f32 %v778, %v799
        %v817 = vadd.f32 %v779, %v799
        %v818 = vadd.f32 %v780, %v799
        %v819 = vadd.f32 %v781, %v799
        %v820 = vadd.f32 %v782, %v799
        %v821 = vadd.f32 %v783, %v799
        %v822 = vadd.f32 %v784, %v799
        %v823 = vadd.f32 %v785, %v799
        %v824 = vadd.f32 %v786, %v799
        %v825 = vadd.f32 %v787, %v799
        %v826 = vadd.f32 %v788, %v799
        %v827 = vadd.f32 %v789, %v799
        %v828 = vadd.f32 %v790, %v799
        %v829 = vadd.f32 %v791, %v799
        %v830 = vadd.f32 %v792, %v799
        %v831 = vadd.f32 %v793, %v799
        %v832 = vadd.f32 %v794, %v799
        %v833 = vpack.c.bf16 %v802, %v801
        %v834 = vpack.c.bf16 %v804, %v803
        %v835 = vpack.c.bf16 %v806, %v805
        %v836 = vpack.c.bf16 %v808, %v807
        %v837 = vpack.c.bf16 %v810, %v809
        %v838 = vpack.c.bf16 %v812, %v811
        %v839 = vpack.c.bf16 %v814, %v813
        %v840 = vpack.c.bf16 %v816, %v815
        %v841 = vpack.c.bf16 %v818, %v817
        %v842 = vpack.c.bf16 %v820, %v819
        %v843 = vpack.c.bf16 %v822, %v821
        %v844 = vpack.c.bf16 %v824, %v823
        %v845 = vpack.c.bf16 %v826, %v825
        %v846 = vpack.c.bf16 %v828, %v827
        %v847 = vpack.c.bf16 %v830, %v829
        %v848 = vpack.c.bf16 %v832, %v831
        %v849 = vld [vmem:[#allocation7] sm:$0xff]
        %v850 = vld [vmem:[#allocation7 + $0x8] sm:$0xf]
        %v851 = vld [vmem:[#allocation7 + $0xc] sm:$0xff]
        %v852 = vld [vmem:[#allocation7 + $0x14] sm:$0xf]
        %v853 = vld [vmem:[#allocation7 + $0x18] sm:$0xff]
        %v854 = vld [vmem:[#allocation7 + $0x20] sm:$0xf]
        %v855 = vld [vmem:[#allocation7 + $0x24] sm:$0xff]
        %v856 = vld [vmem:[#allocation7 + $0x2c] sm:$0xf]
        %v857 = vld [vmem:[#allocation7 + $0x30] sm:$0xff]
        %v858 = vld [vmem:[#allocation7 + $0x38] sm:$0xf]
        %v859 = vld [vmem:[#allocation7 + $0x3c] sm:$0xff]
        %v860 = vld [vmem:[#allocation7 + $0x44] sm:$0xf]
        %v861 = vld [vmem:[#allocation7 + $0x48] sm:$0xff]
        %v862 = vld [vmem:[#allocation7 + $0x50] sm:$0xf]
        %v863 = vld [vmem:[#allocation7 + $0x54] sm:$0xff]
        %v864 = vld [vmem:[#allocation7 + $0x5c] sm:$0xf]
        %v865 = vld [vmem:[#allocation7 + $0x60] sm:$0xff]
        %v866 = vld [vmem:[#allocation7 + $0x68] sm:$0xf]
        %v867 = vld [vmem:[#allocation7 + $0x6c] sm:$0xff]
        %v868 = vld [vmem:[#allocation7 + $0x74] sm:$0xf]
        %v869 = vld [vmem:[#allocation7 + $0x78] sm:$0xff]
        %v870 = vld [vmem:[#allocation7 + $0x80] sm:$0xf]
        %v871 = vld [vmem:[#allocation7 + $0x84] sm:$0xff]
        %v872 = vld [vmem:[#allocation7 + $0x8c] sm:$0xf]
        %v873 = vld [vmem:[#allocation7 + $0x90] sm:$0xff]
        %v874 = vld [vmem:[#allocation7 + $0x98] sm:$0xf]
        %v875 = vld [vmem:[#allocation7 + $0x9c] sm:$0xff]
        %v876 = vld [vmem:[#allocation7 + $0xa4] sm:$0xf]
        %v877 = vld [vmem:[#allocation7 + $0xa8] sm:$0xff]
        %v878 = vld [vmem:[#allocation7 + $0xb0] sm:$0xf]
        %v879 = vld [vmem:[#allocation7 + $0xb4] sm:$0xff]
        %v880 = vld [vmem:[#allocation7 + $0xbc] sm:$0xf]
        %v881 = vld [vmem:[%s319] sm:$0xff]
        %v882 = vld [vmem:[%s319 + $0x8] sm:$0xff]
        %v883 = vld [vmem:[%s319 + $0x10] sm:$0xff]
        %v884 = vld [vmem:[%s319 + $0x18] sm:$0xff]
        %v885 = vld [vmem:[%s319 + $0x20] sm:$0xff]
        %v886 = vld [vmem:[%s319 + $0x28] sm:$0xff]
        %v887 = vld [vmem:[%s319 + $0x30] sm:$0xff]
        %v888 = vld [vmem:[%s319 + $0x38] sm:$0xff]
        %v889 = vld [vmem:[%s319 + $0x40] sm:$0xff]
        %v890 = vld [vmem:[%s319 + $0x48] sm:$0xff]
        %v891 = vld [vmem:[%s319 + $0x50] sm:$0xff]
        %v892 = vld [vmem:[%s319 + $0x58] sm:$0xff]
        %v893 = vld [vmem:[%s319 + $0x60] sm:$0xff]
        %v894 = vld [vmem:[%s319 + $0x68] sm:$0xff]
        %v895 = vld [vmem:[%s319 + $0x70] sm:$0xff]
        %v896 = vld [vmem:[%s319 + $0x78] sm:$0xff]
        %v897 = vld [vmem:[%s319 + $0x80] sm:$0xff]
        %v898 = vld [vmem:[%s319 + $0x88] sm:$0xff]
        %v899 = vld [vmem:[%s319 + $0x90] sm:$0xff]
        %v900 = vld [vmem:[%s319 + $0x98] sm:$0xff]
        %v901 = vld [vmem:[%s319 + $0xa0] sm:$0xff]
        %v902 = vld [vmem:[%s319 + $0xa8] sm:$0xff]
        %v903 = vld [vmem:[%s319 + $0xb0] sm:$0xff]
        %v904 = vld [vmem:[%s319 + $0xb8] sm:$0xff]
        %v905 = vld [vmem:[%s319 + $0xc0] sm:$0xff]
        %v906 = vld [vmem:[%s319 + $0xc8] sm:$0xff]
        %v907 = vld [vmem:[%s319 + $0xd0] sm:$0xff]
        %v908 = vld [vmem:[%s319 + $0xd8] sm:$0xff]
        %v909 = vld [vmem:[%s319 + $0xe0] sm:$0xff]
        %v910 = vld [vmem:[%s319 + $0xe8] sm:$0xff]
        %v911 = vld [vmem:[%s319 + $0xf0] sm:$0xff]
        %v912 = vld [vmem:[%s319 + $0xf8] sm:$0xff]
        %v913 = vld [vmem:[%s319 + $0x100] sm:$0xff]
        %v914 = vld [vmem:[%s319 + $0x108] sm:$0xff]
        %v915 = vld [vmem:[%s319 + $0x110] sm:$0xff]
        %v916 = vld [vmem:[%s319 + $0x118] sm:$0xff]
        %v917 = vld [vmem:[%s319 + $0x120] sm:$0xff]
        %v918 = vld [vmem:[%s319 + $0x128] sm:$0xff]
        %v919 = vld [vmem:[%s319 + $0x130] sm:$0xff]
        %v920 = vld [vmem:[%s319 + $0x138] sm:$0xff]
        %v921 = vld [vmem:[%s319 + $0x140] sm:$0xff]
        %v922 = vld [vmem:[%s319 + $0x148] sm:$0xff]
        %v923 = vld [vmem:[%s319 + $0x150] sm:$0xff]
        %v924 = vld [vmem:[%s319 + $0x158] sm:$0xff]
        %v925 = vld [vmem:[%s319 + $0x160] sm:$0xff]
        %v926 = vld [vmem:[%s319 + $0x168] sm:$0xff]
        %v927 = vld [vmem:[%s319 + $0x170] sm:$0xff]
        %v928 = vld [vmem:[%s319 + $0x178] sm:$0xff]
        %v929 = vld [vmem:[%s319 + $0x180] sm:$0xff]
        %v930 = vld [vmem:[%s319 + $0x188] sm:$0xff]
        %v931 = vld [vmem:[%s319 + $0x190] sm:$0xff]
        %v932 = vld [vmem:[%s319 + $0x198] sm:$0xff]
        %v933 = vld [vmem:[%s319 + $0x1a0] sm:$0xff]
        %v934 = vld [vmem:[%s319 + $0x1a8] sm:$0xff]
        %v935 = vld [vmem:[%s319 + $0x1b0] sm:$0xff]
        %v936 = vld [vmem:[%s319 + $0x1b8] sm:$0xff]
        %v937 = vld [vmem:[%s319 + $0x1c0] sm:$0xff]
        %v938 = vld [vmem:[%s319 + $0x1c8] sm:$0xff]
        %v939 = vld [vmem:[%s319 + $0x1d0] sm:$0xff]
        %v940 = vld [vmem:[%s319 + $0x1d8] sm:$0xff]
        %v941 = vld [vmem:[%s319 + $0x1e0] sm:$0xff]
        %v942 = vld [vmem:[%s319 + $0x1e8] sm:$0xff]
        %v943 = vld [vmem:[%s319 + $0x1f0] sm:$0xff]
        %v944 = vld [vmem:[%s319 + $0x1f8] sm:$0xff]
        %v945 = vld [vmem:[%s319 + $0x200] sm:$0xff]
        %v946 = vld [vmem:[%s319 + $0x208] sm:$0xff]
        %v947 = vld [vmem:[%s319 + $0x210] sm:$0xff]
        %v948 = vld [vmem:[%s319 + $0x218] sm:$0xff]
        %v949 = vld [vmem:[%s319 + $0x220] sm:$0xff]
        %v950 = vld [vmem:[%s319 + $0x228] sm:$0xff]
        %v951 = vld [vmem:[%s319 + $0x230] sm:$0xff]
        %v952 = vld [vmem:[%s319 + $0x238] sm:$0xff]
        %v953 = vld [vmem:[%s319 + $0x240] sm:$0xff]
        %v954 = vld [vmem:[%s319 + $0x248] sm:$0xff]
        %v955 = vld [vmem:[%s319 + $0x250] sm:$0xff]
        %v956 = vld [vmem:[%s319 + $0x258] sm:$0xff]
        %v957 = vld [vmem:[%s319 + $0x260] sm:$0xff]
        %v958 = vld [vmem:[%s319 + $0x268] sm:$0xff]
        %v959 = vld [vmem:[%s319 + $0x270] sm:$0xff]
        %v960 = vld [vmem:[%s319 + $0x278] sm:$0xff]
        %v961 = vld [vmem:[%s319 + $0x280] sm:$0xff]
        %v962 = vld [vmem:[%s319 + $0x288] sm:$0xff]
        %v963 = vld [vmem:[%s319 + $0x290] sm:$0xff]
        %v964 = vld [vmem:[%s319 + $0x298] sm:$0xff]
        %v965 = vld [vmem:[%s319 + $0x2a0] sm:$0xff]
        %v966 = vld [vmem:[%s319 + $0x2a8] sm:$0xff]
        %v967 = vld [vmem:[%s319 + $0x2b0] sm:$0xff]
        %v968 = vld [vmem:[%s319 + $0x2b8] sm:$0xff]
        %v969 = vld [vmem:[%s319 + $0x2c0] sm:$0xff]
        %v970 = vld [vmem:[%s319 + $0x2c8] sm:$0xff]
        %v971 = vld [vmem:[%s319 + $0x2d0] sm:$0xff]
        %v972 = vld [vmem:[%s319 + $0x2d8] sm:$0xff]
        %v973 = vld [vmem:[%s319 + $0x2e0] sm:$0xff]
        %v974 = vld [vmem:[%s319 + $0x2e8] sm:$0xff]
        %v975 = vld [vmem:[%s319 + $0x2f0] sm:$0xff]
        %v976 = vld [vmem:[%s319 + $0x2f8] sm:$0xff]
        %v1009 = vunpack.c.l.b16 %v849
        %v1010 = vunpack.c.h.b16 %v849
        %v1011 = vunpack.c.l.b16 %v850
        %v1012 = vunpack.c.l.b16 %v851
        %v1013 = vunpack.c.h.b16 %v851
        %v1014 = vunpack.c.l.b16 %v852
        %v1015 = vunpack.c.l.b16 %v853
        %v1016 = vunpack.c.h.b16 %v853
        %v1017 = vunpack.c.l.b16 %v854
        %v1018 = vunpack.c.l.b16 %v855
        %v1019 = vunpack.c.h.b16 %v855
        %v1020 = vunpack.c.l.b16 %v856
        %v1021 = vunpack.c.l.b16 %v857
        %v1022 = vunpack.c.h.b16 %v857
        %v1023 = vunpack.c.l.b16 %v858
        %v1024 = vunpack.c.l.b16 %v859
        %v1025 = vunpack.c.h.b16 %v859
        %v1026 = vunpack.c.l.b16 %v860
        %v1027 = vunpack.c.l.b16 %v861
        %v1028 = vunpack.c.h.b16 %v861
        %v1029 = vunpack.c.l.b16 %v862
        %v1030 = vunpack.c.l.b16 %v863
        %v1031 = vunpack.c.h.b16 %v863
        %v1032 = vunpack.c.l.b16 %v864
        %v1033 = vunpack.c.l.b16 %v865
        %v1034 = vunpack.c.h.b16 %v865
        %v1035 = vunpack.c.l.b16 %v866
        %v1036 = vunpack.c.l.b16 %v867
        %v1037 = vunpack.c.h.b16 %v867
        %v1038 = vunpack.c.l.b16 %v868
        %v1039 = vunpack.c.l.b16 %v869
        %v1040 = vunpack.c.h.b16 %v869
        %v1041 = vunpack.c.l.b16 %v870
        %v1042 = vunpack.c.l.b16 %v871
        %v1043 = vunpack.c.h.b16 %v871
        %v1044 = vunpack.c.l.b16 %v872
        %v1045 = vunpack.c.l.b16 %v873
        %v1046 = vunpack.c.h.b16 %v873
        %v1047 = vunpack.c.l.b16 %v874
        %v1048 = vunpack.c.l.b16 %v875
        %v1049 = vunpack.c.h.b16 %v875
        %v1050 = vunpack.c.l.b16 %v876
        %v1051 = vunpack.c.l.b16 %v877
        %v1052 = vunpack.c.h.b16 %v877
        %v1053 = vunpack.c.l.b16 %v878
        %v1054 = vunpack.c.l.b16 %v879
        %v1055 = vunpack.c.h.b16 %v879
        %v1056 = vunpack.c.l.b16 %v880
        %v1057 = vpack.c.b16 %v1012, %v1009
        %v1058 = vpack.c.b16 %v1013, %v1010
        %v1059 = vpack.c.b16 %v1014, %v1011
        %v1060 = vpack.c.b16 %v1018, %v1015
        %v1061 = vpack.c.b16 %v1019, %v1016
        %v1062 = vpack.c.b16 %v1020, %v1017
        %v1063 = vpack.c.b16 %v1024, %v1021
        %v1064 = vpack.c.b16 %v1025, %v1022
        %v1065 = vpack.c.b16 %v1026, %v1023
        %v1066 = vpack.c.b16 %v1030, %v1027
        %v1067 = vpack.c.b16 %v1031, %v1028
        %v1068 = vpack.c.b16 %v1032, %v1029
        %v1069 = vpack.c.b16 %v1036, %v1033
        %v1070 = vpack.c.b16 %v1037, %v1034
        %v1071 = vpack.c.b16 %v1038, %v1035
        %v1072 = vpack.c.b16 %v1042, %v1039
        %v1073 = vpack.c.b16 %v1043, %v1040
        %v1074 = vpack.c.b16 %v1044, %v1041
        %v1075 = vpack.c.b16 %v1048, %v1045
        %v1076 = vpack.c.b16 %v1049, %v1046
        %v1077 = vpack.c.b16 %v1050, %v1047
        %v1078 = vpack.c.b16 %v1054, %v1051
        %v1079 = vpack.c.b16 %v1055, %v1052
        %v1080 = vpack.c.b16 %v1056, %v1053
        %1105 = vmatprep.subr.bf16.mxu0 %v1058
        %1106 = vmatpush1.bf16.msra.mxu0 %v1057
        %1107 = vmatprep.subr.bf16.mxu0 %v1061
        %1108 = vmatpush1.bf16.msra.mxu0 %v1060
        %1109 = vmatprep.subr.bf16.mxu0 %v1064
        %1110 = vmatpush1.bf16.msra.mxu0 %v1063
        %1111 = vmatprep.subr.bf16.mxu0 %v1067
        %1112 = vmatpush1.bf16.msra.mxu0 %v1066
        %1113 = vmatprep.subr.bf16.mxu0 %v1070
        %1114 = vmatpush1.bf16.msra.mxu0 %v1069
        %1115 = vmatprep.subr.bf16.mxu0 %v1073
        %1116 = vmatpush1.bf16.msra.mxu0 %v1072
        %1117 = vmatprep.subr.bf16.mxu0 %v1076
        %1118 = vmatpush1.bf16.msra.mxu0 %v1075
        %1119 = vmatprep.subr.bf16.mxu0 %v1079
        %1120 = vmatpush1.bf16.msra.mxu0 %v1078
        %1121 = vmatprep.subr.bf16.mxu0 0
        %1122 = vmatpush1.bf16.msra.mxu0 0
        %1123 = vmatprep.subr.bf16.mxu0 0
        %1124 = vmatpush1.bf16.msra.mxu0 0
        %1125 = vmatprep.subr.bf16.mxu0 0
        %1126 = vmatpush1.bf16.msra.mxu0 0
        %1127 = vmatprep.subr.bf16.mxu0 0
        %1128 = vmatpush1.bf16.msra.mxu0 0
        %1129 = vmatprep.subr.bf16.mxu0 0
        %1130 = vmatpush1.bf16.msra.mxu0 0
        %1131 = vmatprep.subr.bf16.mxu0 0
        %1132 = vmatpush1.bf16.msra.mxu0 0
        %1133 = vmatprep.subr.bf16.mxu0 0
        %1134 = vmatpush1.bf16.msra.mxu0 0
        %1135 = vmatprep.subr.bf16.mxu0 0
        %1136 = vmatpush1.bf16.msra.mxu0 0
        %1137 = vmatprep.mubr.bf16.mxu0 0
        %1138 = vmatmul.mubr.bf16.gmra.mrb[0].mxu0 %v833
        %v1139 = vpop.f32.mrb[0].mxu0
        %v1140 = vadd.f32 %v881, %v1139
        %v1141 = vpop.f32.mrb[0].mxu0
        %v1142 = vadd.f32 %v882, %v1141
        %v1143 = vpop.f32.mrb[0].mxu0
        %v1144 = vadd.f32 %v884, %v1143
        %v1145 = vpop.f32.mrb[0].mxu0
        %v1146 = vadd.f32 %v885, %v1145
        %1147 = vmatprep.mubr.bf16.mxu0 0
        %1148 = vmatmul.mubr.bf16.gmra.mrb[0].mxu0 %v834
        %v1149 = vpop.f32.mrb[0].mxu0
        %v1150 = vadd.f32 %v887, %v1149
        %v1151 = vpop.f32.mrb[0].mxu0
        %v1152 = vadd.f32 %v888, %v1151
        %v1153 = vpop.f32.mrb[0].mxu0
        %v1154 = vadd.f32 %v890, %v1153
        %v1155 = vpop.f32.mrb[0].mxu0
        %v1156 = vadd.f32 %v891, %v1155
        %1157 = vmatprep.mubr.bf16.mxu0 0
        %1158 = vmatmul.mubr.bf16.gmra.mrb[0].mxu0 %v835
        %v1159 = vpop.f32.mrb[0].mxu0
        %v1160 = vadd.f32 %v893, %v1159
        %v1161 = vpop.f32.mrb[0].mxu0
        %v1162 = vadd.f32 %v894, %v1161
        %v1163 = vpop.f32.mrb[0].mxu0
        %v1164 = vadd.f32 %v896, %v1163
        %v1165 = vpop.f32.mrb[0].mxu0
        %v1166 = vadd.f32 %v897, %v1165
        %1167 = vmatprep.mubr.bf16.mxu0 0
        %1168 = vmatmul.mubr.bf16.gmra.mrb[0].mxu0 %v836
        %v1169 = vpop.f32.mrb[0].mxu0
        %v1170 = vadd.f32 %v899, %v1169
        %v1171 = vpop.f32.mrb[0].mxu0
        %v1172 = vadd.f32 %v900, %v1171
        %v1173 = vpop.f32.mrb[0].mxu0
        %v1174 = vadd.f32 %v902, %v1173
        %v1175 = vpop.f32.mrb[0].mxu0
        %v1176 = vadd.f32 %v903, %v1175
        %1177 = vmatprep.mubr.bf16.mxu0 0
        %1178 = vmatmul.mubr.bf16.gmra.mrb[0].mxu0 %v837
        %v1179 = vpop.f32.mrb[0].mxu0
        %v1180 = vadd.f32 %v905, %v1179
        %v1181 = vpop.f32.mrb[0].mxu0
        %v1182 = vadd.f32 %v906, %v1181
        %v1183 = vpop.f32.mrb[0].mxu0
        %v1184 = vadd.f32 %v908, %v1183
        %v1185 = vpop.f32.mrb[0].mxu0
        %v1186 = vadd.f32 %v909, %v1185
        %1187 = vmatprep.mubr.bf16.mxu0 0
        %1188 = vmatmul.mubr.bf16.gmra.mrb[0].mxu0 %v838
        %v1189 = vpop.f32.mrb[0].mxu0
        %v1190 = vadd.f32 %v911, %v1189
        %v1191 = vpop.f32.mrb[0].mxu0
        %v1192 = vadd.f32 %v912, %v1191
        %v1193 = vpop.f32.mrb[0].mxu0
        %v1194 = vadd.f32 %v914, %v1193
        %v1195 = vpop.f32.mrb[0].mxu0
        %v1196 = vadd.f32 %v915, %v1195
        %1197 = vmatprep.mubr.bf16.mxu0 0
        %1198 = vmatmul.mubr.bf16.gmra.mrb[0].mxu0 %v839
        %v1199 = vpop.f32.mrb[0].mxu0
        %v1200 = vadd.f32 %v917, %v1199
        %v1201 = vpop.f32.mrb[0].mxu0
        %v1202 = vadd.f32 %v918, %v1201
        %v1203 = vpop.f32.mrb[0].mxu0
        %v1204 = vadd.f32 %v920, %v1203
        %v1205 = vpop.f32.mrb[0].mxu0
        %v1206 = vadd.f32 %v921, %v1205
        %1207 = vmatprep.mubr.bf16.mxu0 0
        %1208 = vmatmul.mubr.bf16.gmra.mrb[0].mxu0 %v840
        %v1209 = vpop.f32.mrb[0].mxu0
        %v1210 = vadd.f32 %v923, %v1209
        %v1211 = vpop.f32.mrb[0].mxu0
        %v1212 = vadd.f32 %v924, %v1211
        %v1213 = vpop.f32.mrb[0].mxu0
        %v1214 = vadd.f32 %v926, %v1213
        %v1215 = vpop.f32.mrb[0].mxu0
        %v1216 = vadd.f32 %v927, %v1215
        %1217 = vmatprep.mubr.bf16.mxu0 0
        %1218 = vmatmul.mubr.bf16.gmra.mrb[0].mxu0 %v841
        %v1219 = vpop.f32.mrb[0].mxu0
        %v1220 = vadd.f32 %v929, %v1219
        %v1221 = vpop.f32.mrb[0].mxu0
        %v1222 = vadd.f32 %v930, %v1221
        %v1223 = vpop.f32.mrb[0].mxu0
        %v1224 = vadd.f32 %v932, %v1223
        %v1225 = vpop.f32.mrb[0].mxu0
        %v1226 = vadd.f32 %v933, %v1225
        %1227 = vmatprep.mubr.bf16.mxu0 0
        %1228 = vmatmul.mubr.bf16.gmra.mrb[0].mxu0 %v842
        %v1229 = vpop.f32.mrb[0].mxu0
        %v1230 = vadd.f32 %v935, %v1229
        %v1231 = vpop.f32.mrb[0].mxu0
        %v1232 = vadd.f32 %v936, %v1231
        %v1233 = vpop.f32.mrb[0].mxu0
        %v1234 = vadd.f32 %v938, %v1233
        %v1235 = vpop.f32.mrb[0].mxu0
        %v1236 = vadd.f32 %v939, %v1235
        %1237 = vmatprep.mubr.bf16.mxu0 0
        %1238 = vmatmul.mubr.bf16.gmra.mrb[0].mxu0 %v843
        %v1239 = vpop.f32.mrb[0].mxu0
        %v1240 = vadd.f32 %v941, %v1239
        %v1241 = vpop.f32.mrb[0].mxu0
        %v1242 = vadd.f32 %v942, %v1241
        %v1243 = vpop.f32.mrb[0].mxu0
        %v1244 = vadd.f32 %v944, %v1243
        %v1245 = vpop.f32.mrb[0].mxu0
        %v1246 = vadd.f32 %v945, %v1245
        %1247 = vmatprep.mubr.bf16.mxu0 0
        %1248 = vmatmul.mubr.bf16.gmra.mrb[0].mxu0 %v844
        %v1249 = vpop.f32.mrb[0].mxu0
        %v1250 = vadd.f32 %v947, %v1249
        %v1251 = vpop.f32.mrb[0].mxu0
        %v1252 = vadd.f32 %v948, %v1251
        %v1253 = vpop.f32.mrb[0].mxu0
        %v1254 = vadd.f32 %v950, %v1253
        %v1255 = vpop.f32.mrb[0].mxu0
        %v1256 = vadd.f32 %v951, %v1255
        %1257 = vmatprep.mubr.bf16.mxu0 0
        %1258 = vmatmul.mubr.bf16.gmra.mrb[0].mxu0 %v845
        %v1259 = vpop.f32.mrb[0].mxu0
        %v1260 = vadd.f32 %v953, %v1259
        %v1261 = vpop.f32.mrb[0].mxu0
        %v1262 = vadd.f32 %v954, %v1261
        %v1263 = vpop.f32.mrb[0].mxu0
        %v1264 = vadd.f32 %v956, %v1263
        %v1265 = vpop.f32.mrb[0].mxu0
        %v1266 = vadd.f32 %v957, %v1265
        %1267 = vmatprep.mubr.bf16.mxu0 0
        %1268 = vmatmul.mubr.bf16.gmra.mrb[0].mxu0 %v846
        %v1269 = vpop.f32.mrb[0].mxu0
        %v1270 = vadd.f32 %v959, %v1269
        %v1271 = vpop.f32.mrb[0].mxu0
        %v1272 = vadd.f32 %v960, %v1271
        %v1273 = vpop.f32.mrb[0].mxu0
        %v1274 = vadd.f32 %v962, %v1273
        %v1275 = vpop.f32.mrb[0].mxu0
        %v1276 = vadd.f32 %v963, %v1275
        %1277 = vmatprep.mubr.bf16.mxu0 0
        %1278 = vmatmul.mubr.bf16.gmra.mrb[0].mxu0 %v847
        %v1279 = vpop.f32.mrb[0].mxu0
        %v1280 = vadd.f32 %v965, %v1279
        %v1281 = vpop.f32.mrb[0].mxu0
        %v1282 = vadd.f32 %v966, %v1281
        %v1283 = vpop.f32.mrb[0].mxu0
        %v1284 = vadd.f32 %v968, %v1283
        %v1285 = vpop.f32.mrb[0].mxu0
        %v1286 = vadd.f32 %v969, %v1285
        %1287 = vmatprep.mubr.bf16.mxu0 0
        %1288 = vmatmul.mubr.bf16.gmra.mrb[0].mxu0 %v848
        %v1289 = vpop.f32.mrb[0].mxu0
        %v1290 = vadd.f32 %v971, %v1289
        %v1291 = vpop.f32.mrb[0].mxu0
        %v1292 = vadd.f32 %v972, %v1291
        %v1293 = vpop.f32.mrb[0].mxu0
        %v1294 = vadd.f32 %v974, %v1293
        %v1295 = vpop.f32.mrb[0].mxu0
        %v1296 = vadd.f32 %v975, %v1295
        %1297 = vdwg.mxu0
        %1298 = vmatprep.subr.bf16.mxu0 0
        %1299 = vmatpush1.bf16.msra.mxu0 %v1059
        %1300 = vmatprep.subr.bf16.mxu0 0
        %1301 = vmatpush1.bf16.msra.mxu0 %v1062
        %1302 = vmatprep.subr.bf16.mxu0 0
        %1303 = vmatpush1.bf16.msra.mxu0 %v1065
        %1304 = vmatprep.subr.bf16.mxu0 0
        %1305 = vmatpush1.bf16.msra.mxu0 %v1068
        %1306 = vmatprep.subr.bf16.mxu0 0
        %1307 = vmatpush1.bf16.msra.mxu0 %v1071
        %1308 = vmatprep.subr.bf16.mxu0 0
        %1309 = vmatpush1.bf16.msra.mxu0 %v1074
        %1310 = vmatprep.subr.bf16.mxu0 0
        %1311 = vmatpush1.bf16.msra.mxu0 %v1077
        %1312 = vmatprep.subr.bf16.mxu0 0
        %1313 = vmatpush1.bf16.msra.mxu0 %v1080
        %1314 = vmatprep.subr.bf16.mxu0 0
        %1315 = vmatpush1.bf16.msra.mxu0 0
        %1316 = vmatprep.subr.bf16.mxu0 0
        %1317 = vmatpush1.bf16.msra.mxu0 0
        %1318 = vmatprep.subr.bf16.mxu0 0
        %1319 = vmatpush1.bf16.msra.mxu0 0
        %1320 = vmatprep.subr.bf16.mxu0 0
        %1321 = vmatpush1.bf16.msra.mxu0 0
        %1322 = vmatprep.subr.bf16.mxu0 0
        %1323 = vmatpush1.bf16.msra.mxu0 0
        %1324 = vmatprep.subr.bf16.mxu0 0
        %1325 = vmatpush1.bf16.msra.mxu0 0
        %1326 = vmatprep.subr.bf16.mxu0 0
        %1327 = vmatpush1.bf16.msra.mxu0 0
        %1328 = vmatprep.subr.bf16.mxu0 0
        %1329 = vmatpush1.bf16.msra.mxu0 0
        %1330 = vmatprep.mubr.bf16.mxu0 0
        %1331 = vmatmul.mubr.bf16.gmra.mrb[0].mxu0 %v833
        %v1332 = vpop.f32.mrb[0].mxu0
        %v1333 = vadd.f32 %v883, %v1332
        %v1334 = vpop.f32.mrb[0].mxu0
        %v1335 = vpop.f32.mrb[0].mxu0
        %v1336 = vadd.f32 %v886, %v1335
        %v1337 = vpop.f32.mrb[0].mxu0
        %1338 = vmatprep.mubr.bf16.mxu0 0
        %1339 = vmatmul.mubr.bf16.gmra.mrb[0].mxu0 %v834
        %v1340 = vpop.f32.mrb[0].mxu0
        %v1341 = vadd.f32 %v889, %v1340
        %v1342 = vpop.f32.mrb[0].mxu0
        %v1343 = vpop.f32.mrb[0].mxu0
        %v1344 = vadd.f32 %v892, %v1343
        %v1345 = vpop.f32.mrb[0].mxu0
        %1346 = vmatprep.mubr.bf16.mxu0 0
        %1347 = vmatmul.mubr.bf16.gmra.mrb[0].mxu0 %v835
        %v1348 = vpop.f32.mrb[0].mxu0
        %v1349 = vadd.f32 %v895, %v1348
        %v1350 = vpop.f32.mrb[0].mxu0
        %v1351 = vpop.f32.mrb[0].mxu0
        %v1352 = vadd.f32 %v898, %v1351
        %v1353 = vpop.f32.mrb[0].mxu0
        %1354 = vmatprep.mubr.bf16.mxu0 0
        %1355 = vmatmul.mubr.bf16.gmra.mrb[0].mxu0 %v836
        %v1356 = vpop.f32.mrb[0].mxu0
        %v1357 = vadd.f32 %v901, %v1356
        %v1358 = vpop.f32.mrb[0].mxu0
        %v1359 = vpop.f32.mrb[0].mxu0
        %v1360 = vadd.f32 %v904, %v1359
        %v1361 = vpop.f32.mrb[0].mxu0
        %1362 = vmatprep.mubr.bf16.mxu0 0
        %1363 = vmatmul.mubr.bf16.gmra.mrb[0].mxu0 %v837
        %v1364 = vpop.f32.mrb[0].mxu0
        %v1365 = vadd.f32 %v907, %v1364
        %v1366 = vpop.f32.mrb[0].mxu0
        %v1367 = vpop.f32.mrb[0].mxu0
        %v1368 = vadd.f32 %v910, %v1367
        %v1369 = vpop.f32.mrb[0].mxu0
        %1370 = vmatprep.mubr.bf16.mxu0 0
        %1371 = vmatmul.mubr.bf16.gmra.mrb[0].mxu0 %v838
        %v1372 = vpop.f32.mrb[0].mxu0
        %v1373 = vadd.f32 %v913, %v1372
        %v1374 = vpop.f32.mrb[0].mxu0
        %v1375 = vpop.f32.mrb[0].mxu0
        %v1376 = vadd.f32 %v916, %v1375
        %v1377 = vpop.f32.mrb[0].mxu0
        %1378 = vmatprep.mubr.bf16.mxu0 0
        %1379 = vmatmul.mubr.bf16.gmra.mrb[0].mxu0 %v839
        %v1380 = vpop.f32.mrb[0].mxu0
        %v1381 = vadd.f32 %v919, %v1380
        %v1382 = vpop.f32.mrb[0].mxu0
        %v1383 = vpop.f32.mrb[0].mxu0
        %v1384 = vadd.f32 %v922, %v1383
        %v1385 = vpop.f32.mrb[0].mxu0
        %1386 = vmatprep.mubr.bf16.mxu0 0
        %1387 = vmatmul.mubr.bf16.gmra.mrb[0].mxu0 %v840
        %v1388 = vpop.f32.mrb[0].mxu0
        %v1389 = vadd.f32 %v925, %v1388
        %v1390 = vpop.f32.mrb[0].mxu0
        %v1391 = vpop.f32.mrb[0].mxu0
        %v1392 = vadd.f32 %v928, %v1391
        %v1393 = vpop.f32.mrb[0].mxu0
        %1394 = vmatprep.mubr.bf16.mxu0 0
        %1395 = vmatmul.mubr.bf16.gmra.mrb[0].mxu0 %v841
        %v1396 = vpop.f32.mrb[0].mxu0
        %v1397 = vadd.f32 %v931, %v1396
        %v1398 = vpop.f32.mrb[0].mxu0
        %v1399 = vpop.f32.mrb[0].mxu0
        %v1400 = vadd.f32 %v934, %v1399
        %v1401 = vpop.f32.mrb[0].mxu0
        %1402 = vmatprep.mubr.bf16.mxu0 0
        %1403 = vmatmul.mubr.bf16.gmra.mrb[0].mxu0 %v842
        %v1404 = vpop.f32.mrb[0].mxu0
        %v1405 = vadd.f32 %v937, %v1404
        %v1406 = vpop.f32.mrb[0].mxu0
        %v1407 = vpop.f32.mrb[0].mxu0
        %v1408 = vadd.f32 %v940, %v1407
        %v1409 = vpop.f32.mrb[0].mxu0
        %1410 = vmatprep.mubr.bf16.mxu0 0
        %1411 = vmatmul.mubr.bf16.gmra.mrb[0].mxu0 %v843
        %v1412 = vpop.f32.mrb[0].mxu0
        %v1413 = vadd.f32 %v943, %v1412
        %v1414 = vpop.f32.mrb[0].mxu0
        %v1415 = vpop.f32.mrb[0].mxu0
        %v1416 = vadd.f32 %v946, %v1415
        %v1417 = vpop.f32.mrb[0].mxu0
        %1418 = vmatprep.mubr.bf16.mxu0 0
        %1419 = vmatmul.mubr.bf16.gmra.mrb[0].mxu0 %v844
        %v1420 = vpop.f32.mrb[0].mxu0
        %v1421 = vadd.f32 %v949, %v1420
        %v1422 = vpop.f32.mrb[0].mxu0
        %v1423 = vpop.f32.mrb[0].mxu0
        %v1424 = vadd.f32 %v952, %v1423
        %v1425 = vpop.f32.mrb[0].mxu0
        %1426 = vmatprep.mubr.bf16.mxu0 0
        %1427 = vmatmul.mubr.bf16.gmra.mrb[0].mxu0 %v845
        %v1428 = vpop.f32.mrb[0].mxu0
        %v1429 = vadd.f32 %v955, %v1428
        %v1430 = vpop.f32.mrb[0].mxu0
        %v1431 = vpop.f32.mrb[0].mxu0
        %v1432 = vadd.f32 %v958, %v1431
        %v1433 = vpop.f32.mrb[0].mxu0
        %1434 = vmatprep.mubr.bf16.mxu0 0
        %1435 = vmatmul.mubr.bf16.gmra.mrb[0].mxu0 %v846
        %v1436 = vpop.f32.mrb[0].mxu0
        %v1437 = vadd.f32 %v961, %v1436
        %v1438 = vpop.f32.mrb[0].mxu0
        %v1439 = vpop.f32.mrb[0].mxu0
        %v1440 = vadd.f32 %v964, %v1439
        %v1441 = vpop.f32.mrb[0].mxu0
        %1442 = vmatprep.mubr.bf16.mxu0 0
        %1443 = vmatmul.mubr.bf16.gmra.mrb[0].mxu0 %v847
        %v1444 = vpop.f32.mrb[0].mxu0
        %v1445 = vadd.f32 %v967, %v1444
        %v1446 = vpop.f32.mrb[0].mxu0
        %v1447 = vpop.f32.mrb[0].mxu0
        %v1448 = vadd.f32 %v970, %v1447
        %v1449 = vpop.f32.mrb[0].mxu0
        %1450 = vmatprep.mubr.bf16.mxu0 0
        %1451 = vmatmul.mubr.bf16.gmra.mrb[0].mxu0 %v848
        %v1452 = vpop.f32.mrb[0].mxu0
        %v1453 = vadd.f32 %v973, %v1452
        %v1454 = vpop.f32.mrb[0].mxu0
        %v1455 = vpop.f32.mrb[0].mxu0
        %v1456 = vadd.f32 %v976, %v1455
        %v1457 = vpop.f32.mrb[0].mxu0
        %1458 = vdwg.mxu0
        %v1459 = vpack.c.bf16 %v1224, %v1220
        %v1460 = vpack.c.bf16 %v1234, %v1230
        %v1461 = vpack.c.bf16 %v1244, %v1240
        %v1462 = vpack.c.bf16 %v1254, %v1250
        %v1463 = vpack.c.bf16 %v1264, %v1260
        %v1464 = vpack.c.bf16 %v1274, %v1270
        %v1465 = vpack.c.bf16 %v1284, %v1280
        %v1466 = vpack.c.bf16 %v1294, %v1290
        %v1475 = vunpack.c.l.b16 %v1459
        %v1476 = vunpack.c.h.b16 %v1459
        %v1477 = vunpack.c.l.b16 %v1460
        %v1478 = vunpack.c.h.b16 %v1460
        %v1479 = vunpack.c.l.b16 %v1461
        %v1480 = vunpack.c.h.b16 %v1461
        %v1481 = vunpack.c.l.b16 %v1462
        %v1482 = vunpack.c.h.b16 %v1462
        %v1483 = vunpack.c.l.b16 %v1463
        %v1484 = vunpack.c.h.b16 %v1463
        %v1485 = vunpack.c.l.b16 %v1464
        %v1486 = vunpack.c.h.b16 %v1464
        %v1487 = vunpack.c.l.b16 %v1465
        %v1488 = vunpack.c.h.b16 %v1465
        %v1489 = vunpack.c.l.b16 %v1466
        %v1490 = vunpack.c.h.b16 %v1466
        %v1491 = vpack.c.b16 %v1475, %v1475
        %v1492 = vpack.c.b16 %v1476, %v1476
        %v1493 = vpack.c.b16 %v1477, %v1477
        %v1494 = vpack.c.b16 %v1478, %v1478
        %v1495 = vpack.c.b16 %v1479, %v1479
        %v1496 = vpack.c.b16 %v1480, %v1480
        %v1497 = vpack.c.b16 %v1481, %v1481
        %v1498 = vpack.c.b16 %v1482, %v1482
        %v1499 = vpack.c.b16 %v1483, %v1483
        %v1500 = vpack.c.b16 %v1484, %v1484
        %v1501 = vpack.c.b16 %v1485, %v1485
        %v1502 = vpack.c.b16 %v1486, %v1486
        %v1503 = vpack.c.b16 %v1487, %v1487
        %v1504 = vpack.c.b16 %v1488, %v1488
        %v1505 = vpack.c.b16 %v1489, %v1489
        %v1506 = vpack.c.b16 %v1490, %v1490
        %vm1523 = vcmask 257024
        %1524 = vst.msk [vmem:[%s354] sm:$0xf] %vm1523, %v1491
        %1525 = vst.msk [vmem:[%s354 + $0x4] sm:$0xf] %vm1523, %v1492
        %1526 = vst.msk [vmem:[%s354 + $0x8] sm:$0xf] %vm1523, %v1493
        %1527 = vst.msk [vmem:[%s354 + $0xc] sm:$0xf] %vm1523, %v1494
        %1528 = vst.msk [vmem:[%s354 + $0x10] sm:$0xf] %vm1523, %v1495
        %1529 = vst.msk [vmem:[%s354 + $0x14] sm:$0xf] %vm1523, %v1496
        %1530 = vst.msk [vmem:[%s354 + $0x18] sm:$0xf] %vm1523, %v1497
        %1531 = vst.msk [vmem:[%s354 + $0x1c] sm:$0xf] %vm1523, %v1498
        %1532 = vst.msk [vmem:[%s354 + $0x20] sm:$0xf] %vm1523, %v1499
        %1533 = vst.msk [vmem:[%s354 + $0x24] sm:$0xf] %vm1523, %v1500
        %1534 = vst.msk [vmem:[%s354 + $0x28] sm:$0xf] %vm1523, %v1501
        %1535 = vst.msk [vmem:[%s354 + $0x2c] sm:$0xf] %vm1523, %v1502
        %1536 = vst.msk [vmem:[%s354 + $0x30] sm:$0xf] %vm1523, %v1503
        %1537 = vst.msk [vmem:[%s354 + $0x34] sm:$0xf] %vm1523, %v1504
        %1538 = vst.msk [vmem:[%s354 + $0x38] sm:$0xf] %vm1523, %v1505
        %1539 = vst.msk [vmem:[%s354 + $0x3c] sm:$0xf] %vm1523, %v1506
        %v1540 = vpack.c.bf16 %v1144, %v1140
        %v1541 = vpack.c.bf16 %v1154, %v1150
        %v1542 = vpack.c.bf16 %v1164, %v1160
        %v1543 = vpack.c.bf16 %v1174, %v1170
        %v1544 = vpack.c.bf16 %v1184, %v1180
        %v1545 = vpack.c.bf16 %v1194, %v1190
        %v1546 = vpack.c.bf16 %v1204, %v1200
        %v1547 = vpack.c.bf16 %v1214, %v1210
        %v1556 = vunpack.c.l.b16 %v1540
        %v1557 = vunpack.c.h.b16 %v1540
        %v1558 = vunpack.c.l.b16 %v1541
        %v1559 = vunpack.c.h.b16 %v1541
        %v1560 = vunpack.c.l.b16 %v1542
        %v1561 = vunpack.c.h.b16 %v1542
        %v1562 = vunpack.c.l.b16 %v1543
        %v1563 = vunpack.c.h.b16 %v1543
        %v1564 = vunpack.c.l.b16 %v1544
        %v1565 = vunpack.c.h.b16 %v1544
        %v1566 = vunpack.c.l.b16 %v1545
        %v1567 = vunpack.c.h.b16 %v1545
        %v1568 = vunpack.c.l.b16 %v1546
        %v1569 = vunpack.c.h.b16 %v1546
        %v1570 = vunpack.c.l.b16 %v1547
        %v1571 = vunpack.c.h.b16 %v1547
        %v1572 = vpack.c.b16 %v1556, %v1556
        %v1573 = vpack.c.b16 %v1557, %v1557
        %v1574 = vpack.c.b16 %v1558, %v1558
        %v1575 = vpack.c.b16 %v1559, %v1559
        %v1576 = vpack.c.b16 %v1560, %v1560
        %v1577 = vpack.c.b16 %v1561, %v1561
        %v1578 = vpack.c.b16 %v1562, %v1562
        %v1579 = vpack.c.b16 %v1563, %v1563
        %v1580 = vpack.c.b16 %v1564, %v1564
        %v1581 = vpack.c.b16 %v1565, %v1565
        %v1582 = vpack.c.b16 %v1566, %v1566
        %v1583 = vpack.c.b16 %v1567, %v1567
        %v1584 = vpack.c.b16 %v1568, %v1568
        %v1585 = vpack.c.b16 %v1569, %v1569
        %v1586 = vpack.c.b16 %v1570, %v1570
        %v1587 = vpack.c.b16 %v1571, %v1571
        %1588 = vrot.lane.b32.xlu0 %v1572, 96
        %v1589 = vpop.permute.xlu0 %1588
        %1590 = vrot.lane.b32.xlu0 %v1573, 96
        %v1591 = vpop.permute.xlu0 %1590
        %1592 = vrot.lane.b32.xlu0 %v1574, 96
        %v1593 = vpop.permute.xlu0 %1592
        %1594 = vrot.lane.b32.xlu0 %v1575, 96
        %v1595 = vpop.permute.xlu0 %1594
        %1596 = vrot.lane.b32.xlu0 %v1576, 96
        %v1597 = vpop.permute.xlu0 %1596
        %1598 = vrot.lane.b32.xlu0 %v1577, 96
        %v1599 = vpop.permute.xlu0 %1598
        %1600 = vrot.lane.b32.xlu0 %v1578, 96
        %v1601 = vpop.permute.xlu0 %1600
        %1602 = vrot.lane.b32.xlu0 %v1579, 96
        %v1603 = vpop.permute.xlu0 %1602
        %1604 = vrot.lane.b32.xlu0 %v1580, 96
        %v1605 = vpop.permute.xlu0 %1604
        %1606 = vrot.lane.b32.xlu0 %v1581, 96
        %v1607 = vpop.permute.xlu0 %1606
        %1608 = vrot.lane.b32.xlu0 %v1582, 96
        %v1609 = vpop.permute.xlu0 %1608
        %1610 = vrot.lane.b32.xlu0 %v1583, 96
        %v1611 = vpop.permute.xlu0 %1610
        %1612 = vrot.lane.b32.xlu0 %v1584, 96
        %v1613 = vpop.permute.xlu0 %1612
        %1614 = vrot.lane.b32.xlu0 %v1585, 96
        %v1615 = vpop.permute.xlu0 %1614
        %1616 = vrot.lane.b32.xlu0 %v1586, 96
        %v1617 = vpop.permute.xlu0 %1616
        %1618 = vrot.lane.b32.xlu0 %v1587, 96
        %v1619 = vpop.permute.xlu0 %1618
        %1620 = vrot.lane.b32.xlu0 %v1491, 96
        %v1621 = vpop.permute.xlu0 %1620
        %1622 = vrot.lane.b32.xlu0 %v1492, 96
        %v1623 = vpop.permute.xlu0 %1622
        %1624 = vrot.lane.b32.xlu0 %v1493, 96
        %v1625 = vpop.permute.xlu0 %1624
        %1626 = vrot.lane.b32.xlu0 %v1494, 96
        %v1627 = vpop.permute.xlu0 %1626
        %1628 = vrot.lane.b32.xlu0 %v1495, 96
        %v1629 = vpop.permute.xlu0 %1628
        %1630 = vrot.lane.b32.xlu0 %v1496, 96
        %v1631 = vpop.permute.xlu0 %1630
        %1632 = vrot.lane.b32.xlu0 %v1497, 96
        %v1633 = vpop.permute.xlu0 %1632
        %1634 = vrot.lane.b32.xlu0 %v1498, 96
        %v1635 = vpop.permute.xlu0 %1634
        %1636 = vrot.lane.b32.xlu0 %v1499, 96
        %v1637 = vpop.permute.xlu0 %1636
        %1638 = vrot.lane.b32.xlu0 %v1500, 96
        %v1639 = vpop.permute.xlu0 %1638
        %1640 = vrot.lane.b32.xlu0 %v1501, 96
        %v1641 = vpop.permute.xlu0 %1640
        %1642 = vrot.lane.b32.xlu0 %v1502, 96
        %v1643 = vpop.permute.xlu0 %1642
        %1644 = vrot.lane.b32.xlu0 %v1503, 96
        %v1645 = vpop.permute.xlu0 %1644
        %1646 = vrot.lane.b32.xlu0 %v1504, 96
        %v1647 = vpop.permute.xlu0 %1646
        %1648 = vrot.lane.b32.xlu0 %v1505, 96
        %v1649 = vpop.permute.xlu0 %1648
        %1650 = vrot.lane.b32.xlu0 %v1506, 96
        %v1651 = vpop.permute.xlu0 %1650
        %1684 = vst.msk [vmem:[%s361] sm:$0xf] %vm1523, %v1589
        %1685 = vst.msk [vmem:[%s361 + $0x4] sm:$0xf] %vm1523, %v1591
        %1686 = vst.msk [vmem:[%s361 + $0x8] sm:$0xf] %vm1523, %v1593
        %1687 = vst.msk [vmem:[%s361 + $0xc] sm:$0xf] %vm1523, %v1595
        %1688 = vst.msk [vmem:[%s361 + $0x10] sm:$0xf] %vm1523, %v1597
        %1689 = vst.msk [vmem:[%s361 + $0x14] sm:$0xf] %vm1523, %v1599
        %1690 = vst.msk [vmem:[%s361 + $0x18] sm:$0xf] %vm1523, %v1601
        %1691 = vst.msk [vmem:[%s361 + $0x1c] sm:$0xf] %vm1523, %v1603
        %1692 = vst.msk [vmem:[%s361 + $0x20] sm:$0xf] %vm1523, %v1605
        %1693 = vst.msk [vmem:[%s361 + $0x24] sm:$0xf] %vm1523, %v1607
        %1694 = vst.msk [vmem:[%s361 + $0x28] sm:$0xf] %vm1523, %v1609
        %1695 = vst.msk [vmem:[%s361 + $0x2c] sm:$0xf] %vm1523, %v1611
        %1696 = vst.msk [vmem:[%s361 + $0x30] sm:$0xf] %vm1523, %v1613
        %1697 = vst.msk [vmem:[%s361 + $0x34] sm:$0xf] %vm1523, %v1615
        %1698 = vst.msk [vmem:[%s361 + $0x38] sm:$0xf] %vm1523, %v1617
        %1699 = vst.msk [vmem:[%s361 + $0x3c] sm:$0xf] %vm1523, %v1619
        %1700 = vst.msk [vmem:[%s361 + $0x40] sm:$0xf] %vm1523, %v1621
        %1701 = vst.msk [vmem:[%s361 + $0x44] sm:$0xf] %vm1523, %v1623
        %1702 = vst.msk [vmem:[%s361 + $0x48] sm:$0xf] %vm1523, %v1625
        %1703 = vst.msk [vmem:[%s361 + $0x4c] sm:$0xf] %vm1523, %v1627
        %1704 = vst.msk [vmem:[%s361 + $0x50] sm:$0xf] %vm1523, %v1629
        %1705 = vst.msk [vmem:[%s361 + $0x54] sm:$0xf] %vm1523, %v1631
        %1706 = vst.msk [vmem:[%s361 + $0x58] sm:$0xf] %vm1523, %v1633
        %1707 = vst.msk [vmem:[%s361 + $0x5c] sm:$0xf] %vm1523, %v1635
        %1708 = vst.msk [vmem:[%s361 + $0x60] sm:$0xf] %vm1523, %v1637
        %1709 = vst.msk [vmem:[%s361 + $0x64] sm:$0xf] %vm1523, %v1639
        %1710 = vst.msk [vmem:[%s361 + $0x68] sm:$0xf] %vm1523, %v1641
        %1711 = vst.msk [vmem:[%s361 + $0x6c] sm:$0xf] %vm1523, %v1643
        %1712 = vst.msk [vmem:[%s361 + $0x70] sm:$0xf] %vm1523, %v1645
        %1713 = vst.msk [vmem:[%s361 + $0x74] sm:$0xf] %vm1523, %v1647
        %1714 = vst.msk [vmem:[%s361 + $0x78] sm:$0xf] %vm1523, %v1649
        %1715 = vst.msk [vmem:[%s361 + $0x7c] sm:$0xf] %vm1523, %v1651
        %1716 = vrot.lane.b32.xlu0 %v1572, 64
        %v1717 = vpop.permute.xlu0 %1716
        %1718 = vrot.lane.b32.xlu0 %v1573, 64
        %v1719 = vpop.permute.xlu0 %1718
        %1720 = vrot.lane.b32.xlu0 %v1574, 64
        %v1721 = vpop.permute.xlu0 %1720
        %1722 = vrot.lane.b32.xlu0 %v1575, 64
        %v1723 = vpop.permute.xlu0 %1722
        %1724 = vrot.lane.b32.xlu0 %v1576, 64
        %v1725 = vpop.permute.xlu0 %1724
        %1726 = vrot.lane.b32.xlu0 %v1577, 64
        %v1727 = vpop.permute.xlu0 %1726
        %1728 = vrot.lane.b32.xlu0 %v1578, 64
        %v1729 = vpop.permute.xlu0 %1728
        %1730 = vrot.lane.b32.xlu0 %v1579, 64
        %v1731 = vpop.permute.xlu0 %1730
        %1732 = vrot.lane.b32.xlu0 %v1580, 64
        %v1733 = vpop.permute.xlu0 %1732
        %1734 = vrot.lane.b32.xlu0 %v1581, 64
        %v1735 = vpop.permute.xlu0 %1734
        %1736 = vrot.lane.b32.xlu0 %v1582, 64
        %v1737 = vpop.permute.xlu0 %1736
        %1738 = vrot.lane.b32.xlu0 %v1583, 64
        %v1739 = vpop.permute.xlu0 %1738
        %1740 = vrot.lane.b32.xlu0 %v1584, 64
        %v1741 = vpop.permute.xlu0 %1740
        %1742 = vrot.lane.b32.xlu0 %v1585, 64
        %v1743 = vpop.permute.xlu0 %1742
        %1744 = vrot.lane.b32.xlu0 %v1586, 64
        %v1745 = vpop.permute.xlu0 %1744
        %1746 = vrot.lane.b32.xlu0 %v1587, 64
        %v1747 = vpop.permute.xlu0 %1746
        %1748 = vrot.lane.b32.xlu0 %v1491, 64
        %v1749 = vpop.permute.xlu0 %1748
        %1750 = vrot.lane.b32.xlu0 %v1492, 64
        %v1751 = vpop.permute.xlu0 %1750
        %1752 = vrot.lane.b32.xlu0 %v1493, 64
        %v1753 = vpop.permute.xlu0 %1752
        %1754 = vrot.lane.b32.xlu0 %v1494, 64
        %v1755 = vpop.permute.xlu0 %1754
        %1756 = vrot.lane.b32.xlu0 %v1495, 64
        %v1757 = vpop.permute.xlu0 %1756
        %1758 = vrot.lane.b32.xlu0 %v1496, 64
        %v1759 = vpop.permute.xlu0 %1758
        %1760 = vrot.lane.b32.xlu0 %v1497, 64
        %v1761 = vpop.permute.xlu0 %1760
        %1762 = vrot.lane.b32.xlu0 %v1498, 64
        %v1763 = vpop.permute.xlu0 %1762
        %1764 = vrot.lane.b32.xlu0 %v1499, 64
        %v1765 = vpop.permute.xlu0 %1764
        %1766 = vrot.lane.b32.xlu0 %v1500, 64
        %v1767 = vpop.permute.xlu0 %1766
        %1768 = vrot.lane.b32.xlu0 %v1501, 64
        %v1769 = vpop.permute.xlu0 %1768
        %1770 = vrot.lane.b32.xlu0 %v1502, 64
        %v1771 = vpop.permute.xlu0 %1770
        %1772 = vrot.lane.b32.xlu0 %v1503, 64
        %v1773 = vpop.permute.xlu0 %1772
        %1774 = vrot.lane.b32.xlu0 %v1504, 64
        %v1775 = vpop.permute.xlu0 %1774
        %1776 = vrot.lane.b32.xlu0 %v1505, 64
        %v1777 = vpop.permute.xlu0 %1776
        %1778 = vrot.lane.b32.xlu0 %v1506, 64
        %v1779 = vpop.permute.xlu0 %1778
        %1812 = vst.msk [vmem:[%s368] sm:$0xf] %vm1523, %v1717
        %1813 = vst.msk [vmem:[%s368 + $0x4] sm:$0xf] %vm1523, %v1719
        %1814 = vst.msk [vmem:[%s368 + $0x8] sm:$0xf] %vm1523, %v1721
        %1815 = vst.msk [vmem:[%s368 + $0xc] sm:$0xf] %vm1523, %v1723
        %1816 = vst.msk [vmem:[%s368 + $0x10] sm:$0xf] %vm1523, %v1725
        %1817 = vst.msk [vmem:[%s368 + $0x14] sm:$0xf] %vm1523, %v1727
        %1818 = vst.msk [vmem:[%s368 + $0x18] sm:$0xf] %vm1523, %v1729
        %1819 = vst.msk [vmem:[%s368 + $0x1c] sm:$0xf] %vm1523, %v1731
        %1820 = vst.msk [vmem:[%s368 + $0x20] sm:$0xf] %vm1523, %v1733
        %1821 = vst.msk [vmem:[%s368 + $0x24] sm:$0xf] %vm1523, %v1735
        %1822 = vst.msk [vmem:[%s368 + $0x28] sm:$0xf] %vm1523, %v1737
        %1823 = vst.msk [vmem:[%s368 + $0x2c] sm:$0xf] %vm1523, %v1739
        %1824 = vst.msk [vmem:[%s368 + $0x30] sm:$0xf] %vm1523, %v1741
        %1825 = vst.msk [vmem:[%s368 + $0x34] sm:$0xf] %vm1523, %v1743
        %1826 = vst.msk [vmem:[%s368 + $0x38] sm:$0xf] %vm1523, %v1745
        %1827 = vst.msk [vmem:[%s368 + $0x3c] sm:$0xf] %vm1523, %v1747
        %1828 = vst.msk [vmem:[%s368 + $0x40] sm:$0xf] %vm1523, %v1749
        %1829 = vst.msk [vmem:[%s368 + $0x44] sm:$0xf] %vm1523, %v1751
        %1830 = vst.msk [vmem:[%s368 + $0x48] sm:$0xf] %vm1523, %v1753
        %1831 = vst.msk [vmem:[%s368 + $0x4c] sm:$0xf] %vm1523, %v1755
        %1832 = vst.msk [vmem:[%s368 + $0x50] sm:$0xf] %vm1523, %v1757
        %1833 = vst.msk [vmem:[%s368 + $0x54] sm:$0xf] %vm1523, %v1759
        %1834 = vst.msk [vmem:[%s368 + $0x58] sm:$0xf] %vm1523, %v1761
        %1835 = vst.msk [vmem:[%s368 + $0x5c] sm:$0xf] %vm1523, %v1763
        %1836 = vst.msk [vmem:[%s368 + $0x60] sm:$0xf] %vm1523, %v1765
        %1837 = vst.msk [vmem:[%s368 + $0x64] sm:$0xf] %vm1523, %v1767
        %1838 = vst.msk [vmem:[%s368 + $0x68] sm:$0xf] %vm1523, %v1769
        %1839 = vst.msk [vmem:[%s368 + $0x6c] sm:$0xf] %vm1523, %v1771
        %1840 = vst.msk [vmem:[%s368 + $0x70] sm:$0xf] %vm1523, %v1773
        %1841 = vst.msk [vmem:[%s368 + $0x74] sm:$0xf] %vm1523, %v1775
        %1842 = vst.msk [vmem:[%s368 + $0x78] sm:$0xf] %vm1523, %v1777
        %1843 = vst.msk [vmem:[%s368 + $0x7c] sm:$0xf] %vm1523, %v1779
        %vm1844 = vcmask 519424
        %1845 = vst.msk [vmem:[%s354] sm:$0xf] %vm1844, %v1749
        %1846 = vst.msk [vmem:[%s354 + $0x4] sm:$0xf] %vm1844, %v1751
        %1847 = vst.msk [vmem:[%s354 + $0x8] sm:$0xf] %vm1844, %v1753
        %1848 = vst.msk [vmem:[%s354 + $0xc] sm:$0xf] %vm1844, %v1755
        %1849 = vst.msk [vmem:[%s354 + $0x10] sm:$0xf] %vm1844, %v1757
        %1850 = vst.msk [vmem:[%s354 + $0x14] sm:$0xf] %vm1844, %v1759
        %1851 = vst.msk [vmem:[%s354 + $0x18] sm:$0xf] %vm1844, %v1761
        %1852 = vst.msk [vmem:[%s354 + $0x1c] sm:$0xf] %vm1844, %v1763
        %1853 = vst.msk [vmem:[%s354 + $0x20] sm:$0xf] %vm1844, %v1765
        %1854 = vst.msk [vmem:[%s354 + $0x24] sm:$0xf] %vm1844, %v1767
        %1855 = vst.msk [vmem:[%s354 + $0x28] sm:$0xf] %vm1844, %v1769
        %1856 = vst.msk [vmem:[%s354 + $0x2c] sm:$0xf] %vm1844, %v1771
        %1857 = vst.msk [vmem:[%s354 + $0x30] sm:$0xf] %vm1844, %v1773
        %1858 = vst.msk [vmem:[%s354 + $0x34] sm:$0xf] %vm1844, %v1775
        %1859 = vst.msk [vmem:[%s354 + $0x38] sm:$0xf] %vm1844, %v1777
        %1860 = vst.msk [vmem:[%s354 + $0x3c] sm:$0xf] %vm1844, %v1779
        %v1861 = vpack.c.bf16 %v1146, %v1142
        %v1862 = vpack.c.bf16 %v1156, %v1152
        %v1863 = vpack.c.bf16 %v1166, %v1162
        %v1864 = vpack.c.bf16 %v1176, %v1172
        %v1865 = vpack.c.bf16 %v1186, %v1182
        %v1866 = vpack.c.bf16 %v1196, %v1192
        %v1867 = vpack.c.bf16 %v1206, %v1202
        %v1868 = vpack.c.bf16 %v1216, %v1212
        %v1869 = vpack.c.bf16 %v1226, %v1222
        %v1870 = vpack.c.bf16 %v1236, %v1232
        %v1871 = vpack.c.bf16 %v1246, %v1242
        %v1872 = vpack.c.bf16 %v1256, %v1252
        %v1873 = vpack.c.bf16 %v1266, %v1262
        %v1874 = vpack.c.bf16 %v1276, %v1272
        %v1875 = vpack.c.bf16 %v1286, %v1282
        %v1876 = vpack.c.bf16 %v1296, %v1292
        %v1893 = vunpack.c.l.b16 %v1861
        %v1894 = vunpack.c.h.b16 %v1861
        %v1895 = vunpack.c.l.b16 %v1862
        %v1896 = vunpack.c.h.b16 %v1862
        %v1897 = vunpack.c.l.b16 %v1863
        %v1898 = vunpack.c.h.b16 %v1863
        %v1899 = vunpack.c.l.b16 %v1864
        %v1900 = vunpack.c.h.b16 %v1864
        %v1901 = vunpack.c.l.b16 %v1865
        %v1902 = vunpack.c.h.b16 %v1865
        %v1903 = vunpack.c.l.b16 %v1866
        %v1904 = vunpack.c.h.b16 %v1866
        %v1905 = vunpack.c.l.b16 %v1867
        %v1906 = vunpack.c.h.b16 %v1867
        %v1907 = vunpack.c.l.b16 %v1868
        %v1908 = vunpack.c.h.b16 %v1868
        %v1909 = vunpack.c.l.b16 %v1869
        %v1910 = vunpack.c.h.b16 %v1869
        %v1911 = vunpack.c.l.b16 %v1870
        %v1912 = vunpack.c.h.b16 %v1870
        %v1913 = vunpack.c.l.b16 %v1871
        %v1914 = vunpack.c.h.b16 %v1871
        %v1915 = vunpack.c.l.b16 %v1872
        %v1916 = vunpack.c.h.b16 %v1872
        %v1917 = vunpack.c.l.b16 %v1873
        %v1918 = vunpack.c.h.b16 %v1873
        %v1919 = vunpack.c.l.b16 %v1874
        %v1920 = vunpack.c.h.b16 %v1874
        %v1921 = vunpack.c.l.b16 %v1875
        %v1922 = vunpack.c.h.b16 %v1875
        %v1923 = vunpack.c.l.b16 %v1876
        %v1924 = vunpack.c.h.b16 %v1876
        %v1925 = vpack.c.b16 %v1893, %v1893
        %v1926 = vpack.c.b16 %v1894, %v1894
        %v1927 = vpack.c.b16 %v1895, %v1895
        %v1928 = vpack.c.b16 %v1896, %v1896
        %v1929 = vpack.c.b16 %v1897, %v1897
        %v1930 = vpack.c.b16 %v1898, %v1898
        %v1931 = vpack.c.b16 %v1899, %v1899
        %v1932 = vpack.c.b16 %v1900, %v1900
        %v1933 = vpack.c.b16 %v1901, %v1901
        %v1934 = vpack.c.b16 %v1902, %v1902
        %v1935 = vpack.c.b16 %v1903, %v1903
        %v1936 = vpack.c.b16 %v1904, %v1904
        %v1937 = vpack.c.b16 %v1905, %v1905
        %v1938 = vpack.c.b16 %v1906, %v1906
        %v1939 = vpack.c.b16 %v1907, %v1907
        %v1940 = vpack.c.b16 %v1908, %v1908
        %v1941 = vpack.c.b16 %v1909, %v1909
        %v1942 = vpack.c.b16 %v1910, %v1910
        %v1943 = vpack.c.b16 %v1911, %v1911
        %v1944 = vpack.c.b16 %v1912, %v1912
        %v1945 = vpack.c.b16 %v1913, %v1913
        %v1946 = vpack.c.b16 %v1914, %v1914
        %v1947 = vpack.c.b16 %v1915, %v1915
        %v1948 = vpack.c.b16 %v1916, %v1916
        %v1949 = vpack.c.b16 %v1917, %v1917
        %v1950 = vpack.c.b16 %v1918, %v1918
        %v1951 = vpack.c.b16 %v1919, %v1919
        %v1952 = vpack.c.b16 %v1920, %v1920
        %v1953 = vpack.c.b16 %v1921, %v1921
        %v1954 = vpack.c.b16 %v1922, %v1922
        %v1955 = vpack.c.b16 %v1923, %v1923
        %v1956 = vpack.c.b16 %v1924, %v1924
        %1957 = vrot.lane.b32.xlu0 %v1925, 32
        %v1958 = vpop.permute.xlu0 %1957
        %1959 = vrot.lane.b32.xlu0 %v1926, 32
        %v1960 = vpop.permute.xlu0 %1959
        %1961 = vrot.lane.b32.xlu0 %v1927, 32
        %v1962 = vpop.permute.xlu0 %1961
        %1963 = vrot.lane.b32.xlu0 %v1928, 32
        %v1964 = vpop.permute.xlu0 %1963
        %1965 = vrot.lane.b32.xlu0 %v1929, 32
        %v1966 = vpop.permute.xlu0 %1965
        %1967 = vrot.lane.b32.xlu0 %v1930, 32
        %v1968 = vpop.permute.xlu0 %1967
        %1969 = vrot.lane.b32.xlu0 %v1931, 32
        %v1970 = vpop.permute.xlu0 %1969
        %1971 = vrot.lane.b32.xlu0 %v1932, 32
        %v1972 = vpop.permute.xlu0 %1971
        %1973 = vrot.lane.b32.xlu0 %v1933, 32
        %v1974 = vpop.permute.xlu0 %1973
        %1975 = vrot.lane.b32.xlu0 %v1934, 32
        %v1976 = vpop.permute.xlu0 %1975
        %1977 = vrot.lane.b32.xlu0 %v1935, 32
        %v1978 = vpop.permute.xlu0 %1977
        %1979 = vrot.lane.b32.xlu0 %v1936, 32
        %v1980 = vpop.permute.xlu0 %1979
        %1981 = vrot.lane.b32.xlu0 %v1937, 32
        %v1982 = vpop.permute.xlu0 %1981
        %1983 = vrot.lane.b32.xlu0 %v1938, 32
        %v1984 = vpop.permute.xlu0 %1983
        %1985 = vrot.lane.b32.xlu0 %v1939, 32
        %v1986 = vpop.permute.xlu0 %1985
        %1987 = vrot.lane.b32.xlu0 %v1940, 32
        %v1988 = vpop.permute.xlu0 %1987
        %1989 = vrot.lane.b32.xlu0 %v1941, 32
        %v1990 = vpop.permute.xlu0 %1989
        %1991 = vrot.lane.b32.xlu0 %v1942, 32
        %v1992 = vpop.permute.xlu0 %1991
        %1993 = vrot.lane.b32.xlu0 %v1943, 32
        %v1994 = vpop.permute.xlu0 %1993
        %1995 = vrot.lane.b32.xlu0 %v1944, 32
        %v1996 = vpop.permute.xlu0 %1995
        %1997 = vrot.lane.b32.xlu0 %v1945, 32
        %v1998 = vpop.permute.xlu0 %1997
        %1999 = vrot.lane.b32.xlu0 %v1946, 32
        %v2000 = vpop.permute.xlu0 %1999
        %2001 = vrot.lane.b32.xlu0 %v1947, 32
        %v2002 = vpop.permute.xlu0 %2001
        %2003 = vrot.lane.b32.xlu0 %v1948, 32
        %v2004 = vpop.permute.xlu0 %2003
        %2005 = vrot.lane.b32.xlu0 %v1949, 32
        %v2006 = vpop.permute.xlu0 %2005
        %2007 = vrot.lane.b32.xlu0 %v1950, 32
        %v2008 = vpop.permute.xlu0 %2007
        %2009 = vrot.lane.b32.xlu0 %v1951, 32
        %v2010 = vpop.permute.xlu0 %2009
        %2011 = vrot.lane.b32.xlu0 %v1952, 32
        %v2012 = vpop.permute.xlu0 %2011
        %2013 = vrot.lane.b32.xlu0 %v1953, 32
        %v2014 = vpop.permute.xlu0 %2013
        %2015 = vrot.lane.b32.xlu0 %v1954, 32
        %v2016 = vpop.permute.xlu0 %2015
        %2017 = vrot.lane.b32.xlu0 %v1955, 32
        %v2018 = vpop.permute.xlu0 %2017
        %2019 = vrot.lane.b32.xlu0 %v1956, 32
        %v2020 = vpop.permute.xlu0 %2019
        %2053 = vst.msk [vmem:[%s361] sm:$0xf] %vm1844, %v1958
        %2054 = vst.msk [vmem:[%s361 + $0x4] sm:$0xf] %vm1844, %v1960
        %2055 = vst.msk [vmem:[%s361 + $0x8] sm:$0xf] %vm1844, %v1962
        %2056 = vst.msk [vmem:[%s361 + $0xc] sm:$0xf] %vm1844, %v1964
        %2057 = vst.msk [vmem:[%s361 + $0x10] sm:$0xf] %vm1844, %v1966
        %2058 = vst.msk [vmem:[%s361 + $0x14] sm:$0xf] %vm1844, %v1968
        %2059 = vst.msk [vmem:[%s361 + $0x18] sm:$0xf] %vm1844, %v1970
        %2060 = vst.msk [vmem:[%s361 + $0x1c] sm:$0xf] %vm1844, %v1972
        %2061 = vst.msk [vmem:[%s361 + $0x20] sm:$0xf] %vm1844, %v1974
        %2062 = vst.msk [vmem:[%s361 + $0x24] sm:$0xf] %vm1844, %v1976
        %2063 = vst.msk [vmem:[%s361 + $0x28] sm:$0xf] %vm1844, %v1978
        %2064 = vst.msk [vmem:[%s361 + $0x2c] sm:$0xf] %vm1844, %v1980
        %2065 = vst.msk [vmem:[%s361 + $0x30] sm:$0xf] %vm1844, %v1982
        %2066 = vst.msk [vmem:[%s361 + $0x34] sm:$0xf] %vm1844, %v1984
        %2067 = vst.msk [vmem:[%s361 + $0x38] sm:$0xf] %vm1844, %v1986
        %2068 = vst.msk [vmem:[%s361 + $0x3c] sm:$0xf] %vm1844, %v1988
        %2069 = vst.msk [vmem:[%s361 + $0x40] sm:$0xf] %vm1844, %v1990
        %2070 = vst.msk [vmem:[%s361 + $0x44] sm:$0xf] %vm1844, %v1992
        %2071 = vst.msk [vmem:[%s361 + $0x48] sm:$0xf] %vm1844, %v1994
        %2072 = vst.msk [vmem:[%s361 + $0x4c] sm:$0xf] %vm1844, %v1996
        %2073 = vst.msk [vmem:[%s361 + $0x50] sm:$0xf] %vm1844, %v1998
        %2074 = vst.msk [vmem:[%s361 + $0x54] sm:$0xf] %vm1844, %v2000
        %2075 = vst.msk [vmem:[%s361 + $0x58] sm:$0xf] %vm1844, %v2002
        %2076 = vst.msk [vmem:[%s361 + $0x5c] sm:$0xf] %vm1844, %v2004
        %2077 = vst.msk [vmem:[%s361 + $0x60] sm:$0xf] %vm1844, %v2006
        %2078 = vst.msk [vmem:[%s361 + $0x64] sm:$0xf] %vm1844, %v2008
        %2079 = vst.msk [vmem:[%s361 + $0x68] sm:$0xf] %vm1844, %v2010
        %2080 = vst.msk [vmem:[%s361 + $0x6c] sm:$0xf] %vm1844, %v2012
        %2081 = vst.msk [vmem:[%s361 + $0x70] sm:$0xf] %vm1844, %v2014
        %2082 = vst.msk [vmem:[%s361 + $0x74] sm:$0xf] %vm1844, %v2016
        %2083 = vst.msk [vmem:[%s361 + $0x78] sm:$0xf] %vm1844, %v2018
        %2084 = vst.msk [vmem:[%s361 + $0x7c] sm:$0xf] %vm1844, %v2020
        %2117 = vst.msk [vmem:[%s368] sm:$0xf] %vm1844, %v1925
        %2118 = vst.msk [vmem:[%s368 + $0x4] sm:$0xf] %vm1844, %v1926
        %2119 = vst.msk [vmem:[%s368 + $0x8] sm:$0xf] %vm1844, %v1927
        %2120 = vst.msk [vmem:[%s368 + $0xc] sm:$0xf] %vm1844, %v1928
        %2121 = vst.msk [vmem:[%s368 + $0x10] sm:$0xf] %vm1844, %v1929
        %2122 = vst.msk [vmem:[%s368 + $0x14] sm:$0xf] %vm1844, %v1930
        %2123 = vst.msk [vmem:[%s368 + $0x18] sm:$0xf] %vm1844, %v1931
        %2124 = vst.msk [vmem:[%s368 + $0x1c] sm:$0xf] %vm1844, %v1932
        %2125 = vst.msk [vmem:[%s368 + $0x20] sm:$0xf] %vm1844, %v1933
        %2126 = vst.msk [vmem:[%s368 + $0x24] sm:$0xf] %vm1844, %v1934
        %2127 = vst.msk [vmem:[%s368 + $0x28] sm:$0xf] %vm1844, %v1935
        %2128 = vst.msk [vmem:[%s368 + $0x2c] sm:$0xf] %vm1844, %v1936
        %2129 = vst.msk [vmem:[%s368 + $0x30] sm:$0xf] %vm1844, %v1937
        %2130 = vst.msk [vmem:[%s368 + $0x34] sm:$0xf] %vm1844, %v1938
        %2131 = vst.msk [vmem:[%s368 + $0x38] sm:$0xf] %vm1844, %v1939
        %2132 = vst.msk [vmem:[%s368 + $0x3c] sm:$0xf] %vm1844, %v1940
        %2133 = vst.msk [vmem:[%s368 + $0x40] sm:$0xf] %vm1844, %v1941
        %2134 = vst.msk [vmem:[%s368 + $0x44] sm:$0xf] %vm1844, %v1942
        %2135 = vst.msk [vmem:[%s368 + $0x48] sm:$0xf] %vm1844, %v1943
        %2136 = vst.msk [vmem:[%s368 + $0x4c] sm:$0xf] %vm1844, %v1944
        %2137 = vst.msk [vmem:[%s368 + $0x50] sm:$0xf] %vm1844, %v1945
        %2138 = vst.msk [vmem:[%s368 + $0x54] sm:$0xf] %vm1844, %v1946
        %2139 = vst.msk [vmem:[%s368 + $0x58] sm:$0xf] %vm1844, %v1947
        %2140 = vst.msk [vmem:[%s368 + $0x5c] sm:$0xf] %vm1844, %v1948
        %2141 = vst.msk [vmem:[%s368 + $0x60] sm:$0xf] %vm1844, %v1949
        %2142 = vst.msk [vmem:[%s368 + $0x64] sm:$0xf] %vm1844, %v1950
        %2143 = vst.msk [vmem:[%s368 + $0x68] sm:$0xf] %vm1844, %v1951
        %2144 = vst.msk [vmem:[%s368 + $0x6c] sm:$0xf] %vm1844, %v1952
        %2145 = vst.msk [vmem:[%s368 + $0x70] sm:$0xf] %vm1844, %v1953
        %2146 = vst.msk [vmem:[%s368 + $0x74] sm:$0xf] %vm1844, %v1954
        %2147 = vst.msk [vmem:[%s368 + $0x78] sm:$0xf] %vm1844, %v1955
        %2148 = vst.msk [vmem:[%s368 + $0x7c] sm:$0xf] %vm1844, %v1956
        %vm2149 = vcmask 781824
        %2150 = vst.msk [vmem:[%s354] sm:$0xf] %vm2149, %v1941
        %2151 = vst.msk [vmem:[%s354 + $0x4] sm:$0xf] %vm2149, %v1942
        %2152 = vst.msk [vmem:[%s354 + $0x8] sm:$0xf] %vm2149, %v1943
        %2153 = vst.msk [vmem:[%s354 + $0xc] sm:$0xf] %vm2149, %v1944
        %2154 = vst.msk [vmem:[%s354 + $0x10] sm:$0xf] %vm2149, %v1945
        %2155 = vst.msk [vmem:[%s354 + $0x14] sm:$0xf] %vm2149, %v1946
        %2156 = vst.msk [vmem:[%s354 + $0x18] sm:$0xf] %vm2149, %v1947
        %2157 = vst.msk [vmem:[%s354 + $0x1c] sm:$0xf] %vm2149, %v1948
        %2158 = vst.msk [vmem:[%s354 + $0x20] sm:$0xf] %vm2149, %v1949
        %2159 = vst.msk [vmem:[%s354 + $0x24] sm:$0xf] %vm2149, %v1950
        %2160 = vst.msk [vmem:[%s354 + $0x28] sm:$0xf] %vm2149, %v1951
        %2161 = vst.msk [vmem:[%s354 + $0x2c] sm:$0xf] %vm2149, %v1952
        %2162 = vst.msk [vmem:[%s354 + $0x30] sm:$0xf] %vm2149, %v1953
        %2163 = vst.msk [vmem:[%s354 + $0x34] sm:$0xf] %vm2149, %v1954
        %2164 = vst.msk [vmem:[%s354 + $0x38] sm:$0xf] %vm2149, %v1955
        %2165 = vst.msk [vmem:[%s354 + $0x3c] sm:$0xf] %vm2149, %v1956
        %2166 = vrot.lane.b32.xlu0 %v1925, 96
        %v2167 = vpop.permute.xlu0 %2166
        %2168 = vrot.lane.b32.xlu0 %v1926, 96
        %v2169 = vpop.permute.xlu0 %2168
        %2170 = vrot.lane.b32.xlu0 %v1927, 96
        %v2171 = vpop.permute.xlu0 %2170
        %2172 = vrot.lane.b32.xlu0 %v1928, 96
        %v2173 = vpop.permute.xlu0 %2172
        %2174 = vrot.lane.b32.xlu0 %v1929, 96
        %v2175 = vpop.permute.xlu0 %2174
        %2176 = vrot.lane.b32.xlu0 %v1930, 96
        %v2177 = vpop.permute.xlu0 %2176
        %2178 = vrot.lane.b32.xlu0 %v1931, 96
        %v2179 = vpop.permute.xlu0 %2178
        %2180 = vrot.lane.b32.xlu0 %v1932, 96
        %v2181 = vpop.permute.xlu0 %2180
        %2182 = vrot.lane.b32.xlu0 %v1933, 96
        %v2183 = vpop.permute.xlu0 %2182
        %2184 = vrot.lane.b32.xlu0 %v1934, 96
        %v2185 = vpop.permute.xlu0 %2184
        %2186 = vrot.lane.b32.xlu0 %v1935, 96
        %v2187 = vpop.permute.xlu0 %2186
        %2188 = vrot.lane.b32.xlu0 %v1936, 96
        %v2189 = vpop.permute.xlu0 %2188
        %2190 = vrot.lane.b32.xlu0 %v1937, 96
        %v2191 = vpop.permute.xlu0 %2190
        %2192 = vrot.lane.b32.xlu0 %v1938, 96
        %v2193 = vpop.permute.xlu0 %2192
        %2194 = vrot.lane.b32.xlu0 %v1939, 96
        %v2195 = vpop.permute.xlu0 %2194
        %2196 = vrot.lane.b32.xlu0 %v1940, 96
        %v2197 = vpop.permute.xlu0 %2196
        %2198 = vrot.lane.b32.xlu0 %v1941, 96
        %v2199 = vpop.permute.xlu0 %2198
        %2200 = vrot.lane.b32.xlu0 %v1942, 96
        %v2201 = vpop.permute.xlu0 %2200
        %2202 = vrot.lane.b32.xlu0 %v1943, 96
        %v2203 = vpop.permute.xlu0 %2202
        %2204 = vrot.lane.b32.xlu0 %v1944, 96
        %v2205 = vpop.permute.xlu0 %2204
        %2206 = vrot.lane.b32.xlu0 %v1945, 96
        %v2207 = vpop.permute.xlu0 %2206
        %2208 = vrot.lane.b32.xlu0 %v1946, 96
        %v2209 = vpop.permute.xlu0 %2208
        %2210 = vrot.lane.b32.xlu0 %v1947, 96
        %v2211 = vpop.permute.xlu0 %2210
        %2212 = vrot.lane.b32.xlu0 %v1948, 96
        %v2213 = vpop.permute.xlu0 %2212
        %2214 = vrot.lane.b32.xlu0 %v1949, 96
        %v2215 = vpop.permute.xlu0 %2214
        %2216 = vrot.lane.b32.xlu0 %v1950, 96
        %v2217 = vpop.permute.xlu0 %2216
        %2218 = vrot.lane.b32.xlu0 %v1951, 96
        %v2219 = vpop.permute.xlu0 %2218
        %2220 = vrot.lane.b32.xlu0 %v1952, 96
        %v2221 = vpop.permute.xlu0 %2220
        %2222 = vrot.lane.b32.xlu0 %v1953, 96
        %v2223 = vpop.permute.xlu0 %2222
        %2224 = vrot.lane.b32.xlu0 %v1954, 96
        %v2225 = vpop.permute.xlu0 %2224
        %2226 = vrot.lane.b32.xlu0 %v1955, 96
        %v2227 = vpop.permute.xlu0 %2226
        %2228 = vrot.lane.b32.xlu0 %v1956, 96
        %v2229 = vpop.permute.xlu0 %2228
        %2262 = vst.msk [vmem:[%s361] sm:$0xf] %vm2149, %v2167
        %2263 = vst.msk [vmem:[%s361 + $0x4] sm:$0xf] %vm2149, %v2169
        %2264 = vst.msk [vmem:[%s361 + $0x8] sm:$0xf] %vm2149, %v2171
        %2265 = vst.msk [vmem:[%s361 + $0xc] sm:$0xf] %vm2149, %v2173
        %2266 = vst.msk [vmem:[%s361 + $0x10] sm:$0xf] %vm2149, %v2175
        %2267 = vst.msk [vmem:[%s361 + $0x14] sm:$0xf] %vm2149, %v2177
        %2268 = vst.msk [vmem:[%s361 + $0x18] sm:$0xf] %vm2149, %v2179
        %2269 = vst.msk [vmem:[%s361 + $0x1c] sm:$0xf] %vm2149, %v2181
        %2270 = vst.msk [vmem:[%s361 + $0x20] sm:$0xf] %vm2149, %v2183
        %2271 = vst.msk [vmem:[%s361 + $0x24] sm:$0xf] %vm2149, %v2185
        %2272 = vst.msk [vmem:[%s361 + $0x28] sm:$0xf] %vm2149, %v2187
        %2273 = vst.msk [vmem:[%s361 + $0x2c] sm:$0xf] %vm2149, %v2189
        %2274 = vst.msk [vmem:[%s361 + $0x30] sm:$0xf] %vm2149, %v2191
        %2275 = vst.msk [vmem:[%s361 + $0x34] sm:$0xf] %vm2149, %v2193
        %2276 = vst.msk [vmem:[%s361 + $0x38] sm:$0xf] %vm2149, %v2195
        %2277 = vst.msk [vmem:[%s361 + $0x3c] sm:$0xf] %vm2149, %v2197
        %2278 = vst.msk [vmem:[%s361 + $0x40] sm:$0xf] %vm2149, %v2199
        %2279 = vst.msk [vmem:[%s361 + $0x44] sm:$0xf] %vm2149, %v2201
        %2280 = vst.msk [vmem:[%s361 + $0x48] sm:$0xf] %vm2149, %v2203
        %2281 = vst.msk [vmem:[%s361 + $0x4c] sm:$0xf] %vm2149, %v2205
        %2282 = vst.msk [vmem:[%s361 + $0x50] sm:$0xf] %vm2149, %v2207
        %2283 = vst.msk [vmem:[%s361 + $0x54] sm:$0xf] %vm2149, %v2209
        %2284 = vst.msk [vmem:[%s361 + $0x58] sm:$0xf] %vm2149, %v2211
        %2285 = vst.msk [vmem:[%s361 + $0x5c] sm:$0xf] %vm2149, %v2213
        %2286 = vst.msk [vmem:[%s361 + $0x60] sm:$0xf] %vm2149, %v2215
        %2287 = vst.msk [vmem:[%s361 + $0x64] sm:$0xf] %vm2149, %v2217
        %2288 = vst.msk [vmem:[%s361 + $0x68] sm:$0xf] %vm2149, %v2219
        %2289 = vst.msk [vmem:[%s361 + $0x6c] sm:$0xf] %vm2149, %v2221
        %2290 = vst.msk [vmem:[%s361 + $0x70] sm:$0xf] %vm2149, %v2223
        %2291 = vst.msk [vmem:[%s361 + $0x74] sm:$0xf] %vm2149, %v2225
        %2292 = vst.msk [vmem:[%s361 + $0x78] sm:$0xf] %vm2149, %v2227
        %2293 = vst.msk [vmem:[%s361 + $0x7c] sm:$0xf] %vm2149, %v2229
        %v2294 = vpack.c.bf16 %v1336, %v1333
        %v2295 = vpack.c.bf16 %v1344, %v1341
        %v2296 = vpack.c.bf16 %v1352, %v1349
        %v2297 = vpack.c.bf16 %v1360, %v1357
        %v2298 = vpack.c.bf16 %v1368, %v1365
        %v2299 = vpack.c.bf16 %v1376, %v1373
        %v2300 = vpack.c.bf16 %v1384, %v1381
        %v2301 = vpack.c.bf16 %v1392, %v1389
        %v2302 = vpack.c.bf16 %v1400, %v1397
        %v2303 = vpack.c.bf16 %v1408, %v1405
        %v2304 = vpack.c.bf16 %v1416, %v1413
        %v2305 = vpack.c.bf16 %v1424, %v1421
        %v2306 = vpack.c.bf16 %v1432, %v1429
        %v2307 = vpack.c.bf16 %v1440, %v1437
        %v2308 = vpack.c.bf16 %v1448, %v1445
        %v2309 = vpack.c.bf16 %v1456, %v1453
        %v2326 = vunpack.c.l.b16 %v2294
        %v2327 = vunpack.c.h.b16 %v2294
        %v2328 = vunpack.c.l.b16 %v2295
        %v2329 = vunpack.c.h.b16 %v2295
        %v2330 = vunpack.c.l.b16 %v2296
        %v2331 = vunpack.c.h.b16 %v2296
        %v2332 = vunpack.c.l.b16 %v2297
        %v2333 = vunpack.c.h.b16 %v2297
        %v2334 = vunpack.c.l.b16 %v2298
        %v2335 = vunpack.c.h.b16 %v2298
        %v2336 = vunpack.c.l.b16 %v2299
        %v2337 = vunpack.c.h.b16 %v2299
        %v2338 = vunpack.c.l.b16 %v2300
        %v2339 = vunpack.c.h.b16 %v2300
        %v2340 = vunpack.c.l.b16 %v2301
        %v2341 = vunpack.c.h.b16 %v2301
        %v2342 = vunpack.c.l.b16 %v2302
        %v2343 = vunpack.c.h.b16 %v2302
        %v2344 = vunpack.c.l.b16 %v2303
        %v2345 = vunpack.c.h.b16 %v2303
        %v2346 = vunpack.c.l.b16 %v2304
        %v2347 = vunpack.c.h.b16 %v2304
        %v2348 = vunpack.c.l.b16 %v2305
        %v2349 = vunpack.c.h.b16 %v2305
        %v2350 = vunpack.c.l.b16 %v2306
        %v2351 = vunpack.c.h.b16 %v2306
        %v2352 = vunpack.c.l.b16 %v2307
        %v2353 = vunpack.c.h.b16 %v2307
        %v2354 = vunpack.c.l.b16 %v2308
        %v2355 = vunpack.c.h.b16 %v2308
        %v2356 = vunpack.c.l.b16 %v2309
        %v2357 = vunpack.c.h.b16 %v2309
        %v2358 = vpack.c.b16 %v2326, %v2326
        %v2359 = vpack.c.b16 %v2327, %v2327
        %v2360 = vpack.c.b16 %v2328, %v2328
        %v2361 = vpack.c.b16 %v2329, %v2329
        %v2362 = vpack.c.b16 %v2330, %v2330
        %v2363 = vpack.c.b16 %v2331, %v2331
        %v2364 = vpack.c.b16 %v2332, %v2332
        %v2365 = vpack.c.b16 %v2333, %v2333
        %v2366 = vpack.c.b16 %v2334, %v2334
        %v2367 = vpack.c.b16 %v2335, %v2335
        %v2368 = vpack.c.b16 %v2336, %v2336
        %v2369 = vpack.c.b16 %v2337, %v2337
        %v2370 = vpack.c.b16 %v2338, %v2338
        %v2371 = vpack.c.b16 %v2339, %v2339
        %v2372 = vpack.c.b16 %v2340, %v2340
        %v2373 = vpack.c.b16 %v2341, %v2341
        %v2374 = vpack.c.b16 %v2342, %v2342
        %v2375 = vpack.c.b16 %v2343, %v2343
        %v2376 = vpack.c.b16 %v2344, %v2344
        %v2377 = vpack.c.b16 %v2345, %v2345
        %v2378 = vpack.c.b16 %v2346, %v2346
        %v2379 = vpack.c.b16 %v2347, %v2347
        %v2380 = vpack.c.b16 %v2348, %v2348
        %v2381 = vpack.c.b16 %v2349, %v2349
        %v2382 = vpack.c.b16 %v2350, %v2350
        %v2383 = vpack.c.b16 %v2351, %v2351
        %v2384 = vpack.c.b16 %v2352, %v2352
        %v2385 = vpack.c.b16 %v2353, %v2353
        %v2386 = vpack.c.b16 %v2354, %v2354
        %v2387 = vpack.c.b16 %v2355, %v2355
        %v2388 = vpack.c.b16 %v2356, %v2356
        %v2389 = vpack.c.b16 %v2357, %v2357
        %2390 = vrot.lane.b32.xlu0 %v2358, 64
        %v2391 = vpop.permute.xlu0 %2390
        %2392 = vrot.lane.b32.xlu0 %v2359, 64
        %v2393 = vpop.permute.xlu0 %2392
        %2394 = vrot.lane.b32.xlu0 %v2360, 64
        %v2395 = vpop.permute.xlu0 %2394
        %2396 = vrot.lane.b32.xlu0 %v2361, 64
        %v2397 = vpop.permute.xlu0 %2396
        %2398 = vrot.lane.b32.xlu0 %v2362, 64
        %v2399 = vpop.permute.xlu0 %2398
        %2400 = vrot.lane.b32.xlu0 %v2363, 64
        %v2401 = vpop.permute.xlu0 %2400
        %2402 = vrot.lane.b32.xlu0 %v2364, 64
        %v2403 = vpop.permute.xlu0 %2402
        %2404 = vrot.lane.b32.xlu0 %v2365, 64
        %v2405 = vpop.permute.xlu0 %2404
        %2406 = vrot.lane.b32.xlu0 %v2366, 64
        %v2407 = vpop.permute.xlu0 %2406
        %2408 = vrot.lane.b32.xlu0 %v2367, 64
        %v2409 = vpop.permute.xlu0 %2408
        %2410 = vrot.lane.b32.xlu0 %v2368, 64
        %v2411 = vpop.permute.xlu0 %2410
        %2412 = vrot.lane.b32.xlu0 %v2369, 64
        %v2413 = vpop.permute.xlu0 %2412
        %2414 = vrot.lane.b32.xlu0 %v2370, 64
        %v2415 = vpop.permute.xlu0 %2414
        %2416 = vrot.lane.b32.xlu0 %v2371, 64
        %v2417 = vpop.permute.xlu0 %2416
        %2418 = vrot.lane.b32.xlu0 %v2372, 64
        %v2419 = vpop.permute.xlu0 %2418
        %2420 = vrot.lane.b32.xlu0 %v2373, 64
        %v2421 = vpop.permute.xlu0 %2420
        %2422 = vrot.lane.b32.xlu0 %v2374, 64
        %v2423 = vpop.permute.xlu0 %2422
        %2424 = vrot.lane.b32.xlu0 %v2375, 64
        %v2425 = vpop.permute.xlu0 %2424
        %2426 = vrot.lane.b32.xlu0 %v2376, 64
        %v2427 = vpop.permute.xlu0 %2426
        %2428 = vrot.lane.b32.xlu0 %v2377, 64
        %v2429 = vpop.permute.xlu0 %2428
        %2430 = vrot.lane.b32.xlu0 %v2378, 64
        %v2431 = vpop.permute.xlu0 %2430
        %2432 = vrot.lane.b32.xlu0 %v2379, 64
        %v2433 = vpop.permute.xlu0 %2432
        %2434 = vrot.lane.b32.xlu0 %v2380, 64
        %v2435 = vpop.permute.xlu0 %2434
        %2436 = vrot.lane.b32.xlu0 %v2381, 64
        %v2437 = vpop.permute.xlu0 %2436
        %2438 = vrot.lane.b32.xlu0 %v2382, 64
        %v2439 = vpop.permute.xlu0 %2438
        %2440 = vrot.lane.b32.xlu0 %v2383, 64
        %v2441 = vpop.permute.xlu0 %2440
        %2442 = vrot.lane.b32.xlu0 %v2384, 64
        %v2443 = vpop.permute.xlu0 %2442
        %2444 = vrot.lane.b32.xlu0 %v2385, 64
        %v2445 = vpop.permute.xlu0 %2444
        %2446 = vrot.lane.b32.xlu0 %v2386, 64
        %v2447 = vpop.permute.xlu0 %2446
        %2448 = vrot.lane.b32.xlu0 %v2387, 64
        %v2449 = vpop.permute.xlu0 %2448
        %2450 = vrot.lane.b32.xlu0 %v2388, 64
        %v2451 = vpop.permute.xlu0 %2450
        %2452 = vrot.lane.b32.xlu0 %v2389, 64
        %v2453 = vpop.permute.xlu0 %2452
        %2486 = vst.msk [vmem:[%s368] sm:$0xf] %vm2149, %v2391
        %2487 = vst.msk [vmem:[%s368 + $0x4] sm:$0xf] %vm2149, %v2393
        %2488 = vst.msk [vmem:[%s368 + $0x8] sm:$0xf] %vm2149, %v2395
        %2489 = vst.msk [vmem:[%s368 + $0xc] sm:$0xf] %vm2149, %v2397
        %2490 = vst.msk [vmem:[%s368 + $0x10] sm:$0xf] %vm2149, %v2399
        %2491 = vst.msk [vmem:[%s368 + $0x14] sm:$0xf] %vm2149, %v2401
        %2492 = vst.msk [vmem:[%s368 + $0x18] sm:$0xf] %vm2149, %v2403
        %2493 = vst.msk [vmem:[%s368 + $0x1c] sm:$0xf] %vm2149, %v2405
        %2494 = vst.msk [vmem:[%s368 + $0x20] sm:$0xf] %vm2149, %v2407
        %2495 = vst.msk [vmem:[%s368 + $0x24] sm:$0xf] %vm2149, %v2409
        %2496 = vst.msk [vmem:[%s368 + $0x28] sm:$0xf] %vm2149, %v2411
        %2497 = vst.msk [vmem:[%s368 + $0x2c] sm:$0xf] %vm2149, %v2413
        %2498 = vst.msk [vmem:[%s368 + $0x30] sm:$0xf] %vm2149, %v2415
        %2499 = vst.msk [vmem:[%s368 + $0x34] sm:$0xf] %vm2149, %v2417
        %2500 = vst.msk [vmem:[%s368 + $0x38] sm:$0xf] %vm2149, %v2419
        %2501 = vst.msk [vmem:[%s368 + $0x3c] sm:$0xf] %vm2149, %v2421
        %2502 = vst.msk [vmem:[%s368 + $0x40] sm:$0xf] %vm2149, %v2423
        %2503 = vst.msk [vmem:[%s368 + $0x44] sm:$0xf] %vm2149, %v2425
        %2504 = vst.msk [vmem:[%s368 + $0x48] sm:$0xf] %vm2149, %v2427
        %2505 = vst.msk [vmem:[%s368 + $0x4c] sm:$0xf] %vm2149, %v2429
        %2506 = vst.msk [vmem:[%s368 + $0x50] sm:$0xf] %vm2149, %v2431
        %2507 = vst.msk [vmem:[%s368 + $0x54] sm:$0xf] %vm2149, %v2433
        %2508 = vst.msk [vmem:[%s368 + $0x58] sm:$0xf] %vm2149, %v2435
        %2509 = vst.msk [vmem:[%s368 + $0x5c] sm:$0xf] %vm2149, %v2437
        %2510 = vst.msk [vmem:[%s368 + $0x60] sm:$0xf] %vm2149, %v2439
        %2511 = vst.msk [vmem:[%s368 + $0x64] sm:$0xf] %vm2149, %v2441
        %2512 = vst.msk [vmem:[%s368 + $0x68] sm:$0xf] %vm2149, %v2443
        %2513 = vst.msk [vmem:[%s368 + $0x6c] sm:$0xf] %vm2149, %v2445
        %2514 = vst.msk [vmem:[%s368 + $0x70] sm:$0xf] %vm2149, %v2447
        %2515 = vst.msk [vmem:[%s368 + $0x74] sm:$0xf] %vm2149, %v2449
        %2516 = vst.msk [vmem:[%s368 + $0x78] sm:$0xf] %vm2149, %v2451
        %2517 = vst.msk [vmem:[%s368 + $0x7c] sm:$0xf] %vm2149, %v2453
        %vm2518 = vcmask 1044224
        %2519 = vst.msk [vmem:[%s354] sm:$0xf] %vm2518, %v2423
        %2520 = vst.msk [vmem:[%s354 + $0x4] sm:$0xf] %vm2518, %v2425
        %2521 = vst.msk [vmem:[%s354 + $0x8] sm:$0xf] %vm2518, %v2427
        %2522 = vst.msk [vmem:[%s354 + $0xc] sm:$0xf] %vm2518, %v2429
        %2523 = vst.msk [vmem:[%s354 + $0x10] sm:$0xf] %vm2518, %v2431
        %2524 = vst.msk [vmem:[%s354 + $0x14] sm:$0xf] %vm2518, %v2433
        %2525 = vst.msk [vmem:[%s354 + $0x18] sm:$0xf] %vm2518, %v2435
        %2526 = vst.msk [vmem:[%s354 + $0x1c] sm:$0xf] %vm2518, %v2437
        %2527 = vst.msk [vmem:[%s354 + $0x20] sm:$0xf] %vm2518, %v2439
        %2528 = vst.msk [vmem:[%s354 + $0x24] sm:$0xf] %vm2518, %v2441
        %2529 = vst.msk [vmem:[%s354 + $0x28] sm:$0xf] %vm2518, %v2443
        %2530 = vst.msk [vmem:[%s354 + $0x2c] sm:$0xf] %vm2518, %v2445
        %2531 = vst.msk [vmem:[%s354 + $0x30] sm:$0xf] %vm2518, %v2447
        %2532 = vst.msk [vmem:[%s354 + $0x34] sm:$0xf] %vm2518, %v2449
        %2533 = vst.msk [vmem:[%s354 + $0x38] sm:$0xf] %vm2518, %v2451
        %2534 = vst.msk [vmem:[%s354 + $0x3c] sm:$0xf] %vm2518, %v2453
        %2535 = vrot.lane.b32.xlu0 %v2358, 32
        %v2536 = vpop.permute.xlu0 %2535
        %2537 = vrot.lane.b32.xlu0 %v2359, 32
        %v2538 = vpop.permute.xlu0 %2537
        %2539 = vrot.lane.b32.xlu0 %v2360, 32
        %v2540 = vpop.permute.xlu0 %2539
        %2541 = vrot.lane.b32.xlu0 %v2361, 32
        %v2542 = vpop.permute.xlu0 %2541
        %2543 = vrot.lane.b32.xlu0 %v2362, 32
        %v2544 = vpop.permute.xlu0 %2543
        %2545 = vrot.lane.b32.xlu0 %v2363, 32
        %v2546 = vpop.permute.xlu0 %2545
        %2547 = vrot.lane.b32.xlu0 %v2364, 32
        %v2548 = vpop.permute.xlu0 %2547
        %2549 = vrot.lane.b32.xlu0 %v2365, 32
        %v2550 = vpop.permute.xlu0 %2549
        %2551 = vrot.lane.b32.xlu0 %v2366, 32
        %v2552 = vpop.permute.xlu0 %2551
        %2553 = vrot.lane.b32.xlu0 %v2367, 32
        %v2554 = vpop.permute.xlu0 %2553
        %2555 = vrot.lane.b32.xlu0 %v2368, 32
        %v2556 = vpop.permute.xlu0 %2555
        %2557 = vrot.lane.b32.xlu0 %v2369, 32
        %v2558 = vpop.permute.xlu0 %2557
        %2559 = vrot.lane.b32.xlu0 %v2370, 32
        %v2560 = vpop.permute.xlu0 %2559
        %2561 = vrot.lane.b32.xlu0 %v2371, 32
        %v2562 = vpop.permute.xlu0 %2561
        %2563 = vrot.lane.b32.xlu0 %v2372, 32
        %v2564 = vpop.permute.xlu0 %2563
        %2565 = vrot.lane.b32.xlu0 %v2373, 32
        %v2566 = vpop.permute.xlu0 %2565
        %2567 = vrot.lane.b32.xlu0 %v2374, 32
        %v2568 = vpop.permute.xlu0 %2567
        %2569 = vrot.lane.b32.xlu0 %v2375, 32
        %v2570 = vpop.permute.xlu0 %2569
        %2571 = vrot.lane.b32.xlu0 %v2376, 32
        %v2572 = vpop.permute.xlu0 %2571
        %2573 = vrot.lane.b32.xlu0 %v2377, 32
        %v2574 = vpop.permute.xlu0 %2573
        %2575 = vrot.lane.b32.xlu0 %v2378, 32
        %v2576 = vpop.permute.xlu0 %2575
        %2577 = vrot.lane.b32.xlu0 %v2379, 32
        %v2578 = vpop.permute.xlu0 %2577
        %2579 = vrot.lane.b32.xlu0 %v2380, 32
        %v2580 = vpop.permute.xlu0 %2579
        %2581 = vrot.lane.b32.xlu0 %v2381, 32
        %v2582 = vpop.permute.xlu0 %2581
        %2583 = vrot.lane.b32.xlu0 %v2382, 32
        %v2584 = vpop.permute.xlu0 %2583
        %2585 = vrot.lane.b32.xlu0 %v2383, 32
        %v2586 = vpop.permute.xlu0 %2585
        %2587 = vrot.lane.b32.xlu0 %v2384, 32
        %v2588 = vpop.permute.xlu0 %2587
        %2589 = vrot.lane.b32.xlu0 %v2385, 32
        %v2590 = vpop.permute.xlu0 %2589
        %2591 = vrot.lane.b32.xlu0 %v2386, 32
        %v2592 = vpop.permute.xlu0 %2591
        %2593 = vrot.lane.b32.xlu0 %v2387, 32
        %v2594 = vpop.permute.xlu0 %2593
        %2595 = vrot.lane.b32.xlu0 %v2388, 32
        %v2596 = vpop.permute.xlu0 %2595
        %2597 = vrot.lane.b32.xlu0 %v2389, 32
        %v2598 = vpop.permute.xlu0 %2597
        %2631 = vst.msk [vmem:[%s361] sm:$0xf] %vm2518, %v2536
        %2632 = vst.msk [vmem:[%s361 + $0x4] sm:$0xf] %vm2518, %v2538
        %2633 = vst.msk [vmem:[%s361 + $0x8] sm:$0xf] %vm2518, %v2540
        %2634 = vst.msk [vmem:[%s361 + $0xc] sm:$0xf] %vm2518, %v2542
        %2635 = vst.msk [vmem:[%s361 + $0x10] sm:$0xf] %vm2518, %v2544
        %2636 = vst.msk [vmem:[%s361 + $0x14] sm:$0xf] %vm2518, %v2546
        %2637 = vst.msk [vmem:[%s361 + $0x18] sm:$0xf] %vm2518, %v2548
        %2638 = vst.msk [vmem:[%s361 + $0x1c] sm:$0xf] %vm2518, %v2550
        %2639 = vst.msk [vmem:[%s361 + $0x20] sm:$0xf] %vm2518, %v2552
        %2640 = vst.msk [vmem:[%s361 + $0x24] sm:$0xf] %vm2518, %v2554
        %2641 = vst.msk [vmem:[%s361 + $0x28] sm:$0xf] %vm2518, %v2556
        %2642 = vst.msk [vmem:[%s361 + $0x2c] sm:$0xf] %vm2518, %v2558
        %2643 = vst.msk [vmem:[%s361 + $0x30] sm:$0xf] %vm2518, %v2560
        %2644 = vst.msk [vmem:[%s361 + $0x34] sm:$0xf] %vm2518, %v2562
        %2645 = vst.msk [vmem:[%s361 + $0x38] sm:$0xf] %vm2518, %v2564
        %2646 = vst.msk [vmem:[%s361 + $0x3c] sm:$0xf] %vm2518, %v2566
        %2647 = vst.msk [vmem:[%s361 + $0x40] sm:$0xf] %vm2518, %v2568
        %2648 = vst.msk [vmem:[%s361 + $0x44] sm:$0xf] %vm2518, %v2570
        %2649 = vst.msk [vmem:[%s361 + $0x48] sm:$0xf] %vm2518, %v2572
        %2650 = vst.msk [vmem:[%s361 + $0x4c] sm:$0xf] %vm2518, %v2574
        %2651 = vst.msk [vmem:[%s361 + $0x50] sm:$0xf] %vm2518, %v2576
        %2652 = vst.msk [vmem:[%s361 + $0x54] sm:$0xf] %vm2518, %v2578
        %2653 = vst.msk [vmem:[%s361 + $0x58] sm:$0xf] %vm2518, %v2580
        %2654 = vst.msk [vmem:[%s361 + $0x5c] sm:$0xf] %vm2518, %v2582
        %2655 = vst.msk [vmem:[%s361 + $0x60] sm:$0xf] %vm2518, %v2584
        %2656 = vst.msk [vmem:[%s361 + $0x64] sm:$0xf] %vm2518, %v2586
        %2657 = vst.msk [vmem:[%s361 + $0x68] sm:$0xf] %vm2518, %v2588
        %2658 = vst.msk [vmem:[%s361 + $0x6c] sm:$0xf] %vm2518, %v2590
        %2659 = vst.msk [vmem:[%s361 + $0x70] sm:$0xf] %vm2518, %v2592
        %2660 = vst.msk [vmem:[%s361 + $0x74] sm:$0xf] %vm2518, %v2594
        %2661 = vst.msk [vmem:[%s361 + $0x78] sm:$0xf] %vm2518, %v2596
        %2662 = vst.msk [vmem:[%s361 + $0x7c] sm:$0xf] %vm2518, %v2598
        %2695 = vst.msk [vmem:[%s368] sm:$0xf] %vm2518, %v2358
        %2696 = vst.msk [vmem:[%s368 + $0x4] sm:$0xf] %vm2518, %v2359
        %2697 = vst.msk [vmem:[%s368 + $0x8] sm:$0xf] %vm2518, %v2360
        %2698 = vst.msk [vmem:[%s368 + $0xc] sm:$0xf] %vm2518, %v2361
        %2699 = vst.msk [vmem:[%s368 + $0x10] sm:$0xf] %vm2518, %v2362
        %2700 = vst.msk [vmem:[%s368 + $0x14] sm:$0xf] %vm2518, %v2363
        %2701 = vst.msk [vmem:[%s368 + $0x18] sm:$0xf] %vm2518, %v2364
        %2702 = vst.msk [vmem:[%s368 + $0x1c] sm:$0xf] %vm2518, %v2365
        %2703 = vst.msk [vmem:[%s368 + $0x20] sm:$0xf] %vm2518, %v2366
        %2704 = vst.msk [vmem:[%s368 + $0x24] sm:$0xf] %vm2518, %v2367
        %2705 = vst.msk [vmem:[%s368 + $0x28] sm:$0xf] %vm2518, %v2368
        %2706 = vst.msk [vmem:[%s368 + $0x2c] sm:$0xf] %vm2518, %v2369
        %2707 = vst.msk [vmem:[%s368 + $0x30] sm:$0xf] %vm2518, %v2370
        %2708 = vst.msk [vmem:[%s368 + $0x34] sm:$0xf] %vm2518, %v2371
        %2709 = vst.msk [vmem:[%s368 + $0x38] sm:$0xf] %vm2518, %v2372
        %2710 = vst.msk [vmem:[%s368 + $0x3c] sm:$0xf] %vm2518, %v2373
        %2711 = vst.msk [vmem:[%s368 + $0x40] sm:$0xf] %vm2518, %v2374
        %2712 = vst.msk [vmem:[%s368 + $0x44] sm:$0xf] %vm2518, %v2375
        %2713 = vst.msk [vmem:[%s368 + $0x48] sm:$0xf] %vm2518, %v2376
        %2714 = vst.msk [vmem:[%s368 + $0x4c] sm:$0xf] %vm2518, %v2377
        %2715 = vst.msk [vmem:[%s368 + $0x50] sm:$0xf] %vm2518, %v2378
        %2716 = vst.msk [vmem:[%s368 + $0x54] sm:$0xf] %vm2518, %v2379
        %2717 = vst.msk [vmem:[%s368 + $0x58] sm:$0xf] %vm2518, %v2380
        %2718 = vst.msk [vmem:[%s368 + $0x5c] sm:$0xf] %vm2518, %v2381
        %2719 = vst.msk [vmem:[%s368 + $0x60] sm:$0xf] %vm2518, %v2382
        %2720 = vst.msk [vmem:[%s368 + $0x64] sm:$0xf] %vm2518, %v2383
        %2721 = vst.msk [vmem:[%s368 + $0x68] sm:$0xf] %vm2518, %v2384
        %2722 = vst.msk [vmem:[%s368 + $0x6c] sm:$0xf] %vm2518, %v2385
        %2723 = vst.msk [vmem:[%s368 + $0x70] sm:$0xf] %vm2518, %v2386
        %2724 = vst.msk [vmem:[%s368 + $0x74] sm:$0xf] %vm2518, %v2387
        %2725 = vst.msk [vmem:[%s368 + $0x78] sm:$0xf] %vm2518, %v2388
        %2726 = vst.msk [vmem:[%s368 + $0x7c] sm:$0xf] %vm2518, %v2389
        %s2727 = sand.u32 %s154, 1
        %s2728 = scalar_lea.sflag [#allocation4], %s2727
        %s2729 = sand.u32 %s154, 1
        %s2730 = smul.addr %s2729, 64
        %s2731 = scalar_lea.vmem [#allocation8], %s2730
        %s2732 = sand.u32 %s31, 1
        %s2733 = scalar_lea.sflag [#allocation10], %s2732
        %s2734 = sand.u32 %s180, 1
        %s2735 = smul.addr %s2734, 128
        %s2736 = scalar_lea.vmem [#allocation9], %s2735
        %s2737 = sand.u32 %s31, 1
        %s2738 = scalar_lea.sflag [#allocation10], %s2737
        %s2739 = sand.u32 %s206, 1
        %s2740 = smul.addr %s2739, 128
        %s2741 = scalar_lea.vmem [#allocation11], %s2740
        // Predicated region
        $region53: #{tpu_custom_call.1} parent=39 // pred_check
          %p2742 = pneg %p164
        $region54: #{tpu_custom_call.1} parent=39 // pred_check_branch
          %2744 = sbr.rel (%p2742) target = $region56
        $region55: #{tpu_custom_call.1} parent=39 // pred_region
          %s2746 = ssub.s32 1024, 1024
          %2747 = vsyncadd %s2728, %s2746
          %s2748 = smul.addr %s31, 16
          %s2749 = smul.addr %s2748, 64
          %s2750 = scalar_lea.hbm %s5, %s2749
          %s2751 = sshll.u32 %s2731, 4
          %s2752 = int_to_ptr.vmem [resolvable:$true] %s2751
          %2757 = dma.vmem_to_hbm [thread:$0]  %s2752, 1024, %s2750, %s2728, 64, 64, 4
        $region56: #{tpu_custom_call.1} parent=39 // pred_fallthru
          _
        // Predicated region
        $region57: #{tpu_custom_call.1} parent=39 // pred_check
          %p2758 = pneg %p190
        $region58: #{tpu_custom_call.1} parent=39 // pred_check_branch
          %2760 = sbr.rel (%p2758) target = $region60
        $region59: #{tpu_custom_call.1} parent=39 // pred_region
          %s2762 = ssub.s32 2048, 2048
          %2763 = vsyncadd %s2733, %s2762
          %s2764 = smul.addr %s31, 32
          %s2765 = smul.addr %s2764, 64
          %s2766 = scalar_lea.hbm %s6, %s2765
          %s2767 = sshll.u32 %s2736, 4
          %s2768 = int_to_ptr.vmem [resolvable:$true] %s2767
          %2773 = dma.vmem_to_hbm [thread:$0]  %s2768, 2048, %s2766, %s2733, 64, 64, 4
        $region60: #{tpu_custom_call.1} parent=39 // pred_fallthru
          _
        // Predicated region
        $region61: #{tpu_custom_call.1} parent=39 // pred_check
          %p2774 = pneg %p216
        $region62: #{tpu_custom_call.1} parent=39 // pred_check_branch
          %2776 = sbr.rel (%p2774) target = $region64
        $region63: #{tpu_custom_call.1} parent=39 // pred_region
          %s2778 = ssub.s32 2048, 2048
          %2779 = vsyncadd %s2738, %s2778
          %s2780 = smul.addr %s31, 32
          %s2781 = smul.addr %s2780, 64
          %s2782 = scalar_lea.hbm %s7, %s2781
          %s2783 = sshll.u32 %s2741, 4
          %s2784 = int_to_ptr.vmem [resolvable:$true] %s2783
          %2789 = dma.vmem_to_hbm [thread:$0]  %s2784, 2048, %s2782, %s2738, 64, 64, 4
        $region64: #{tpu_custom_call.1} parent=39 // pred_fallthru
          _
      $region40: #{tpu_custom_call.1} parent=5 // pred_fallthru
        _
      %p2790 = scmp.le.s32.totalorder 2, %s26
      // Predicated region
      $region65: #{tpu_custom_call.1} parent=5 // pred_check
        %p2791 = pneg %p2790
      $region66: #{tpu_custom_call.1} parent=5 // pred_check_branch
        %2793 = sbr.rel (%p2791) target = $region68
      $region67: #{tpu_custom_call.1} parent=5 // pred_region
        %s2794 = ssub.s32 %s26, 2
        // Predicated region
        $region69: #{tpu_custom_call.1} parent=67 // pred_check
          %p2795 = pneg %p170
        $region70: #{tpu_custom_call.1} parent=67 // pred_check_branch
          %2797 = sbr.rel (%p2795) target = $region72
        $region71: #{tpu_custom_call.1} parent=67 // pred_region
          %s2798 = sand.u32 %s155, 1
          %s2799 = scalar_lea.sflag [#allocation4], %s2798
          %s2800 = sand.u32 %s155, 1
          %s2801 = smul.addr %s2800, 64
          %s2802 = scalar_lea.vmem [#allocation8], %s2801
          %2803 = dma.done %s2799, 1024
        $region72: #{tpu_custom_call.1} parent=67 // pred_fallthru
          _
        // Predicated region
        $region73: #{tpu_custom_call.1} parent=67 // pred_check
          %p2804 = pneg %p196
        $region74: #{tpu_custom_call.1} parent=67 // pred_check_branch
          %2806 = sbr.rel (%p2804) target = $region76
        $region75: #{tpu_custom_call.1} parent=67 // pred_region
          %s2807 = sand.u32 %s32, 1
          %s2808 = scalar_lea.sflag [#allocation10], %s2807
          %s2809 = sand.u32 %s181, 1
          %s2810 = smul.addr %s2809, 128
          %s2811 = scalar_lea.vmem [#allocation9], %s2810
          %2812 = dma.done %s2808, 2048
        $region76: #{tpu_custom_call.1} parent=67 // pred_fallthru
          _
        // Predicated region
        $region77: #{tpu_custom_call.1} parent=67 // pred_check
          %p2813 = pneg %p222
        $region78: #{tpu_custom_call.1} parent=67 // pred_check_branch
          %2815 = sbr.rel (%p2813) target = $region80
        $region79: #{tpu_custom_call.1} parent=67 // pred_region
          %s2816 = sand.u32 %s32, 1
          %s2817 = scalar_lea.sflag [#allocation10], %s2816
          %s2818 = sand.u32 %s207, 1
          %s2819 = smul.addr %s2818, 128
          %s2820 = scalar_lea.vmem [#allocation11], %s2819
          %2821 = dma.done %s2817, 2048
        $region80: #{tpu_custom_call.1} parent=67 // pred_fallthru
          _
      $region68: #{tpu_custom_call.1} parent=5 // pred_fallthru
        _
    $region6: #{tpu_custom_call.1} parent=1 // loop_footer
      %s30 = sadd.s32 1, %s26
    $region7: #{tpu_custom_call.1} parent=1 // loop_footer_branch
      %25 = sbr.rel target = $region3
    $region8: #{tpu_custom_call.1} parent=1 // loop_exit
      _
    %2822 = vsyncpa [#allocation3], 1
    %s2823 = scalar_lea.sflag [#allocation3], 1
    %2824 = vsyncpa %s2823, 1
    %2825 = vsyncpa [#allocation6], 1
    %s2826 = scalar_lea.sflag [#allocation6], 1
    %2827 = vsyncpa %s2826, 1
    %2828 = vsyncpa [#allocation4], 1
    %s2829 = scalar_lea.sflag [#allocation4], 1
    %2830 = vsyncpa %s2829, 1
    %2831 = vsyncpa [#allocation10], 1
    %s2832 = scalar_lea.sflag [#allocation10], 1
    %2833 = vsyncpa %s2832, 1

</llo_original>
